<compile_context>
chip_gen: v6e
topology: v6e:2x2x1
jax: 0.10.0
libtpu: 0.0.40
codegen_flags: <defaults>
</compile_context>

<pallas_src>
import functools
import math

import jax
import jax.numpy as jnp
from jax.experimental import pallas as pl
from jax.experimental.pallas import tpu as pltpu

_LANES = 128
_VMEM_BUDGET = 40 * 1024 * 1024          # keep blocks + scratch v7x-safe (64 MiB / TC)
_WEIGHT_SINGLE_BUFFER_OK = hasattr(pl, "Buffered")


# ----------------------------------------------------------------------------- kernels
def _attention_and_merge(qkv_scr, ctx_scr, wm_ref, bm_ref, o_ref, *,
                         num_heads, tb, seq, hidden, hidden_pad, dk, q_chunk,
                         heads_per_group, matmul_dtype, recip_approx):
    Hp = hidden_pad
    n_qc = seq // q_chunk

    # Pad lanes [H, Hp) of ctx_scr are never written by the head loop but are read by the
    # merge GEMM; zero just those lanes every step (megacore-safe, tiny masked store).
    if hidden != Hp:
        ctx_scr[:, hidden:Hp] = jnp.zeros((tb * seq, Hp - hidden), ctx_scr.dtype)

    for bt in range(tb):
        r0 = bt * seq
        h0 = 0
        while h0 < num_heads:
            hg = min(heads_per_group, num_heads - h0)
            g0 = h0 * dk
            gw = hg * dk
            # K / V slabs for this (batch, head-group): 128-lane-aligned ref loads,
            # hoisted out of the q-chunk loop and reused by every chunk.
            k_g = qkv_scr[r0:r0 + seq, Hp + g0:Hp + g0 + gw]
            v_g = qkv_scr[r0:r0 + seq, 2 * Hp + g0:2 * Hp + g0 + gw]

            def qc_body(qc, carry):
                qr = r0 + qc * q_chunk
                if not isinstance(qc, int):
                    qr = pl.multiple_of(qr, math.gcd(8, math.gcd(q_chunk, seq)))
                q_g = qkv_scr[pl.ds(qr, q_chunk), g0:g0 + gw]
                ctx_heads = []
                for hi in range(hg):
                    c = hi * dk
                    qh = q_g[:, c:c + dk]
                    kh = k_g[:, c:c + dk]
                    vh = v_g[:, c:c + dk]
                    # scores: contract dk on the MXU, f32 accumulate.  The 1/sqrt(dk)
                    # scale is pre-baked into wq/bq on the host (no VPU multiply here).
                    s = jax.lax.dot_general(qh, kh, (((1,), (1,)), ((), ())),
                                            preferred_element_type=jnp.float32)
                    m = jnp.max(s, axis=-1, keepdims=True)
                    e = jnp.exp(s - m)
                    denom = jnp.sum(e, axis=-1, keepdims=True)
                    # TODO(synk): dropout(att_map) skipped (inference / eval mode).
                    # Deferred normalization: PV matmul on unnormalized e, then a
                    # [q_chunk, dk]-wide rescale instead of a [q_chunk, S]-wide one.
                    ctx = jnp.dot(e.astype(matmul_dtype), vh,
                                  preferred_element_type=jnp.float32)
                    ctx_heads.append(ctx * pl.reciprocal(denom, approx=recip_approx))
                blk = ctx_heads[0] if hg == 1 else jnp.concatenate(ctx_heads, axis=-1)
                ctx_scr[pl.ds(qr, q_chunk), g0:g0 + gw] = blk.astype(ctx_scr.dtype)
                return carry

            if n_qc == 1:
                qc_body(0, 0)
            else:
                jax.lax.fori_loop(0, n_qc, qc_body, 0, unroll=n_qc <= 4)
            h0 += hg

    # Output (merge) projection on a lane-dense [rows, Hp] slab.
    out = jnp.dot(ctx_scr[...], wm_ref[...], preferred_element_type=jnp.float32)
    o_ref[...] = (out + bm_ref[...]).astype(o_ref.dtype)


def _mhatt_kernel_self(x_ref, wqkv_ref, bqkv_ref, wm_ref, bm_ref, o_ref,
                       qkv_scr, ctx_scr, **kw):
    # Self-attention fast path: one [rows, Hp] x [Hp, 3*Hp] GEMM produces Q|K|V.
    y = jnp.dot(x_ref[...], wqkv_ref[...], preferred_element_type=jnp.float32)
    qkv_scr[...] = (y + bqkv_ref[...]).astype(qkv_scr.dtype)
    _attention_and_merge(qkv_scr, ctx_scr, wm_ref, bm_ref, o_ref, **kw)


def _mhatt_kernel_cross(v_ref, k_ref, q_ref, wqkv_ref, bqkv_ref, wm_ref, bm_ref,
                        o_ref, qkv_scr, ctx_scr, **kw):
    Hp = kw["hidden_pad"]
    for j, x_ref in ((0, q_ref), (1, k_ref), (2, v_ref)):
        c0 = j * Hp
        y = jnp.dot(x_ref[...], wqkv_ref[:, c0:c0 + Hp],
                    preferred_element_type=jnp.float32)
        qkv_scr[:, c0:c0 + Hp] = (y + bqkv_ref[:, c0:c0 + Hp]).astype(qkv_scr.dtype)
    _attention_and_merge(qkv_scr, ctx_scr, wm_ref, bm_ref, o_ref, **kw)


# ----------------------------------------------------------------------------- wrapper
def _choose_q_chunk(seq):
    if seq <= 256 or seq % 8 != 0:
        return seq
    for c in range(256, 7, -8):
        if seq % c == 0:
            return c
    return seq


def _choose_tb(batch, seq, vmem_per_row, const_vmem):
    cands = [d for d in range(1, batch + 1) if batch % d == 0]
    legal = [d for d in cands
             if ((d * seq) % 8 == 0 or d == batch)
             and d * seq * vmem_per_row + const_vmem <= _VMEM_BUDGET]
    if not legal:
        # Guarded fallback: a single grid step (block == full array is always spec-legal).
        return batch

    def score(d):
        rows, grid = d * seq, batch // d
        return (grid >= 2,       # keep >= 2 grid steps so both v7x TensorCores get work
                rows >= 256,     # fill the 256-wide MXU on v6e/v7x
                rows % 16 == 0,  # bf16 sublane packing
                rows)            # then amortize the per-step overhead
    return max(legal, key=score)


def mhatt(v, k, q, params, num_heads, *, matmul_dtype=jnp.bfloat16, q_chunk=None):
    wv, bv, wk, bk, wq, bq, wm, bm = params
    B, S, H = q.shape
    assert H % num_heads == 0
    # TODO(synk): the module allows k/v sequence length != q sequence length; not supported.
    assert v.shape == q.shape and k.shape == q.shape
    out_dtype = q.dtype
    dk = H // num_heads
    Hp = ((H + _LANES - 1) // _LANES) * _LANES
    self_att = (q is k) and (k is v)
    n_in = 1 if self_att else 3

    itemsize = jnp.dtype(matmul_dtype).itemsize
    out_itemsize = jnp.dtype(out_dtype).itemsize

    # Host-side prep: transpose to [in, out], bake 1/sqrt(dk) into the Q projection,
    # pad to lane multiples, concatenate Q|K|V, cast once.
    scale = 1.0 / math.sqrt(dk)

    def prep_w(w, s=1.0):
        return jnp.zeros((Hp, Hp), matmul_dtype).at[:H, :H].set(
            (w.T * s).astype(matmul_dtype))

    def prep_b(b, s=1.0):
        return jnp.zeros((1, Hp), jnp.float32).at[:, :H].set((b * s).astype(jnp.float32))

    w_qkv = jnp.concatenate([prep_w(wq, scale), prep_w(wk), prep_w(wv)], axis=1)
    b_qkv = jnp.concatenate([prep_b(bq, scale), prep_b(bk), prep_b(bv)], axis=1)
    w_m, b_m = prep_w(wm), prep_b(bm)

    def prep_x(x):
        xp = x.astype(matmul_dtype).reshape(B * S, H)
        if Hp != H:
            xp = jnp.pad(xp, ((0, 0), (0, Hp - H)))
        return xp

    # Per-row VMEM: qkv scratch (3Hp) + ctx scratch (Hp) + double-buffered activation
    # blocks (n_in * Hp) + double-buffered output block (Hp). Constant part: weights/biases.
    vmem_per_row = Hp * itemsize * (4 + 2 * n_in) + Hp * out_itemsize * 2
    const_vmem = 2 * (4 * Hp * Hp * itemsize + 4 * Hp * 4)
    tb = _choose_tb(B, S, vmem_per_row, const_vmem)
    rows = tb * S
    grid = B // tb

    if q_chunk is None:
        q_chunk = _choose_q_chunk(S)
    assert S % q_chunk == 0

    heads_per_group = (1 if (dk >= _LANES or _LANES % dk != 0)
                       else min(num_heads, _LANES // dk))

    kern_kwargs = dict(num_heads=num_heads, tb=tb, seq=S, hidden=H, hidden_pad=Hp,
                       dk=dk, q_chunk=q_chunk, heads_per_group=heads_per_group,
                       matmul_dtype=matmul_dtype,
                       recip_approx=matmul_dtype != jnp.float32)
    kernel = functools.partial(
        _mhatt_kernel_self if self_att else _mhatt_kernel_cross, **kern_kwargs)

    x_spec = pl.BlockSpec((rows, Hp), lambda i: (i, 0))
    est_vmem = rows * vmem_per_row + const_vmem
    vmem_limit = int(min(max(est_vmem * 1.25, 32 << 20) + (2 << 20), 112 << 20))

    cost = pl.CostEstimate(
        flops=8 * B * S * Hp * Hp + 4 * B * num_heads * S * S * dk,
        transcendentals=B * num_heads * S * S,
        bytes_accessed=(n_in * B * S * Hp * itemsize + B * S * Hp * out_itemsize
                        + 4 * Hp * Hp * itemsize + 4 * Hp * 4))

    def build(single_buffer_weights):
        wkw = dict(pipeline_mode=pl.Buffered(1)) if single_buffer_weights else {}
        weight_specs = [
            pl.BlockSpec((Hp, 3 * Hp), lambda i: (0, 0), **wkw),
            pl.BlockSpec((1, 3 * Hp), lambda i: (0, 0), **wkw),
            pl.BlockSpec((Hp, Hp), lambda i: (0, 0), **wkw),
            pl.BlockSpec((1, Hp), lambda i: (0, 0), **wkw),
        ]
        return pl.pallas_call(
            kernel,
            out_shape=jax.ShapeDtypeStruct((B * S, Hp), out_dtype),
            grid_spec=pltpu.PrefetchScalarGridSpec(
                num_scalar_prefetch=0,
                grid=(grid,),
                in_specs=[x_spec] * n_in + weight_specs,
                out_specs=pl.BlockSpec((rows, Hp), lambda i: (i, 0)),
                scratch_shapes=[pltpu.VMEM((rows, 3 * Hp), matmul_dtype),
                                pltpu.VMEM((rows, Hp), matmul_dtype)]),
            compiler_params=pltpu.CompilerParams(
                dimension_semantics=("parallel",),
                vmem_limit_bytes=vmem_limit),
            cost_estimate=cost)

    if self_att:
        args = (prep_x(q), w_qkv, b_qkv, w_m, b_m)
    else:
        args = (prep_x(v), prep_x(k), prep_x(q), w_qkv, b_qkv, w_m, b_m)

    global _WEIGHT_SINGLE_BUFFER_OK
    if _WEIGHT_SINGLE_BUFFER_OK:
        try:
            out_padded = build(True)(*args)
            jax.block_until_ready(out_padded)
        except Exception:
            # pl.Buffered(1) not supported by this jax/mosaic build: fall back to the
            # default (double-buffered) pipelining for the constant weight blocks.
            _WEIGHT_SINGLE_BUFFER_OK = False
            out_padded = build(False)(*args)
    else:
        out_padded = build(False)(*args)

    out = out_padded if Hp == H else out_padded[:, :H]
    return out.reshape(B, S, H)


# ----------------------------------------------------------------------------- reference
def mhatt_ref(v, k, q, params, num_heads):
    """Pure-JAX reference mirroring the PyTorch forward (f32)."""
    wv, bv, wk, bk, wq, bq, wm, bm = params
    B, S, H = q.shape
    dk = H // num_heads

    def split(x):
        return x.reshape(B, S, num_heads, dk).transpose(0, 2, 1, 3)  # [B, nh, S, dk]

    vh = split(v @ wv.T + bv)
    kh = split(k @ wk.T + bk)
    qh = split(q @ wq.T + bq)
    scores = jnp.einsum('bhid,bhjd->bhij', qh, kh) / math.sqrt(dk)
    att = jax.nn.softmax(scores, axis=-1)
    ctx = jnp.einsum('bhij,bhjd->bhid', att, vh)
    ctx = ctx.transpose(0, 2, 1, 3).reshape(B, S, H)
    return ctx @ wm.T + bm


if __name__ == "__main__":
    def make_params(key, H):
        keys = jax.random.split(key, 8)
        bound = 1.0 / math.sqrt(H)

        def lin(kw_, kb_):
            w = jax.random.uniform(kw_, (H, H), jnp.float32, -bound, bound)
            b = jax.random.uniform(kb_, (H,), jnp.float32, -bound, bound)
            return w, b

        wv, bv = lin(keys[0], keys[1])
        wk, bk = lin(keys[2], keys[3])
        wq, bq = lin(keys[4], keys[5])
        wm, bm = lin(keys[6], keys[7])
        return (wv, bv, wk, bk, wq, bq, wm, bm)

    key = jax.random.PRNGKey(0)
    kp, kv, kk, kq, kx = jax.random.split(key, 5)

    # --- cross-attention, small shapes: B=2, S=8, H=32, 4 heads ---
    B, S, H, NH = 2, 8, 32, 4
    params = make_params(kp, H)
    v = jax.random.normal(kv, (B, S, H), jnp.float32)
    k = jax.random.normal(kk, (B, S, H), jnp.float32)
    q = jax.random.normal(kq, (B, S, H), jnp.float32)
    ref = mhatt_ref(v, k, q, params, NH)

    out_f32 = mhatt(v, k, q, params, NH, matmul_dtype=jnp.float32)   # tight numerical check
    jax.block_until_ready(out_f32)
    assert out_f32.shape == (B, S, H)
    assert jnp.allclose(out_f32, ref, atol=2e-3, rtol=2e-3), "cross/f32 mismatch"

    out_bf16 = mhatt(v, k, q, params, NH, matmul_dtype=jnp.bfloat16)  # bf16 MXU inputs
    jax.block_until_ready(out_bf16)
    assert jnp.allclose(out_bf16, ref, atol=5e-2, rtol=5e-2), "cross/bf16 mismatch"

    # --- self-attention fast path (q is k is v -> single fused QKV GEMM) ---
    x = jax.random.normal(kx, (B, S, H), jnp.float32)
    ref_self = mhatt_ref(x, x, x, params, NH)
    out_self = mhatt(x, x, x, params, NH, matmul_dtype=jnp.bfloat16)
    jax.block_until_ready(out_self)
    assert jnp.allclose(out_self, ref_self, atol=5e-2, rtol=5e-2), "self/bf16 mismatch"

    # --- dynamic q-chunk loop (lax.fori_loop path): S=48, q_chunk=8 -> 6 chunks ---
    S2 = 48
    x2 = jax.random.normal(kx, (B, S2, H), jnp.float32)
    ref2 = mhatt_ref(x2, x2, x2, params, NH)
    out2 = mhatt(x2, x2, x2, params, NH, matmul_dtype=jnp.float32, q_chunk=8)
    jax.block_until_ready(out2)
    assert jnp.allclose(out2, ref2, atol=2e-3, rtol=2e-3), "fori-loop path mismatch"

    print("KERNEL_OK")
</pallas_src>

<mosaic_0001>
module attributes {stable_mosaic.version = 11 : i64} {
  func.func @_mhatt_kernel_cross(%arg0: i32, %arg1: memref<8x128xf32, #tpu.memory_space<vmem>>, %arg2: memref<8x128xf32, #tpu.memory_space<vmem>>, %arg3: memref<8x128xf32, #tpu.memory_space<vmem>>, %arg4: memref<128x384xf32, #tpu.memory_space<vmem>>, %arg5: memref<1x384xf32, #tpu.memory_space<vmem>>, %arg6: memref<128x128xf32, #tpu.memory_space<vmem>>, %arg7: memref<1x128xf32, #tpu.memory_space<vmem>>, %arg8: memref<8x128xf32, #tpu.memory_space<vmem>>, %arg9: memref<8x384xf32, #tpu.memory_space<vmem>>, %arg10: memref<8x128xf32, #tpu.memory_space<vmem>>) attributes {dimension_semantics = [#tpu.dimension_semantics<parallel>], iteration_bounds = array<i64: 2>, scalar_prefetch = 0 : i64, scratch_operands = 2 : i64, tpu.core_type = #tpu.core_type<tc>, window_params = [{transform_indices = @transform_0, window_bounds = array<i64: 8, 128>}, {transform_indices = @transform_1, window_bounds = array<i64: 8, 128>}, {transform_indices = @transform_2, window_bounds = array<i64: 8, 128>}, {pipeline_mode = #tpu.pipeline_mode<synchronous>, transform_indices = @transform_3, window_bounds = array<i64: 128, 384>}, {pipeline_mode = #tpu.pipeline_mode<synchronous>, transform_indices = @transform_4, window_bounds = array<i64: 1, 384>}, {pipeline_mode = #tpu.pipeline_mode<synchronous>, transform_indices = @transform_5, window_bounds = array<i64: 128, 128>}, {pipeline_mode = #tpu.pipeline_mode<synchronous>, transform_indices = @transform_6, window_bounds = array<i64: 1, 128>}, {transform_indices = @transform_7, window_bounds = array<i64: 8, 128>}]} {
    %c0 = arith.constant 0 : index
    %c0_0 = arith.constant 0 : index
    %0 = vector.load %arg3[%c0, %c0_0] : memref<8x128xf32, #tpu.memory_space<vmem>>, vector<8x128xf32>
    %c0_1 = arith.constant 0 : index
    %c0_2 = arith.constant 0 : index
    %1 = vector.load %arg4[%c0_1, %c0_2] : memref<128x384xf32, #tpu.memory_space<vmem>>, vector<128x128xf32>
    %cst = arith.constant dense<0.000000e+00> : vector<8x128xf32>
    %2 = tpu.matmul %0, %1, %cst {dimension_numbers = #tpu.dot_dimension_numbers<[1], [0], [0], [1], [0, 0, 1, 1], [], []>} : vector<8x128xf32>, vector<128x128xf32>, vector<8x128xf32> -> vector<8x128xf32>
    %c0_3 = arith.constant 0 : index
    %c0_4 = arith.constant 0 : index
    %3 = vector.load %arg5[%c0_3, %c0_4] : memref<1x384xf32, #tpu.memory_space<vmem>>, vector<1x128xf32>
    %4 = vector.broadcast %3 : vector<1x128xf32> to vector<8x128xf32>
    %5 = arith.addf %2, %4 : vector<8x128xf32>
    %c0_5 = arith.constant 0 : index
    %c0_6 = arith.constant 0 : index
    %6 = vector.load %arg9[%c0_5, %c0_6] : memref<8x384xf32, #tpu.memory_space<vmem>>, vector<8x128xf32>
    tpu.vector_store %arg9[%c0_5, %c0_6], %5 {strides = array<i32>} : memref<8x384xf32, #tpu.memory_space<vmem>>, vector<8x128xf32>,
    %c0_7 = arith.constant 0 : index
    %c0_8 = arith.constant 0 : index
    %7 = vector.load %arg2[%c0_7, %c0_8] : memref<8x128xf32, #tpu.memory_space<vmem>>, vector<8x128xf32>
    %c0_9 = arith.constant 0 : index
    %c128 = arith.constant 128 : index
    %8 = vector.load %arg4[%c0_9, %c128] : memref<128x384xf32, #tpu.memory_space<vmem>>, vector<128x128xf32>
    %cst_10 = arith.constant dense<0.000000e+00> : vector<8x128xf32>
    %9 = tpu.matmul %7, %8, %cst_10 {dimension_numbers = #tpu.dot_dimension_numbers<[1], [0], [0], [1], [0, 0, 1, 1], [], []>} : vector<8x128xf32>, vector<128x128xf32>, vector<8x128xf32> -> vector<8x128xf32>
    %c0_11 = arith.constant 0 : index
    %c128_12 = arith.constant 128 : index
    %10 = vector.load %arg5[%c0_11, %c128_12] : memref<1x384xf32, #tpu.memory_space<vmem>>, vector<1x128xf32>
    %11 = vector.broadcast %10 : vector<1x128xf32> to vector<8x128xf32>
    %12 = arith.addf %9, %11 : vector<8x128xf32>
    %c0_13 = arith.constant 0 : index
    %c128_14 = arith.constant 128 : index
    %13 = vector.load %arg9[%c0_13, %c128_14] : memref<8x384xf32, #tpu.memory_space<vmem>>, vector<8x128xf32>
    tpu.vector_store %arg9[%c0_13, %c128_14], %12 {strides = array<i32>} : memref<8x384xf32, #tpu.memory_space<vmem>>, vector<8x128xf32>,
    %c0_15 = arith.constant 0 : index
    %c0_16 = arith.constant 0 : index
    %14 = vector.load %arg1[%c0_15, %c0_16] : memref<8x128xf32, #tpu.memory_space<vmem>>, vector<8x128xf32>
    %c0_17 = arith.constant 0 : index
    %c256 = arith.constant 256 : index
    %15 = vector.load %arg4[%c0_17, %c256] : memref<128x384xf32, #tpu.memory_space<vmem>>, vector<128x128xf32>
    %cst_18 = arith.constant dense<0.000000e+00> : vector<8x128xf32>
    %16 = tpu.matmul %14, %15, %cst_18 {dimension_numbers = #tpu.dot_dimension_numbers<[1], [0], [0], [1], [0, 0, 1, 1], [], []>} : vector<8x128xf32>, vector<128x128xf32>, vector<8x128xf32> -> vector<8x128xf32>
    %c0_19 = arith.constant 0 : index
    %c256_20 = arith.constant 256 : index
    %17 = vector.load %arg5[%c0_19, %c256_20] : memref<1x384xf32, #tpu.memory_space<vmem>>, vector<1x128xf32>
    %18 = vector.broadcast %17 : vector<1x128xf32> to vector<8x128xf32>
    %19 = arith.addf %16, %18 : vector<8x128xf32>
    %c0_21 = arith.constant 0 : index
    %c256_22 = arith.constant 256 : index
    %20 = vector.load %arg9[%c0_21, %c256_22] : memref<8x384xf32, #tpu.memory_space<vmem>>, vector<8x128xf32>
    tpu.vector_store %arg9[%c0_21, %c256_22], %19 {strides = array<i32>} : memref<8x384xf32, #tpu.memory_space<vmem>>, vector<8x128xf32>,
    %cst_23 = arith.constant 0.000000e+00 : f32
    %21 = vector.broadcast %cst_23 : f32 to vector<8x96xf32>
    %c0_24 = arith.constant 0 : index
    %c32 = arith.constant 32 : index
    %22 = vector.load %arg10[%c0_24, %c32] : memref<8x128xf32, #tpu.memory_space<vmem>>, vector<8x96xf32>
    tpu.vector_store %arg10[%c0_24, %c32], %21 {strides = array<i32>} : memref<8x128xf32, #tpu.memory_space<vmem>>, vector<8x96xf32>,
    %c0_25 = arith.constant 0 : index
    %c128_26 = arith.constant 128 : index
    %23 = vector.load %arg9[%c0_25, %c128_26] : memref<8x384xf32, #tpu.memory_space<vmem>>, vector<8x32xf32>
    %c0_27 = arith.constant 0 : index
    %c256_28 = arith.constant 256 : index
    %24 = vector.load %arg9[%c0_27, %c256_28] : memref<8x384xf32, #tpu.memory_space<vmem>>, vector<8x32xf32>
    %c0_29 = arith.constant 0 : index
    %c0_30 = arith.constant 0 : index
    %25 = vector.load %arg9[%c0_29, %c0_30] : memref<8x384xf32, #tpu.memory_space<vmem>>, vector<8x32xf32>
    %26 = vector.extract_strided_slice %25 {offsets = [0, 0], sizes = [8, 8], strides = [1, 1]} : vector<8x32xf32> to vector<8x8xf32>
    %27 = vector.extract_strided_slice %23 {offsets = [0, 0], sizes = [8, 8], strides = [1, 1]} : vector<8x32xf32> to vector<8x8xf32>
    %28 = vector.extract_strided_slice %24 {offsets = [0, 0], sizes = [8, 8], strides = [1, 1]} : vector<8x32xf32> to vector<8x8xf32>
    %cst_31 = arith.constant dense<0.000000e+00> : vector<8x8xf32>
    %29 = tpu.matmul %26, %27, %cst_31 {dimension_numbers = #tpu.dot_dimension_numbers<[1], [1], [0], [0], [0, 0, 1, 0], [], []>} : vector<8x8xf32>, vector<8x8xf32>, vector<8x8xf32> -> vector<8x8xf32>
    %cst_32 = arith.constant dense<0xFF800000> : vector<8xf32>
    %30 = vector.multi_reduction <maximumf>, %29, %cst_32 [1] : vector<8x8xf32> to vector<8xf32>
    %31 = vector.shape_cast %30 : vector<8xf32> to vector<8x1xf32>
    %32 = vector.broadcast %31 : vector<8x1xf32> to vector<8x8xf32>
    %33 = arith.subf %29, %32 : vector<8x8xf32>
    %34 = math.exp %33 : vector<8x8xf32>
    %cst_33 = arith.constant dense<0.000000e+00> : vector<8xf32>
    %35 = vector.multi_reduction <add>, %34, %cst_33 [1] : vector<8x8xf32> to vector<8xf32>
    %36 = vector.shape_cast %35 : vector<8xf32> to vector<8x1xf32>
    %cst_34 = arith.constant dense<0.000000e+00> : vector<8x8xf32>
    %37 = tpu.matmul %34, %28, %cst_34 {dimension_numbers = #tpu.dot_dimension_numbers<[1], [0], [0], [1], [0, 0, 1, 1], [], []>} : vector<8x8xf32>, vector<8x8xf32>, vector<8x8xf32> -> vector<8x8xf32>
    %38 = tpu.reciprocal %36 : vector<8x1xf32> -> vector<8x1xf32>
    %39 = vector.broadcast %38 : vector<8x1xf32> to vector<8x8xf32>
    %40 = arith.mulf %37, %39 : vector<8x8xf32>
    %41 = vector.extract_strided_slice %25 {offsets = [0, 8], sizes = [8, 8], strides = [1, 1]} : vector<8x32xf32> to vector<8x8xf32>
    %42 = vector.extract_strided_slice %23 {offsets = [0, 8], sizes = [8, 8], strides = [1, 1]} : vector<8x32xf32> to vector<8x8xf32>
    %43 = vector.extract_strided_slice %24 {offsets = [0, 8], sizes = [8, 8], strides = [1, 1]} : vector<8x32xf32> to vector<8x8xf32>
    %cst_35 = arith.constant dense<0.000000e+00> : vector<8x8xf32>
    %44 = tpu.matmul %41, %42, %cst_35 {dimension_numbers = #tpu.dot_dimension_numbers<[1], [1], [0], [0], [0, 0, 1, 0], [], []>} : vector<8x8xf32>, vector<8x8xf32>, vector<8x8xf32> -> vector<8x8xf32>
    %cst_36 = arith.constant dense<0xFF800000> : vector<8xf32>
    %45 = vector.multi_reduction <maximumf>, %44, %cst_36 [1] : vector<8x8xf32> to vector<8xf32>
    %46 = vector.shape_cast %45 : vector<8xf32> to vector<8x1xf32>
    %47 = vector.broadcast %46 : vector<8x1xf32> to vector<8x8xf32>
    %48 = arith.subf %44, %47 : vector<8x8xf32>
    %49 = math.exp %48 : vector<8x8xf32>
    %cst_37 = arith.constant dense<0.000000e+00> : vector<8xf32>
    %50 = vector.multi_reduction <add>, %49, %cst_37 [1] : vector<8x8xf32> to vector<8xf32>
    %51 = vector.shape_cast %50 : vector<8xf32> to vector<8x1xf32>
    %cst_38 = arith.constant dense<0.000000e+00> : vector<8x8xf32>
    %52 = tpu.matmul %49, %43, %cst_38 {dimension_numbers = #tpu.dot_dimension_numbers<[1], [0], [0], [1], [0, 0, 1, 1], [], []>} : vector<8x8xf32>, vector<8x8xf32>, vector<8x8xf32> -> vector<8x8xf32>
    %53 = tpu.reciprocal %51 : vector<8x1xf32> -> vector<8x1xf32>
    %54 = vector.broadcast %53 : vector<8x1xf32> to vector<8x8xf32>
    %55 = arith.mulf %52, %54 : vector<8x8xf32>
    %56 = vector.extract_strided_slice %25 {offsets = [0, 16], sizes = [8, 8], strides = [1, 1]} : vector<8x32xf32> to vector<8x8xf32>
    %57 = vector.extract_strided_slice %23 {offsets = [0, 16], sizes = [8, 8], strides = [1, 1]} : vector<8x32xf32> to vector<8x8xf32>
    %58 = vector.extract_strided_slice %24 {offsets = [0, 16], sizes = [8, 8], strides = [1, 1]} : vector<8x32xf32> to vector<8x8xf32>
    %cst_39 = arith.constant dense<0.000000e+00> : vector<8x8xf32>
    %59 = tpu.matmul %56, %57, %cst_39 {dimension_numbers = #tpu.dot_dimension_numbers<[1], [1], [0], [0], [0, 0, 1, 0], [], []>} : vector<8x8xf32>, vector<8x8xf32>, vector<8x8xf32> -> vector<8x8xf32>
    %cst_40 = arith.constant dense<0xFF800000> : vector<8xf32>
    %60 = vector.multi_reduction <maximumf>, %59, %cst_40 [1] : vector<8x8xf32> to vector<8xf32>
    %61 = vector.shape_cast %60 : vector<8xf32> to vector<8x1xf32>
    %62 = vector.broadcast %61 : vector<8x1xf32> to vector<8x8xf32>
    %63 = arith.subf %59, %62 : vector<8x8xf32>
    %64 = math.exp %63 : vector<8x8xf32>
    %cst_41 = arith.constant dense<0.000000e+00> : vector<8xf32>
    %65 = vector.multi_reduction <add>, %64, %cst_41 [1] : vector<8x8xf32> to vector<8xf32>
    %66 = vector.shape_cast %65 : vector<8xf32> to vector<8x1xf32>
    %cst_42 = arith.constant dense<0.000000e+00> : vector<8x8xf32>
    %67 = tpu.matmul %64, %58, %cst_42 {dimension_numbers = #tpu.dot_dimension_numbers<[1], [0], [0], [1], [0, 0, 1, 1], [], []>} : vector<8x8xf32>, vector<8x8xf32>, vector<8x8xf32> -> vector<8x8xf32>
    %68 = tpu.reciprocal %66 : vector<8x1xf32> -> vector<8x1xf32>
    %69 = vector.broadcast %68 : vector<8x1xf32> to vector<8x8xf32>
    %70 = arith.mulf %67, %69 : vector<8x8xf32>
    %71 = vector.extract_strided_slice %25 {offsets = [0, 24], sizes = [8, 8], strides = [1, 1]} : vector<8x32xf32> to vector<8x8xf32>
    %72 = vector.extract_strided_slice %23 {offsets = [0, 24], sizes = [8, 8], strides = [1, 1]} : vector<8x32xf32> to vector<8x8xf32>
    %73 = vector.extract_strided_slice %24 {offsets = [0, 24], sizes = [8, 8], strides = [1, 1]} : vector<8x32xf32> to vector<8x8xf32>
    %cst_43 = arith.constant dense<0.000000e+00> : vector<8x8xf32>
    %74 = tpu.matmul %71, %72, %cst_43 {dimension_numbers = #tpu.dot_dimension_numbers<[1], [1], [0], [0], [0, 0, 1, 0], [], []>} : vector<8x8xf32>, vector<8x8xf32>, vector<8x8xf32> -> vector<8x8xf32>
    %cst_44 = arith.constant dense<0xFF800000> : vector<8xf32>
    %75 = vector.multi_reduction <maximumf>, %74, %cst_44 [1] : vector<8x8xf32> to vector<8xf32>
    %76 = vector.shape_cast %75 : vector<8xf32> to vector<8x1xf32>
    %77 = vector.broadcast %76 : vector<8x1xf32> to vector<8x8xf32>
    %78 = arith.subf %74, %77 : vector<8x8xf32>
    %79 = math.exp %78 : vector<8x8xf32>
    %cst_45 = arith.constant dense<0.000000e+00> : vector<8xf32>
    %80 = vector.multi_reduction <add>, %79, %cst_45 [1] : vector<8x8xf32> to vector<8xf32>
    %81 = vector.shape_cast %80 : vector<8xf32> to vector<8x1xf32>
    %cst_46 = arith.constant dense<0.000000e+00> : vector<8x8xf32>
    %82 = tpu.matmul %79, %73, %cst_46 {dimension_numbers = #tpu.dot_dimension_numbers<[1], [0], [0], [1], [0, 0, 1, 1], [], []>} : vector<8x8xf32>, vector<8x8xf32>, vector<8x8xf32> -> vector<8x8xf32>
    %83 = tpu.reciprocal %81 : vector<8x1xf32> -> vector<8x1xf32>
    %84 = vector.broadcast %83 : vector<8x1xf32> to vector<8x8xf32>
    %85 = arith.mulf %82, %84 : vector<8x8xf32>
    %86 = tpu.concatenate %40, %55, %70, %85 in 1 : vector<8x8xf32>, vector<8x8xf32>, vector<8x8xf32>, vector<8x8xf32> -> vector<8x32xf32>
    %c0_47 = arith.constant 0 : index
    %c0_48 = arith.constant 0 : index
    %87 = vector.load %arg10[%c0_47, %c0_48] : memref<8x128xf32, #tpu.memory_space<vmem>>, vector<8x32xf32>
    tpu.vector_store %arg10[%c0_47, %c0_48], %86 {strides = array<i32>} : memref<8x128xf32, #tpu.memory_space<vmem>>, vector<8x32xf32>,
    %c0_49 = arith.constant 0 : index
    %c0_50 = arith.constant 0 : index
    %88 = vector.load %arg10[%c0_49, %c0_50] : memref<8x128xf32, #tpu.memory_space<vmem>>, vector<8x128xf32>
    %c0_51 = arith.constant 0 : index
    %c0_52 = arith.constant 0 : index
    %89 = vector.load %arg6[%c0_51, %c0_52] : memref<128x128xf32, #tpu.memory_space<vmem>>, vector<128x128xf32>
    %cst_53 = arith.constant dense<0.000000e+00> : vector<8x128xf32>
    %90 = tpu.matmul %88, %89, %cst_53 {dimension_numbers = #tpu.dot_dimension_numbers<[1], [0], [0], [1], [0, 0, 1, 1], [], []>} : vector<8x128xf32>, vector<128x128xf32>, vector<8x128xf32> -> vector<8x128xf32>
    %c0_54 = arith.constant 0 : index
    %c0_55 = arith.constant 0 : index
    %91 = vector.load %arg7[%c0_54, %c0_55] : memref<1x128xf32, #tpu.memory_space<vmem>>, vector<1x128xf32>
    %92 = vector.broadcast %91 : vector<1x128xf32> to vector<8x128xf32>
    %93 = arith.addf %90, %92 : vector<8x128xf32>
    %c0_56 = arith.constant 0 : index
    %c0_57 = arith.constant 0 : index
    %94 = vector.load %arg8[%c0_56, %c0_57] : memref<8x128xf32, #tpu.memory_space<vmem>>, vector<8x128xf32>
    tpu.vector_store %arg8[%c0_56, %c0_57], %93 {strides = array<i32>} : memref<8x128xf32, #tpu.memory_space<vmem>>, vector<8x128xf32>,
    return
  }
  func.func @transform_0(%arg0: i32) -> (i32, i32) {
    %c0_i32 = arith.constant 0 : i32
    %c0_i32_0 = arith.constant 0 : i32
    return %arg0, %c0_i32 : i32, i32
  }
  func.func @transform_1(%arg0: i32) -> (i32, i32) {
    %c0_i32 = arith.constant 0 : i32
    %c0_i32_0 = arith.constant 0 : i32
    return %arg0, %c0_i32 : i32, i32
  }
  func.func @transform_2(%arg0: i32) -> (i32, i32) {
    %c0_i32 = arith.constant 0 : i32
    %c0_i32_0 = arith.constant 0 : i32
    return %arg0, %c0_i32 : i32, i32
  }
  func.func @transform_3(%arg0: i32) -> (i32, i32) {
    %c0_i32 = arith.constant 0 : i32
    %c0_i32_0 = arith.constant 0 : i32
    %c0_i32_1 = arith.constant 0 : i32
    return %c0_i32, %c0_i32_0 : i32, i32
  }
  func.func @transform_4(%arg0: i32) -> (i32, i32) {
    %c0_i32 = arith.constant 0 : i32
    %c0_i32_0 = arith.constant 0 : i32
    %c0_i32_1 = arith.constant 0 : i32
    return %c0_i32, %c0_i32_0 : i32, i32
  }
  func.func @transform_5(%arg0: i32) -> (i32, i32) {
    %c0_i32 = arith.constant 0 : i32
    %c0_i32_0 = arith.constant 0 : i32
    %c0_i32_1 = arith.constant 0 : i32
    return %c0_i32, %c0_i32_0 : i32, i32
  }
  func.func @transform_6(%arg0: i32) -> (i32, i32) {
    %c0_i32 = arith.constant 0 : i32
    %c0_i32_0 = arith.constant 0 : i32
    %c0_i32_1 = arith.constant 0 : i32
    return %c0_i32, %c0_i32_0 : i32, i32
  }
  func.func @transform_7(%arg0: i32) -> (i32, i32) {
    %c0_i32 = arith.constant 0 : i32
    %c0_i32_0 = arith.constant 0 : i32
    return %arg0, %c0_i32 : i32, i32
  }
}

module attributes {stable_mosaic.version = 11 : i64} {
  func.func @_mhatt_kernel_cross(%arg0: i32, %arg1: memref<8x128xf32, #tpu.memory_space<vmem>>, %arg2: memref<8x128xf32, #tpu.memory_space<vmem>>, %arg3: memref<8x128xf32, #tpu.memory_space<vmem>>, %arg4: memref<128x384xf32, #tpu.memory_space<vmem>>, %arg5: memref<1x384xf32, #tpu.memory_space<vmem>>, %arg6: memref<128x128xf32, #tpu.memory_space<vmem>>, %arg7: memref<1x128xf32, #tpu.memory_space<vmem>>, %arg8: memref<8x128xf32, #tpu.memory_space<vmem>>, %arg9: memref<8x384xf32, #tpu.memory_space<vmem>>, %arg10: memref<8x128xf32, #tpu.memory_space<vmem>>) attributes {dimension_semantics = [#tpu.dimension_semantics<parallel>], iteration_bounds = array<i64: 2>, scalar_prefetch = 0 : i64, scratch_operands = 2 : i64, tpu.core_type = #tpu.core_type<tc>, window_params = [{transform_indices = @transform_0, window_bounds = array<i64: 8, 128>}, {transform_indices = @transform_1, window_bounds = array<i64: 8, 128>}, {transform_indices = @transform_2, window_bounds = array<i64: 8, 128>}, {pipeline_mode = #tpu.pipeline_mode<synchronous>, transform_indices = @transform_3, window_bounds = array<i64: 128, 384>}, {pipeline_mode = #tpu.pipeline_mode<synchronous>, transform_indices = @transform_4, window_bounds = array<i64: 1, 384>}, {pipeline_mode = #tpu.pipeline_mode<synchronous>, transform_indices = @transform_5, window_bounds = array<i64: 128, 128>}, {pipeline_mode = #tpu.pipeline_mode<synchronous>, transform_indices = @transform_6, window_bounds = array<i64: 1, 128>}, {transform_indices = @transform_7, window_bounds = array<i64: 8, 128>}]} {
    %c0 = arith.constant 0 : index
    %c0_0 = arith.constant 0 : index
    %0 = vector.load %arg3[%c0, %c0_0] : memref<8x128xf32, #tpu.memory_space<vmem>>, vector<8x128xf32>
    %c0_1 = arith.constant 0 : index
    %c0_2 = arith.constant 0 : index
    %1 = vector.load %arg4[%c0_1, %c0_2] : memref<128x384xf32, #tpu.memory_space<vmem>>, vector<128x128xf32>
    %cst = arith.constant dense<0.000000e+00> : vector<8x128xf32>
    %2 = tpu.matmul %0, %1, %cst {dimension_numbers = #tpu.dot_dimension_numbers<[1], [0], [0], [1], [0, 0, 1, 1], [], []>} : vector<8x128xf32>, vector<128x128xf32>, vector<8x128xf32> -> vector<8x128xf32>
    %c0_3 = arith.constant 0 : index
    %c0_4 = arith.constant 0 : index
    %3 = vector.load %arg5[%c0_3, %c0_4] : memref<1x384xf32, #tpu.memory_space<vmem>>, vector<1x128xf32>
    %4 = vector.broadcast %3 : vector<1x128xf32> to vector<8x128xf32>
    %5 = arith.addf %2, %4 : vector<8x128xf32>
    %c0_5 = arith.constant 0 : index
    %c0_6 = arith.constant 0 : index
    %6 = vector.load %arg9[%c0_5, %c0_6] : memref<8x384xf32, #tpu.memory_space<vmem>>, vector<8x128xf32>
    tpu.vector_store %arg9[%c0_5, %c0_6], %5 {strides = array<i32>} : memref<8x384xf32, #tpu.memory_space<vmem>>, vector<8x128xf32>,
    %c0_7 = arith.constant 0 : index
    %c0_8 = arith.constant 0 : index
    %7 = vector.load %arg2[%c0_7, %c0_8] : memref<8x128xf32, #tpu.memory_space<vmem>>, vector<8x128xf32>
    %c0_9 = arith.constant 0 : index
    %c128 = arith.constant 128 : index
    %8 = vector.load %arg4[%c0_9, %c128] : memref<128x384xf32, #tpu.memory_space<vmem>>, vector<128x128xf32>
    %cst_10 = arith.constant dense<0.000000e+00> : vector<8x128xf32>
    %9 = tpu.matmul %7, %8, %cst_10 {dimension_numbers = #tpu.dot_dimension_numbers<[1], [0], [0], [1], [0, 0, 1, 1], [], []>} : vector<8x128xf32>, vector<128x128xf32>, vector<8x128xf32> -> vector<8x128xf32>
    %c0_11 = arith.constant 0 : index
    %c128_12 = arith.constant 128 : index
    %10 = vector.load %arg5[%c0_11, %c128_12] : memref<1x384xf32, #tpu.memory_space<vmem>>, vector<1x128xf32>
    %11 = vector.broadcast %10 : vector<1x128xf32> to vector<8x128xf32>
    %12 = arith.addf %9, %11 : vector<8x128xf32>
    %c0_13 = arith.constant 0 : index
    %c128_14 = arith.constant 128 : index
    %13 = vector.load %arg9[%c0_13, %c128_14] : memref<8x384xf32, #tpu.memory_space<vmem>>, vector<8x128xf32>
    tpu.vector_store %arg9[%c0_13, %c128_14], %12 {strides = array<i32>} : memref<8x384xf32, #tpu.memory_space<vmem>>, vector<8x128xf32>,
    %c0_15 = arith.constant 0 : index
    %c0_16 = arith.constant 0 : index
    %14 = vector.load %arg1[%c0_15, %c0_16] : memref<8x128xf32, #tpu.memory_space<vmem>>, vector<8x128xf32>
    %c0_17 = arith.constant 0 : index
    %c256 = arith.constant 256 : index
    %15 = vector.load %arg4[%c0_17, %c256] : memref<128x384xf32, #tpu.memory_space<vmem>>, vector<128x128xf32>
    %cst_18 = arith.constant dense<0.000000e+00> : vector<8x128xf32>
    %16 = tpu.matmul %14, %15, %cst_18 {dimension_numbers = #tpu.dot_dimension_numbers<[1], [0], [0], [1], [0, 0, 1, 1], [], []>} : vector<8x128xf32>, vector<128x128xf32>, vector<8x128xf32> -> vector<8x128xf32>
    %c0_19 = arith.constant 0 : index
    %c256_20 = arith.constant 256 : index
    %17 = vector.load %arg5[%c0_19, %c256_20] : memref<1x384xf32, #tpu.memory_space<vmem>>, vector<1x128xf32>
    %18 = vector.broadcast %17 : vector<1x128xf32> to vector<8x128xf32>
    %19 = arith.addf %16, %18 : vector<8x128xf32>
    %c0_21 = arith.constant 0 : index
    %c256_22 = arith.constant 256 : index
    %20 = vector.load %arg9[%c0_21, %c256_22] : memref<8x384xf32, #tpu.memory_space<vmem>>, vector<8x128xf32>
    tpu.vector_store %arg9[%c0_21, %c256_22], %19 {strides = array<i32>} : memref<8x384xf32, #tpu.memory_space<vmem>>, vector<8x128xf32>,
    %cst_23 = arith.constant 0.000000e+00 : f32
    %21 = vector.broadcast %cst_23 : f32 to vector<8x96xf32>
    %c0_24 = arith.constant 0 : index
    %c32 = arith.constant 32 : index
    %22 = vector.load %arg10[%c0_24, %c32] : memref<8x128xf32, #tpu.memory_space<vmem>>, vector<8x96xf32>
    tpu.vector_store %arg10[%c0_24, %c32], %21 {strides = array<i32>} : memref<8x128xf32, #tpu.memory_space<vmem>>, vector<8x96xf32>,
    %c0_25 = arith.constant 0 : index
    %c128_26 = arith.constant 128 : index
    %23 = vector.load %arg9[%c0_25, %c128_26] : memref<8x384xf32, #tpu.memory_space<vmem>>, vector<8x32xf32>
    %c0_27 = arith.constant 0 : index
    %c256_28 = arith.constant 256 : index
    %24 = vector.load %arg9[%c0_27, %c256_28] : memref<8x384xf32, #tpu.memory_space<vmem>>, vector<8x32xf32>
    %c0_29 = arith.constant 0 : index
    %c0_30 = arith.constant 0 : index
    %25 = vector.load %arg9[%c0_29, %c0_30] : memref<8x384xf32, #tpu.memory_space<vmem>>, vector<8x32xf32>
    %26 = vector.extract_strided_slice %25 {offsets = [0, 0], sizes = [8, 8], strides = [1, 1]} : vector<8x32xf32> to vector<8x8xf32>
    %27 = vector.extract_strided_slice %23 {offsets = [0, 0], sizes = [8, 8], strides = [1, 1]} : vector<8x32xf32> to vector<8x8xf32>
    %28 = vector.extract_strided_slice %24 {offsets = [0, 0], sizes = [8, 8], strides = [1, 1]} : vector<8x32xf32> to vector<8x8xf32>
    %cst_31 = arith.constant dense<0.000000e+00> : vector<8x8xf32>
    %29 = tpu.matmul %26, %27, %cst_31 {dimension_numbers = #tpu.dot_dimension_numbers<[1], [1], [0], [0], [0, 0, 1, 0], [], []>} : vector<8x8xf32>, vector<8x8xf32>, vector<8x8xf32> -> vector<8x8xf32>
    %cst_32 = arith.constant dense<0xFF800000> : vector<8xf32>
    %30 = vector.multi_reduction <maximumf>, %29, %cst_32 [1] : vector<8x8xf32> to vector<8xf32>
    %31 = vector.shape_cast %30 : vector<8xf32> to vector<8x1xf32>
    %32 = vector.broadcast %31 : vector<8x1xf32> to vector<8x8xf32>
    %33 = arith.subf %29, %32 : vector<8x8xf32>
    %34 = math.exp %33 : vector<8x8xf32>
    %cst_33 = arith.constant dense<0.000000e+00> : vector<8xf32>
    %35 = vector.multi_reduction <add>, %34, %cst_33 [1] : vector<8x8xf32> to vector<8xf32>
    %36 = vector.shape_cast %35 : vector<8xf32> to vector<8x1xf32>
    %cst_34 = arith.constant dense<0.000000e+00> : vector<8x8xf32>
    %37 = tpu.matmul %34, %28, %cst_34 {dimension_numbers = #tpu.dot_dimension_numbers<[1], [0], [0], [1], [0, 0, 1, 1], [], []>} : vector<8x8xf32>, vector<8x8xf32>, vector<8x8xf32> -> vector<8x8xf32>
    %38 = tpu.reciprocal %36 : vector<8x1xf32> -> vector<8x1xf32>
    %39 = vector.broadcast %38 : vector<8x1xf32> to vector<8x8xf32>
    %40 = arith.mulf %37, %39 : vector<8x8xf32>
    %41 = vector.extract_strided_slice %25 {offsets = [0, 8], sizes = [8, 8], strides = [1, 1]} : vector<8x32xf32> to vector<8x8xf32>
    %42 = vector.extract_strided_slice %23 {offsets = [0, 8], sizes = [8, 8], strides = [1, 1]} : vector<8x32xf32> to vector<8x8xf32>
    %43 = vector.extract_strided_slice %24 {offsets = [0, 8], sizes = [8, 8], strides = [1, 1]} : vector<8x32xf32> to vector<8x8xf32>
    %cst_35 = arith.constant dense<0.000000e+00> : vector<8x8xf32>
    %44 = tpu.matmul %41, %42, %cst_35 {dimension_numbers = #tpu.dot_dimension_numbers<[1], [1], [0], [0], [0, 0, 1, 0], [], []>} : vector<8x8xf32>, vector<8x8xf32>, vector<8x8xf32> -> vector<8x8xf32>
    %cst_36 = arith.constant dense<0xFF800000> : vector<8xf32>
    %45 = vector.multi_reduction <maximumf>, %44, %cst_36 [1] : vector<8x8xf32> to vector<8xf32>
    %46 = vector.shape_cast %45 : vector<8xf32> to vector<8x1xf32>
    %47 = vector.broadcast %46 : vector<8x1xf32> to vector<8x8xf32>
    %48 = arith.subf %44, %47 : vector<8x8xf32>
    %49 = math.exp %48 : vector<8x8xf32>
    %cst_37 = arith.constant dense<0.000000e+00> : vector<8xf32>
    %50 = vector.multi_reduction <add>, %49, %cst_37 [1] : vector<8x8xf32> to vector<8xf32>
    %51 = vector.shape_cast %50 : vector<8xf32> to vector<8x1xf32>
    %cst_38 = arith.constant dense<0.000000e+00> : vector<8x8xf32>
    %52 = tpu.matmul %49, %43, %cst_38 {dimension_numbers = #tpu.dot_dimension_numbers<[1], [0], [0], [1], [0, 0, 1, 1], [], []>} : vector<8x8xf32>, vector<8x8xf32>, vector<8x8xf32> -> vector<8x8xf32>
    %53 = tpu.reciprocal %51 : vector<8x1xf32> -> vector<8x1xf32>
    %54 = vector.broadcast %53 : vector<8x1xf32> to vector<8x8xf32>
    %55 = arith.mulf %52, %54 : vector<8x8xf32>
    %56 = vector.extract_strided_slice %25 {offsets = [0, 16], sizes = [8, 8], strides = [1, 1]} : vector<8x32xf32> to vector<8x8xf32>
    %57 = vector.extract_strided_slice %23 {offsets = [0, 16], sizes = [8, 8], strides = [1, 1]} : vector<8x32xf32> to vector<8x8xf32>
    %58 = vector.extract_strided_slice %24 {offsets = [0, 16], sizes = [8, 8], strides = [1, 1]} : vector<8x32xf32> to vector<8x8xf32>
    %cst_39 = arith.constant dense<0.000000e+00> : vector<8x8xf32>
    %59 = tpu.matmul %56, %57, %cst_39 {dimension_numbers = #tpu.dot_dimension_numbers<[1], [1], [0], [0], [0, 0, 1, 0], [], []>} : vector<8x8xf32>, vector<8x8xf32>, vector<8x8xf32> -> vector<8x8xf32>
    %cst_40 = arith.constant dense<0xFF800000> : vector<8xf32>
    %60 = vector.multi_reduction <maximumf>, %59, %cst_40 [1] : vector<8x8xf32> to vector<8xf32>
    %61 = vector.shape_cast %60 : vector<8xf32> to vector<8x1xf32>
    %62 = vector.broadcast %61 : vector<8x1xf32> to vector<8x8xf32>
    %63 = arith.subf %59, %62 : vector<8x8xf32>
    %64 = math.exp %63 : vector<8x8xf32>
    %cst_41 = arith.constant dense<0.000000e+00> : vector<8xf32>
    %65 = vector.multi_reduction <add>, %64, %cst_41 [1] : vector<8x8xf32> to vector<8xf32>
    %66 = vector.shape_cast %65 : vector<8xf32> to vector<8x1xf32>
    %cst_42 = arith.constant dense<0.000000e+00> : vector<8x8xf32>
    %67 = tpu.matmul %64, %58, %cst_42 {dimension_numbers = #tpu.dot_dimension_numbers<[1], [0], [0], [1], [0, 0, 1, 1], [], []>} : vector<8x8xf32>, vector<8x8xf32>, vector<8x8xf32> -> vector<8x8xf32>
    %68 = tpu.reciprocal %66 : vector<8x1xf32> -> vector<8x1xf32>
    %69 = vector.broadcast %68 : vector<8x1xf32> to vector<8x8xf32>
    %70 = arith.mulf %67, %69 : vector<8x8xf32>
    %71 = vector.extract_strided_slice %25 {offsets = [0, 24], sizes = [8, 8], strides = [1, 1]} : vector<8x32xf32> to vector<8x8xf32>
    %72 = vector.extract_strided_slice %23 {offsets = [0, 24], sizes = [8, 8], strides = [1, 1]} : vector<8x32xf32> to vector<8x8xf32>
    %73 = vector.extract_strided_slice %24 {offsets = [0, 24], sizes = [8, 8], strides = [1, 1]} : vector<8x32xf32> to vector<8x8xf32>
    %cst_43 = arith.constant dense<0.000000e+00> : vector<8x8xf32>
    %74 = tpu.matmul %71, %72, %cst_43 {dimension_numbers = #tpu.dot_dimension_numbers<[1], [1], [0], [0], [0, 0, 1, 0], [], []>} : vector<8x8xf32>, vector<8x8xf32>, vector<8x8xf32> -> vector<8x8xf32>
    %cst_44 = arith.constant dense<0xFF800000> : vector<8xf32>
    %75 = vector.multi_reduction <maximumf>, %74, %cst_44 [1] : vector<8x8xf32> to vector<8xf32>
    %76 = vector.shape_cast %75 : vector<8xf32> to vector<8x1xf32>
    %77 = vector.broadcast %76 : vector<8x1xf32> to vector<8x8xf32>
    %78 = arith.subf %74, %77 : vector<8x8xf32>
    %79 = math.exp %78 : vector<8x8xf32>
    %cst_45 = arith.constant dense<0.000000e+00> : vector<8xf32>
    %80 = vector.multi_reduction <add>, %79, %cst_45 [1] : vector<8x8xf32> to vector<8xf32>
    %81 = vector.shape_cast %80 : vector<8xf32> to vector<8x1xf32>
    %cst_46 = arith.constant dense<0.000000e+00> : vector<8x8xf32>
    %82 = tpu.matmul %79, %73, %cst_46 {dimension_numbers = #tpu.dot_dimension_numbers<[1], [0], [0], [1], [0, 0, 1, 1], [], []>} : vector<8x8xf32>, vector<8x8xf32>, vector<8x8xf32> -> vector<8x8xf32>
    %83 = tpu.reciprocal %81 : vector<8x1xf32> -> vector<8x1xf32>
    %84 = vector.broadcast %83 : vector<8x1xf32> to vector<8x8xf32>
    %85 = arith.mulf %82, %84 : vector<8x8xf32>
    %86 = tpu.concatenate %40, %55, %70, %85 in 1 : vector<8x8xf32>, vector<8x8xf32>, vector<8x8xf32>, vector<8x8xf32> -> vector<8x32xf32>
    %c0_47 = arith.constant 0 : index
    %c0_48 = arith.constant 0 : index
    %87 = vector.load %arg10[%c0_47, %c0_48] : memref<8x128xf32, #tpu.memory_space<vmem>>, vector<8x32xf32>
    tpu.vector_store %arg10[%c0_47, %c0_48], %86 {strides = array<i32>} : memref<8x128xf32, #tpu.memory_space<vmem>>, vector<8x32xf32>,
    %c0_49 = arith.constant 0 : index
    %c0_50 = arith.constant 0 : index
    %88 = vector.load %arg10[%c0_49, %c0_50] : memref<8x128xf32, #tpu.memory_space<vmem>>, vector<8x128xf32>
    %c0_51 = arith.constant 0 : index
    %c0_52 = arith.constant 0 : index
    %89 = vector.load %arg6[%c0_51, %c0_52] : memref<128x128xf32, #tpu.memory_space<vmem>>, vector<128x128xf32>
    %cst_53 = arith.constant dense<0.000000e+00> : vector<8x128xf32>
    %90 = tpu.matmul %88, %89, %cst_53 {dimension_numbers = #tpu.dot_dimension_numbers<[1], [0], [0], [1], [0, 0, 1, 1], [], []>} : vector<8x128xf32>, vector<128x128xf32>, vector<8x128xf32> -> vector<8x128xf32>
    %c0_54 = arith.constant 0 : index
    %c0_55 = arith.constant 0 : index
    %91 = vector.load %arg7[%c0_54, %c0_55] : memref<1x128xf32, #tpu.memory_space<vmem>>, vector<1x128xf32>
    %92 = vector.broadcast %91 : vector<1x128xf32> to vector<8x128xf32>
    %93 = arith.addf %90, %92 : vector<8x128xf32>
    %c0_56 = arith.constant 0 : index
    %c0_57 = arith.constant 0 : index
    %94 = vector.load %arg8[%c0_56, %c0_57] : memref<8x128xf32, #tpu.memory_space<vmem>>, vector<8x128xf32>
    tpu.vector_store %arg8[%c0_56, %c0_57], %93 {strides = array<i32>} : memref<8x128xf32, #tpu.memory_space<vmem>>, vector<8x128xf32>,
    return
  }
  func.func @transform_0(%arg0: i32) -> (i32, i32) {
    %c0_i32 = arith.constant 0 : i32
    %c0_i32_0 = arith.constant 0 : i32
    return %arg0, %c0_i32 : i32, i32
  }
  func.func @transform_1(%arg0: i32) -> (i32, i32) {
    %c0_i32 = arith.constant 0 : i32
    %c0_i32_0 = arith.constant 0 : i32
    return %arg0, %c0_i32 : i32, i32
  }
  func.func @transform_2(%arg0: i32) -> (i32, i32) {
    %c0_i32 = arith.constant 0 : i32
    %c0_i32_0 = arith.constant 0 : i32
    return %arg0, %c0_i32 : i32, i32
  }
  func.func @transform_3(%arg0: i32) -> (i32, i32) {
    %c0_i32 = arith.constant 0 : i32
    %c0_i32_0 = arith.constant 0 : i32
    %c0_i32_1 = arith.constant 0 : i32
    return %c0_i32, %c0_i32_0 : i32, i32
  }
  func.func @transform_4(%arg0: i32) -> (i32, i32) {
    %c0_i32 = arith.constant 0 : i32
    %c0_i32_0 = arith.constant 0 : i32
    %c0_i32_1 = arith.constant 0 : i32
    return %c0_i32, %c0_i32_0 : i32, i32
  }
  func.func @transform_5(%arg0: i32) -> (i32, i32) {
    %c0_i32 = arith.constant 0 : i32
    %c0_i32_0 = arith.constant 0 : i32
    %c0_i32_1 = arith.constant 0 : i32
    return %c0_i32, %c0_i32_0 : i32, i32
  }
  func.func @transform_6(%arg0: i32) -> (i32, i32) {
    %c0_i32 = arith.constant 0 : i32
    %c0_i32_0 = arith.constant 0 : i32
    %c0_i32_1 = arith.constant 0 : i32
    return %c0_i32, %c0_i32_0 : i32, i32
  }
  func.func @transform_7(%arg0: i32) -> (i32, i32) {
    %c0_i32 = arith.constant 0 : i32
    %c0_i32_0 = arith.constant 0 : i32
    return %arg0, %c0_i32 : i32, i32
  }
}

</mosaic_0001>

<llo_original>
// kernel: tpu_custom_call.1
$region0: #{tpu_custom_call.1}
  #allocation0 [shape = 'u32[]', space=smem, size = 0x4, offset = 0x4, fixed_abs, tag = 'smem constant byte address 0x4 - core index']
  #allocation1 [shape = 'u32[144,128]{1,0:T(1,128)}', space=vmem, size = 0x12000, scoped, tag = 'internal scratch']
  #allocation2 [shape = 'f32[8,384]{1,0:T(8,128)}', space=vmem, size = 0x3000, scoped, tag = 'scratch operand']
  #allocation3 [shape = 'f32[8,128]{1,0:T(8,128)}', space=vmem, size = 0x1000, scoped, tag = 'scratch operand']
  %s0 = inlined_call_operand.hbm [shape: f32[16,128], index: 0, kind: input, shape index: {}]
  %s1 = inlined_call_operand.hbm [shape: f32[16,128], index: 1, kind: input, shape index: {}]
  %s2 = inlined_call_operand.hbm [shape: f32[16,128], index: 2, kind: input, shape index: {}]
  %s3 = inlined_call_operand.hbm [shape: f32[128,384], index: 3, kind: input, shape index: {}]
  %s4 = inlined_call_operand.vmem [shape: f32[1,384], index: 4, kind: input, shape index: {}]
  %s5 = inlined_call_operand.hbm [shape: f32[128,128], index: 5, kind: input, shape index: {}]
  %s6 = inlined_call_operand.vmem [shape: f32[1,128], index: 6, kind: input, shape index: {}]
  %s7 = inlined_call_operand.hbm [shape: f32[16,128], index: 7, kind: output, shape index: {}]
  %s8 = sld [smem:[#allocation0]]
  $region81: #{tpu_custom_call.1} parent=0
    _
  %s10 = ssub.s32 1, %s8
  %s11 = scalar_select 0, %s10, %s8
  $region1: #{tpu_custom_call.1} parent=0
    #allocation4 [shape = 'u8[8192]{0}', space=vmem, size = 0x2000, scoped, tag = 'input window, operand 0']
    #allocation5 [shape = 's32[2]{0}', space=sflag, size = 0x8, scoped, tag = 'scoped memory for tpu_custom_call.1']
    #allocation6 [shape = 's32[2]{0}', space=sflag, size = 0x8, scoped, tag = 'scoped memory for tpu_custom_call.1']
    #allocation7 [shape = 'u8[8192]{0}', space=vmem, size = 0x2000, scoped, tag = 'input window, operand 1']
    #allocation8 [shape = 's32[2]{0}', space=sflag, size = 0x8, scoped, tag = 'scoped memory for tpu_custom_call.1']
    #allocation9 [shape = 'u8[8192]{0}', space=vmem, size = 0x2000, scoped, tag = 'input window, operand 2']
    #allocation10 [shape = 'u8[196608]{0}', space=vmem, size = 0x30000, scoped, tag = 'input window, operand 3, single buffered']
    #allocation11 [shape = 's32[1]{0}', space=sflag, size = 0x4, scoped, tag = 'scoped memory for tpu_custom_call.1']
    #allocation12 [shape = 'u8[65536]{0}', space=vmem, size = 0x10000, scoped, tag = 'input window, operand 5, single buffered']
    #allocation13 [shape = 'u8[8192]{0}', space=vmem, size = 0x2000, scoped, tag = 'output window, operand 0']
    %12 = vsyncpa [#allocation5], 0
    %s13 = scalar_lea.sflag [#allocation5], 1
    %14 = vsyncpa %s13, 0
    %15 = vsyncpa [#allocation8], 0
    %s16 = scalar_lea.sflag [#allocation8], 1
    %17 = vsyncpa %s16, 0
    %18 = vsyncpa [#allocation11], 0
    %19 = vsyncpa [#allocation6], 0
    %s20 = scalar_lea.sflag [#allocation6], 1
    %21 = vsyncpa %s20, 0
    loop: start=0, step=1, limit=4
    $region2: #{tpu_custom_call.1} parent=1 // loop_pre_header
      _
    $region3: #{tpu_custom_call.1} parent=1 // loop_header
      %s23 = sphi 0, %s27
      %p24 = scmp.ge.s32.totalorder %s23, 4
      %s33 = sphi 0, %s35
      %s36 = sphi 0, %s33
      %s37 = sphi 0, %s36
      %s53 = sphi 0, %s37
      %s59 = sphi 0, %s61
      %s62 = sphi 0, %s59
      %s63 = sphi 0, %s62
      %s79 = sphi 0, %s63
      %s85 = sphi 0, %s87
      %s88 = sphi 0, %s85
      %s89 = sphi 0, %s88
      %s105 = sphi 0, %s89
      %s109 = sphi 0, %s109
      %s111 = sphi 0, %s109
      %s112 = sphi 0, %s111
      %s126 = sphi 0, %s112
      %s130 = sphi 0, %s130
      %s132 = sphi 0, %s130
      %s133 = sphi 0, %s132
      %s147 = sphi 0, %s133
      %s151 = sphi 0, %s151
      %s153 = sphi 0, %s151
      %s154 = sphi 0, %s153
      %s168 = sphi 0, %s154
      %s172 = sphi 0, %s172
      %s174 = sphi 0, %s172
      %s175 = sphi 0, %s174
      %s189 = sphi 0, %s175
      %s195 = sphi 0, %s197
      %s198 = sphi 0, %s195
      %s199 = sphi 0, %s198
      %s215 = sphi 0, %s199
    $region4: #{tpu_custom_call.1} parent=1 // loop_header_branch
      %26 = sbr.rel (%p24) target = $region8
    $region5: #{tpu_custom_call.1} parent=1 // loop_body
      %s28 = ssub.s32 %s23, 1
      %s29 = ssub.s32 %s23, 2
      %s30 = sadd.s32 %s23, 1
      %s31 = ssub.s32 %s23, %s30
      %p32 = scmp.eq.s32.totalorder %s31, 0
      %s34 = sadd.s32 %s33, 1
      %s35 = scalar_select %p32, %s33, %s34
      %p38 = pneg %p32
      %p39 = scmp.eq.s32.totalorder %s23, 1
      %p40 = por %p38, %p39
      %p41 = scmp.ne.s32.totalorder %s33, %s36
      %p42 = scmp.eq.s32.totalorder %s23, 0
      %p43 = por %p41, %p42
      %p44 = scmp.ne.s32.totalorder %s33, %s36
      %p45 = scmp.eq.s32.totalorder %s28, 1
      %p46 = por %p44, %p45
      %p47 = scmp.ne.s32.totalorder %s36, %s37
      %p48 = scmp.eq.s32.totalorder %s28, 0
      %p49 = por %p47, %p48
      %p50 = scmp.ne.s32.totalorder %s36, %s37
      %p51 = scmp.eq.s32.totalorder %s29, 1
      %p52 = por %p50, %p51
      %p54 = scmp.ne.s32.totalorder %s37, %s53
      %p55 = scmp.eq.s32.totalorder %s29, 0
      %p56 = por %p54, %p55
      %s57 = ssub.s32 %s23, %s30
      %p58 = scmp.eq.s32.totalorder %s57, 0
      %s60 = sadd.s32 %s59, 1
      %s61 = scalar_select %p58, %s59, %s60
      %p64 = pneg %p58
      %p65 = scmp.eq.s32.totalorder %s23, 1
      %p66 = por %p64, %p65
      %p67 = scmp.ne.s32.totalorder %s59, %s62
      %p68 = scmp.eq.s32.totalorder %s23, 0
      %p69 = por %p67, %p68
      %p70 = scmp.ne.s32.totalorder %s59, %s62
      %p71 = scmp.eq.s32.totalorder %s28, 1
      %p72 = por %p70, %p71
      %p73 = scmp.ne.s32.totalorder %s62, %s63
      %p74 = scmp.eq.s32.totalorder %s28, 0
      %p75 = por %p73, %p74
      %p76 = scmp.ne.s32.totalorder %s62, %s63
      %p77 = scmp.eq.s32.totalorder %s29, 1
      %p78 = por %p76, %p77
      %p80 = scmp.ne.s32.totalorder %s63, %s79
      %p81 = scmp.eq.s32.totalorder %s29, 0
      %p82 = por %p80, %p81
      %s83 = ssub.s32 %s23, %s30
      %p84 = scmp.eq.s32.totalorder %s83, 0
      %s86 = sadd.s32 %s85, 1
      %s87 = scalar_select %p84, %s85, %s86
      %p90 = pneg %p84
      %p91 = scmp.eq.s32.totalorder %s23, 1
      %p92 = por %p90, %p91
      %p93 = scmp.ne.s32.totalorder %s85, %s88
      %p94 = scmp.eq.s32.totalorder %s23, 0
      %p95 = por %p93, %p94
      %p96 = scmp.ne.s32.totalorder %s85, %s88
      %p97 = scmp.eq.s32.totalorder %s28, 1
      %p98 = por %p96, %p97
      %p99 = scmp.ne.s32.totalorder %s88, %s89
      %p100 = scmp.eq.s32.totalorder %s28, 0
      %p101 = por %p99, %p100
      %p102 = scmp.ne.s32.totalorder %s88, %s89
      %p103 = scmp.eq.s32.totalorder %s29, 1
      %p104 = por %p102, %p103
      %p106 = scmp.ne.s32.totalorder %s89, %s105
      %p107 = scmp.eq.s32.totalorder %s29, 0
      %p108 = por %p106, %p107
      %s110 = sadd.s32 %s109, 1
      %p113 = scmp.eq.s32.totalorder %s23, 1
      %p114 = scmp.ne.s32.totalorder %s109, %s111
      %p115 = scmp.eq.s32.totalorder %s23, 0
      %p116 = por %p114, %p115
      %p117 = scmp.ne.s32.totalorder %s109, %s111
      %p118 = scmp.eq.s32.totalorder %s28, 1
      %p119 = por %p117, %p118
      %p120 = scmp.ne.s32.totalorder %s111, %s112
      %p121 = scmp.eq.s32.totalorder %s28, 0
      %p122 = por %p120, %p121
      %p123 = scmp.ne.s32.totalorder %s111, %s112
      %p124 = scmp.eq.s32.totalorder %s29, 1
      %p125 = por %p123, %p124
      %p127 = scmp.ne.s32.totalorder %s112, %s126
      %p128 = scmp.eq.s32.totalorder %s29, 0
      %p129 = por %p127, %p128
      %s131 = sadd.s32 %s130, 1
      %p134 = scmp.eq.s32.totalorder %s23, 1
      %p135 = scmp.ne.s32.totalorder %s130, %s132
      %p136 = scmp.eq.s32.totalorder %s23, 0
      %p137 = por %p135, %p136
      %p138 = scmp.ne.s32.totalorder %s130, %s132
      %p139 = scmp.eq.s32.totalorder %s28, 1
      %p140 = por %p138, %p139
      %p141 = scmp.ne.s32.totalorder %s132, %s133
      %p142 = scmp.eq.s32.totalorder %s28, 0
      %p143 = por %p141, %p142
      %p144 = scmp.ne.s32.totalorder %s132, %s133
      %p145 = scmp.eq.s32.totalorder %s29, 1
      %p146 = por %p144, %p145
      %p148 = scmp.ne.s32.totalorder %s133, %s147
      %p149 = scmp.eq.s32.totalorder %s29, 0
      %p150 = por %p148, %p149
      %s152 = sadd.s32 %s151, 1
      %p155 = scmp.eq.s32.totalorder %s23, 1
      %p156 = scmp.ne.s32.totalorder %s151, %s153
      %p157 = scmp.eq.s32.totalorder %s23, 0
      %p158 = por %p156, %p157
      %p159 = scmp.ne.s32.totalorder %s151, %s153
      %p160 = scmp.eq.s32.totalorder %s28, 1
      %p161 = por %p159, %p160
      %p162 = scmp.ne.s32.totalorder %s153, %s154
      %p163 = scmp.eq.s32.totalorder %s28, 0
      %p164 = por %p162, %p163
      %p165 = scmp.ne.s32.totalorder %s153, %s154
      %p166 = scmp.eq.s32.totalorder %s29, 1
      %p167 = por %p165, %p166
      %p169 = scmp.ne.s32.totalorder %s154, %s168
      %p170 = scmp.eq.s32.totalorder %s29, 0
      %p171 = por %p169, %p170
      %s173 = sadd.s32 %s172, 1
      %p176 = scmp.eq.s32.totalorder %s23, 1
      %p177 = scmp.ne.s32.totalorder %s172, %s174
      %p178 = scmp.eq.s32.totalorder %s23, 0
      %p179 = por %p177, %p178
      %p180 = scmp.ne.s32.totalorder %s172, %s174
      %p181 = scmp.eq.s32.totalorder %s28, 1
      %p182 = por %p180, %p181
      %p183 = scmp.ne.s32.totalorder %s174, %s175
      %p184 = scmp.eq.s32.totalorder %s28, 0
      %p185 = por %p183, %p184
      %p186 = scmp.ne.s32.totalorder %s174, %s175
      %p187 = scmp.eq.s32.totalorder %s29, 1
      %p188 = por %p186, %p187
      %p190 = scmp.ne.s32.totalorder %s175, %s189
      %p191 = scmp.eq.s32.totalorder %s29, 0
      %p192 = por %p190, %p191
      %s193 = ssub.s32 %s23, %s30
      %p194 = scmp.eq.s32.totalorder %s193, 0
      %s196 = sadd.s32 %s195, 1
      %s197 = scalar_select %p194, %s195, %s196
      %p200 = pneg %p194
      %p201 = scmp.eq.s32.totalorder %s23, 1
      %p202 = por %p200, %p201
      %p203 = scmp.ne.s32.totalorder %s195, %s198
      %p204 = scmp.eq.s32.totalorder %s23, 0
      %p205 = por %p203, %p204
      %p206 = scmp.ne.s32.totalorder %s195, %s198
      %p207 = scmp.eq.s32.totalorder %s28, 1
      %p208 = por %p206, %p207
      %p209 = scmp.ne.s32.totalorder %s198, %s199
      %p210 = scmp.eq.s32.totalorder %s28, 0
      %p211 = por %p209, %p210
      %p212 = scmp.ne.s32.totalorder %s198, %s199
      %p213 = scmp.eq.s32.totalorder %s29, 1
      %p214 = por %p212, %p213
      %p216 = scmp.ne.s32.totalorder %s199, %s215
      %p217 = scmp.eq.s32.totalorder %s29, 0
      %p218 = por %p216, %p217
      %p219 = scmp.le.s32.totalorder 1, %s23
      %p220 = scmp.lt.s32.totalorder %s23, 3
      %p221 = pnand %p219, %p220
      %p222 = pneg %p221
      // Predicated region
      $region9: #{tpu_custom_call.1} parent=5 // pred_check
        _
      $region10: #{tpu_custom_call.1} parent=5 // pred_check_branch
        %224 = sbr.rel (%p221) target = $region12
      $region11: #{tpu_custom_call.1} parent=5 // pred_region
        %s225 = ssub.s32 %s23, 1
        // Predicated region
        $region13: #{tpu_custom_call.1} parent=11 // pred_check
          %p226 = pneg %p122
        $region14: #{tpu_custom_call.1} parent=11 // pred_check_branch
          %228 = sbr.rel (%p226) target = $region16
        $region15: #{tpu_custom_call.1} parent=11 // pred_region
          %s230 = ssub.s32 6144, 6144
          %231 = vsyncadd [#allocation11], %s230
          %s232 = sshll.u32 [#allocation10], 4
          %s233 = int_to_ptr.vmem [resolvable:$true] %s232
          %238 = dma.hbm_to_vmem [thread:$0]  %s3, 6144, %s233, [#allocation11], 384, 384, 24
        $region16: #{tpu_custom_call.1} parent=11 // pred_fallthru
          _
        // Predicated region
        $region17: #{tpu_custom_call.1} parent=11 // pred_check
          %p239 = pneg %p143
        $region18: #{tpu_custom_call.1} parent=11 // pred_check_branch
          %241 = sbr.rel (%p239) target = $region20
        $region19: #{tpu_custom_call.1} parent=11 // pred_region
          _
        $region20: #{tpu_custom_call.1} parent=11 // pred_fallthru
          _
        // Predicated region
        $region21: #{tpu_custom_call.1} parent=11 // pred_check
          %p242 = pneg %p164
        $region22: #{tpu_custom_call.1} parent=11 // pred_check_branch
          %244 = sbr.rel (%p242) target = $region24
        $region23: #{tpu_custom_call.1} parent=11 // pred_region
          %s246 = ssub.s32 2048, 2048
          %247 = vsyncadd [#allocation11], %s246
          %s248 = sshll.u32 [#allocation12], 4
          %s249 = int_to_ptr.vmem [resolvable:$true] %s248
          %254 = dma.hbm_to_vmem [thread:$0]  %s5, 2048, %s249, [#allocation11], 128, 128, 8
        $region24: #{tpu_custom_call.1} parent=11 // pred_fallthru
          _
        // Predicated region
        $region25: #{tpu_custom_call.1} parent=11 // pred_check
          %p255 = pneg %p185
        $region26: #{tpu_custom_call.1} parent=11 // pred_check_branch
          %257 = sbr.rel (%p255) target = $region28
        $region27: #{tpu_custom_call.1} parent=11 // pred_region
          _
        $region28: #{tpu_custom_call.1} parent=11 // pred_fallthru
          _
      $region12: #{tpu_custom_call.1} parent=5 // pred_fallthru
        _
      %p258 = scmp.lt.s32.totalorder %s23, 2
      // Predicated region
      $region29: #{tpu_custom_call.1} parent=5 // pred_check
        %p259 = pneg %p258
      $region30: #{tpu_custom_call.1} parent=5 // pred_check_branch
        %261 = sbr.rel (%p259) target = $region32
      $region31: #{tpu_custom_call.1} parent=5 // pred_region
        // Predicated region
        $region33: #{tpu_custom_call.1} parent=31 // pred_check
          %p262 = pneg %p43
        $region34: #{tpu_custom_call.1} parent=31 // pred_check_branch
          %264 = sbr.rel (%p262) target = $region36
        $region35: #{tpu_custom_call.1} parent=31 // pred_region
          %s265 = sand.u32 %s33, 1
          %s266 = scalar_lea.sflag [#allocation5], %s265
          %s267 = sand.u32 %s33, 1
          %s268 = smul.addr %s267, 8
          %s269 = scalar_lea.vmem [#allocation4], %s268
          %s271 = ssub.s32 128, 128
          %272 = vsyncadd %s266, %s271
          %s273 = smul.addr %s23, 128
          %s274 = scalar_lea.hbm %s0, %s273
          %s276 = sshll.u32 %s269, 4
          %s277 = int_to_ptr.vmem [resolvable:$true] %s276
          %279 = dma.hbm_to_vmem [thread:$0]  %s274, 128, %s277, %s266
        $region36: #{tpu_custom_call.1} parent=31 // pred_fallthru
          _
        // Predicated region
        $region37: #{tpu_custom_call.1} parent=31 // pred_check
          %p280 = pneg %p69
        $region38: #{tpu_custom_call.1} parent=31 // pred_check_branch
          %282 = sbr.rel (%p280) target = $region40
        $region39: #{tpu_custom_call.1} parent=31 // pred_region
          %s283 = sand.u32 %s23, 1
          %s284 = scalar_lea.sflag [#allocation8], %s283
          %s285 = sand.u32 %s59, 1
          %s286 = smul.addr %s285, 8
          %s287 = scalar_lea.vmem [#allocation7], %s286
          %s289 = ssub.s32 128, 128
          %290 = vsyncadd %s284, %s289
          %s291 = smul.addr %s23, 128
          %s292 = scalar_lea.hbm %s1, %s291
          %s294 = sshll.u32 %s287, 4
          %s295 = int_to_ptr.vmem [resolvable:$true] %s294
          %297 = dma.hbm_to_vmem [thread:$0]  %s292, 128, %s295, %s284
        $region40: #{tpu_custom_call.1} parent=31 // pred_fallthru
          _
        // Predicated region
        $region41: #{tpu_custom_call.1} parent=31 // pred_check
          %p298 = pneg %p95
        $region42: #{tpu_custom_call.1} parent=31 // pred_check_branch
          %300 = sbr.rel (%p298) target = $region44
        $region43: #{tpu_custom_call.1} parent=31 // pred_region
          %s301 = sand.u32 %s23, 1
          %s302 = scalar_lea.sflag [#allocation8], %s301
          %s303 = sand.u32 %s85, 1
          %s304 = smul.addr %s303, 8
          %s305 = scalar_lea.vmem [#allocation9], %s304
          %s307 = ssub.s32 128, 128
          %308 = vsyncadd %s302, %s307
          %s309 = smul.addr %s23, 128
          %s310 = scalar_lea.hbm %s2, %s309
          %s312 = sshll.u32 %s305, 4
          %s313 = int_to_ptr.vmem [resolvable:$true] %s312
          %315 = dma.hbm_to_vmem [thread:$0]  %s310, 128, %s313, %s302
        $region44: #{tpu_custom_call.1} parent=31 // pred_fallthru
          _
      $region32: #{tpu_custom_call.1} parent=5 // pred_fallthru
        _
      %p316 = scmp.le.s32.totalorder 1, %s23
      %p317 = scmp.lt.s32.totalorder %s23, 3
      %p318 = pnand %p316, %p317
      %p319 = pneg %p318
      // Predicated region
      $region45: #{tpu_custom_call.1} parent=5 // pred_check
        _
      $region46: #{tpu_custom_call.1} parent=5 // pred_check_branch
        %321 = sbr.rel (%p318) target = $region48
      $region47: #{tpu_custom_call.1} parent=5 // pred_region
        %s322 = ssub.s32 %s23, 1
        %s323 = sand.u32 %s36, 1
        %s324 = scalar_lea.sflag [#allocation5], %s323
        %s325 = sand.u32 %s36, 1
        %s326 = smul.addr %s325, 8
        %s327 = scalar_lea.vmem [#allocation4], %s326
        // Predicated region
        $region49: #{tpu_custom_call.1} parent=47 // pred_check
          %p328 = pneg %p49
        $region50: #{tpu_custom_call.1} parent=47 // pred_check_branch
          %330 = sbr.rel (%p328) target = $region52
        $region51: #{tpu_custom_call.1} parent=47 // pred_region
          %331 = dma.done %s324, 128
        $region52: #{tpu_custom_call.1} parent=47 // pred_fallthru
          _
        %s332 = sand.u32 %s28, 1
        %s333 = scalar_lea.sflag [#allocation8], %s332
        %s334 = sand.u32 %s62, 1
        %s335 = smul.addr %s334, 8
        %s336 = scalar_lea.vmem [#allocation7], %s335
        // Predicated region
        $region53: #{tpu_custom_call.1} parent=47 // pred_check
          %p337 = pneg %p75
        $region54: #{tpu_custom_call.1} parent=47 // pred_check_branch
          %339 = sbr.rel (%p337) target = $region56
        $region55: #{tpu_custom_call.1} parent=47 // pred_region
          %340 = dma.done %s333, 128
        $region56: #{tpu_custom_call.1} parent=47 // pred_fallthru
          _
        %s341 = sand.u32 %s28, 1
        %s342 = scalar_lea.sflag [#allocation8], %s341
        %s343 = sand.u32 %s88, 1
        %s344 = smul.addr %s343, 8
        %s345 = scalar_lea.vmem [#allocation9], %s344
        // Predicated region
        $region57: #{tpu_custom_call.1} parent=47 // pred_check
          %p346 = pneg %p101
        $region58: #{tpu_custom_call.1} parent=47 // pred_check_branch
          %348 = sbr.rel (%p346) target = $region60
        $region59: #{tpu_custom_call.1} parent=47 // pred_region
          %349 = dma.done %s342, 128
        $region60: #{tpu_custom_call.1} parent=47 // pred_fallthru
          _
        // Predicated region
        $region61: #{tpu_custom_call.1} parent=47 // pred_check
          %p350 = pneg %p122
        $region62: #{tpu_custom_call.1} parent=47 // pred_check_branch
          %352 = sbr.rel (%p350) target = $region64
        $region63: #{tpu_custom_call.1} parent=47 // pred_region
          %353 = dma.done [#allocation11], 6144
        $region64: #{tpu_custom_call.1} parent=47 // pred_fallthru
          _
        // Predicated region
        $region65: #{tpu_custom_call.1} parent=47 // pred_check
          %p354 = pneg %p164
        $region66: #{tpu_custom_call.1} parent=47 // pred_check_branch
          %356 = sbr.rel (%p354) target = $region68
        $region67: #{tpu_custom_call.1} parent=47 // pred_region
          %357 = dma.done [#allocation11], 2048
        $region68: #{tpu_custom_call.1} parent=47 // pred_fallthru
          _
        %s358 = sand.u32 %s36, 1
        %s359 = scalar_lea.sflag [#allocation5], %s358
        %s360 = sand.u32 %s36, 1
        %s361 = smul.addr %s360, 8
        %s362 = scalar_lea.vmem [#allocation4], %s361
        %p363 = pneg %p49
        %p364 = pneg %p46
        %s365 = sand.u32 %s28, 1
        %s366 = scalar_lea.sflag [#allocation8], %s365
        %s367 = sand.u32 %s62, 1
        %s368 = smul.addr %s367, 8
        %s369 = scalar_lea.vmem [#allocation7], %s368
        %p370 = pneg %p75
        %p371 = pneg %p72
        %s372 = sand.u32 %s28, 1
        %s373 = scalar_lea.sflag [#allocation8], %s372
        %s374 = sand.u32 %s88, 1
        %s375 = smul.addr %s374, 8
        %s376 = scalar_lea.vmem [#allocation9], %s375
        %p377 = pneg %p101
        %p378 = pneg %p98
        %p379 = pneg %p122
        %p380 = pneg %p119
        %p381 = pneg %p143
        %p382 = pneg %p140
        %p383 = pneg %p164
        %p384 = pneg %p161
        %p385 = pneg %p185
        %p386 = pneg %p182
        %p387 = pneg %p211
        %p388 = pneg %p208
        %s389 = sand.u32 %s198, 1
        %s390 = scalar_lea.sflag [#allocation6], %s389
        %s391 = sand.u32 %s198, 1
        %s392 = smul.addr %s391, 8
        %s393 = scalar_lea.vmem [#allocation13], %s392
        %v394 = vld [vmem:[%s345] sm:$0xff]
        %v395 = vld [vmem:[#allocation10] sm:$0xff]
        %v396 = vld [vmem:[#allocation10 + $0x18] sm:$0xff]
        %v397 = vld [vmem:[#allocation10 + $0x30] sm:$0xff]
        %v398 = vld [vmem:[#allocation10 + $0x48] sm:$0xff]
        %v399 = vld [vmem:[#allocation10 + $0x60] sm:$0xff]
        %v400 = vld [vmem:[#allocation10 + $0x78] sm:$0xff]
        %v401 = vld [vmem:[#allocation10 + $0x90] sm:$0xff]
        %v402 = vld [vmem:[#allocation10 + $0xa8] sm:$0xff]
        %v403 = vld [vmem:[#allocation10 + $0xc0] sm:$0xff]
        %v404 = vld [vmem:[#allocation10 + $0xd8] sm:$0xff]
        %v405 = vld [vmem:[#allocation10 + $0xf0] sm:$0xff]
        %v406 = vld [vmem:[#allocation10 + $0x108] sm:$0xff]
        %v407 = vld [vmem:[#allocation10 + $0x120] sm:$0xff]
        %v408 = vld [vmem:[#allocation10 + $0x138] sm:$0xff]
        %v409 = vld [vmem:[#allocation10 + $0x150] sm:$0xff]
        %v410 = vld [vmem:[#allocation10 + $0x168] sm:$0xff]
        %v411 = vld [vmem:[%s4] sm:$0x1]
        %v413 = vlaneseq
        %v414 = vshrl.u32 %v413, 7
        %v415 = vsub.s32 0, %v414
        %v416 = vrot.slane %v411, %v415
        %418 = vmatprep.subr.mxu0 0.0
        %419 = vmatpush1.msra.mxu0 %v410
        %420 = vmatprep.subr.mxu0 0.0
        %421 = vmatpush1.msra.mxu0 %v409
        %422 = vmatprep.subr.mxu0 0.0
        %423 = vmatpush1.msra.mxu0 %v408
        %424 = vmatprep.subr.mxu0 0.0
        %425 = vmatpush1.msra.mxu0 %v407
        %426 = vmatprep.subr.mxu0 0.0
        %427 = vmatpush1.msra.mxu0 %v406
        %428 = vmatprep.subr.mxu0 0.0
        %429 = vmatpush1.msra.mxu0 %v405
        %430 = vmatprep.subr.mxu0 0.0
        %431 = vmatpush1.msra.mxu0 %v404
        %432 = vmatprep.subr.mxu0 0.0
        %433 = vmatpush1.msra.mxu0 %v403
        %434 = vmatprep.subr.mxu0 0.0
        %435 = vmatpush1.msra.mxu0 %v402
        %436 = vmatprep.subr.mxu0 0.0
        %437 = vmatpush1.msra.mxu0 %v401
        %438 = vmatprep.subr.mxu0 0.0
        %439 = vmatpush1.msra.mxu0 %v400
        %440 = vmatprep.subr.mxu0 0.0
        %441 = vmatpush1.msra.mxu0 %v399
        %442 = vmatprep.subr.mxu0 0.0
        %443 = vmatpush1.msra.mxu0 %v398
        %444 = vmatprep.subr.mxu0 0.0
        %445 = vmatpush1.msra.mxu0 %v397
        %446 = vmatprep.subr.mxu0 0.0
        %447 = vmatpush1.msra.mxu0 %v396
        %448 = vmatprep.subr.mxu0 0.0
        %449 = vmatpush1.msra.mxu0 %v395
        %450 = vmatprep.subr.mxu0 0.0
        %451 = vmatpush2.msra.mxu0 0.0
        %452 = vmatprep.subr.mxu0 0.0
        %453 = vmatpush2.msra.mxu0 0.0
        %454 = vmatprep.subr.mxu0 0.0
        %455 = vmatpush2.msra.mxu0 0.0
        %456 = vmatprep.subr.mxu0 0.0
        %457 = vmatpush2.msra.mxu0 0.0
        %458 = vmatprep.subr.mxu0 0.0
        %459 = vmatpush2.msra.mxu0 0.0
        %460 = vmatprep.subr.mxu0 0.0
        %461 = vmatpush2.msra.mxu0 0.0
        %462 = vmatprep.subr.mxu0 0.0
        %463 = vmatpush2.msra.mxu0 0.0
        %464 = vmatprep.subr.mxu0 0.0
        %465 = vmatpush2.msra.mxu0 0.0
        %466 = vmatprep.subr.mxu0 0.0
        %467 = vmatpush2.msra.mxu0 0.0
        %468 = vmatprep.subr.mxu0 0.0
        %469 = vmatpush2.msra.mxu0 0.0
        %470 = vmatprep.subr.mxu0 0.0
        %471 = vmatpush2.msra.mxu0 0.0
        %472 = vmatprep.subr.mxu0 0.0
        %473 = vmatpush2.msra.mxu0 0.0
        %474 = vmatprep.subr.mxu0 0.0
        %475 = vmatpush2.msra.mxu0 0.0
        %476 = vmatprep.subr.mxu0 0.0
        %477 = vmatpush2.msra.mxu0 0.0
        %478 = vmatprep.subr.mxu0 0.0
        %479 = vmatpush2.msra.mxu0 0.0
        %480 = vmatprep.subr.mxu0 0.0
        %481 = vmatpush2.msra.mxu0 0.0
        %482 = vmatprep.mubr.f32.mxu0 0.0
        %483 = vmatmul.mubr.f32.gmra.mxu0 %v394
        %v484 = vpop.f32.mrf.mxu0
        %v485 = vadd.f32 %v416, %v484
        %v486 = vpop.f32.mrf.mxu0
        %487 = vdwg.mxu0
        %488 = vst [vmem:[#allocation2] sm:$0xff] %v485
        %v489 = vld [vmem:[%s336] sm:$0xff]
        %v490 = vld [vmem:[#allocation10 + $0x8] sm:$0xff]
        %v491 = vld [vmem:[#allocation10 + $0x20] sm:$0xff]
        %v492 = vld [vmem:[#allocation10 + $0x38] sm:$0xff]
        %v493 = vld [vmem:[#allocation10 + $0x50] sm:$0xff]
        %v494 = vld [vmem:[#allocation10 + $0x68] sm:$0xff]
        %v495 = vld [vmem:[#allocation10 + $0x80] sm:$0xff]
        %v496 = vld [vmem:[#allocation10 + $0x98] sm:$0xff]
        %v497 = vld [vmem:[#allocation10 + $0xb0] sm:$0xff]
        %v498 = vld [vmem:[#allocation10 + $0xc8] sm:$0xff]
        %v499 = vld [vmem:[#allocation10 + $0xe0] sm:$0xff]
        %v500 = vld [vmem:[#allocation10 + $0xf8] sm:$0xff]
        %v501 = vld [vmem:[#allocation10 + $0x110] sm:$0xff]
        %v502 = vld [vmem:[#allocation10 + $0x128] sm:$0xff]
        %v503 = vld [vmem:[#allocation10 + $0x140] sm:$0xff]
        %v504 = vld [vmem:[#allocation10 + $0x158] sm:$0xff]
        %v505 = vld [vmem:[#allocation10 + $0x170] sm:$0xff]
        %v506 = vld [vmem:[%s4 + $0x1] sm:$0x1]
        %v508 = vlaneseq
        %v509 = vshrl.u32 %v508, 7
        %v510 = vsub.s32 0, %v509
        %v511 = vrot.slane %v506, %v510
        %513 = vmatprep.subr.mxu0 0.0
        %514 = vmatpush1.msra.mxu0 %v505
        %515 = vmatprep.subr.mxu0 0.0
        %516 = vmatpush1.msra.mxu0 %v504
        %517 = vmatprep.subr.mxu0 0.0
        %518 = vmatpush1.msra.mxu0 %v503
        %519 = vmatprep.subr.mxu0 0.0
        %520 = vmatpush1.msra.mxu0 %v502
        %521 = vmatprep.subr.mxu0 0.0
        %522 = vmatpush1.msra.mxu0 %v501
        %523 = vmatprep.subr.mxu0 0.0
        %524 = vmatpush1.msra.mxu0 %v500
        %525 = vmatprep.subr.mxu0 0.0
        %526 = vmatpush1.msra.mxu0 %v499
        %527 = vmatprep.subr.mxu0 0.0
        %528 = vmatpush1.msra.mxu0 %v498
        %529 = vmatprep.subr.mxu0 0.0
        %530 = vmatpush1.msra.mxu0 %v497
        %531 = vmatprep.subr.mxu0 0.0
        %532 = vmatpush1.msra.mxu0 %v496
        %533 = vmatprep.subr.mxu0 0.0
        %534 = vmatpush1.msra.mxu0 %v495
        %535 = vmatprep.subr.mxu0 0.0
        %536 = vmatpush1.msra.mxu0 %v494
        %537 = vmatprep.subr.mxu0 0.0
        %538 = vmatpush1.msra.mxu0 %v493
        %539 = vmatprep.subr.mxu0 0.0
        %540 = vmatpush1.msra.mxu0 %v492
        %541 = vmatprep.subr.mxu0 0.0
        %542 = vmatpush1.msra.mxu0 %v491
        %543 = vmatprep.subr.mxu0 0.0
        %544 = vmatpush1.msra.mxu0 %v490
        %545 = vmatprep.subr.mxu0 0.0
        %546 = vmatpush2.msra.mxu0 0.0
        %547 = vmatprep.subr.mxu0 0.0
        %548 = vmatpush2.msra.mxu0 0.0
        %549 = vmatprep.subr.mxu0 0.0
        %550 = vmatpush2.msra.mxu0 0.0
        %551 = vmatprep.subr.mxu0 0.0
        %552 = vmatpush2.msra.mxu0 0.0
        %553 = vmatprep.subr.mxu0 0.0
        %554 = vmatpush2.msra.mxu0 0.0
        %555 = vmatprep.subr.mxu0 0.0
        %556 = vmatpush2.msra.mxu0 0.0
        %557 = vmatprep.subr.mxu0 0.0
        %558 = vmatpush2.msra.mxu0 0.0
        %559 = vmatprep.subr.mxu0 0.0
        %560 = vmatpush2.msra.mxu0 0.0
        %561 = vmatprep.subr.mxu0 0.0
        %562 = vmatpush2.msra.mxu0 0.0
        %563 = vmatprep.subr.mxu0 0.0
        %564 = vmatpush2.msra.mxu0 0.0
        %565 = vmatprep.subr.mxu0 0.0
        %566 = vmatpush2.msra.mxu0 0.0
        %567 = vmatprep.subr.mxu0 0.0
        %568 = vmatpush2.msra.mxu0 0.0
        %569 = vmatprep.subr.mxu0 0.0
        %570 = vmatpush2.msra.mxu0 0.0
        %571 = vmatprep.subr.mxu0 0.0
        %572 = vmatpush2.msra.mxu0 0.0
        %573 = vmatprep.subr.mxu0 0.0
        %574 = vmatpush2.msra.mxu0 0.0
        %575 = vmatprep.subr.mxu0 0.0
        %576 = vmatpush2.msra.mxu0 0.0
        %577 = vmatprep.mubr.f32.mxu0 0.0
        %578 = vmatmul.mubr.f32.gmra.mxu0 %v489
        %v579 = vpop.f32.mrf.mxu0
        %v580 = vadd.f32 %v511, %v579
        %v581 = vpop.f32.mrf.mxu0
        %582 = vdwg.mxu0
        %583 = vst [vmem:[#allocation2 + $0x8] sm:$0xff] %v580
        %v584 = vld [vmem:[%s327] sm:$0xff]
        %v585 = vld [vmem:[#allocation10 + $0x10] sm:$0xff]
        %v586 = vld [vmem:[#allocation10 + $0x28] sm:$0xff]
        %v587 = vld [vmem:[#allocation10 + $0x40] sm:$0xff]
        %v588 = vld [vmem:[#allocation10 + $0x58] sm:$0xff]
        %v589 = vld [vmem:[#allocation10 + $0x70] sm:$0xff]
        %v590 = vld [vmem:[#allocation10 + $0x88] sm:$0xff]
        %v591 = vld [vmem:[#allocation10 + $0xa0] sm:$0xff]
        %v592 = vld [vmem:[#allocation10 + $0xb8] sm:$0xff]
        %v593 = vld [vmem:[#allocation10 + $0xd0] sm:$0xff]
        %v594 = vld [vmem:[#allocation10 + $0xe8] sm:$0xff]
        %v595 = vld [vmem:[#allocation10 + $0x100] sm:$0xff]
        %v596 = vld [vmem:[#allocation10 + $0x118] sm:$0xff]
        %v597 = vld [vmem:[#allocation10 + $0x130] sm:$0xff]
        %v598 = vld [vmem:[#allocation10 + $0x148] sm:$0xff]
        %v599 = vld [vmem:[#allocation10 + $0x160] sm:$0xff]
        %v600 = vld [vmem:[#allocation10 + $0x178] sm:$0xff]
        %v601 = vld [vmem:[%s4 + $0x2] sm:$0x1]
        %v603 = vlaneseq
        %v604 = vshrl.u32 %v603, 7
        %v605 = vsub.s32 0, %v604
        %v606 = vrot.slane %v601, %v605
        %608 = vmatprep.subr.mxu0 0.0
        %609 = vmatpush1.msra.mxu0 %v600
        %610 = vmatprep.subr.mxu0 0.0
        %611 = vmatpush1.msra.mxu0 %v599
        %612 = vmatprep.subr.mxu0 0.0
        %613 = vmatpush1.msra.mxu0 %v598
        %614 = vmatprep.subr.mxu0 0.0
        %615 = vmatpush1.msra.mxu0 %v597
        %616 = vmatprep.subr.mxu0 0.0
        %617 = vmatpush1.msra.mxu0 %v596
        %618 = vmatprep.subr.mxu0 0.0
        %619 = vmatpush1.msra.mxu0 %v595
        %620 = vmatprep.subr.mxu0 0.0
        %621 = vmatpush1.msra.mxu0 %v594
        %622 = vmatprep.subr.mxu0 0.0
        %623 = vmatpush1.msra.mxu0 %v593
        %624 = vmatprep.subr.mxu0 0.0
        %625 = vmatpush1.msra.mxu0 %v592
        %626 = vmatprep.subr.mxu0 0.0
        %627 = vmatpush1.msra.mxu0 %v591
        %628 = vmatprep.subr.mxu0 0.0
        %629 = vmatpush1.msra.mxu0 %v590
        %630 = vmatprep.subr.mxu0 0.0
        %631 = vmatpush1.msra.mxu0 %v589
        %632 = vmatprep.subr.mxu0 0.0
        %633 = vmatpush1.msra.mxu0 %v588
        %634 = vmatprep.subr.mxu0 0.0
        %635 = vmatpush1.msra.mxu0 %v587
        %636 = vmatprep.subr.mxu0 0.0
        %637 = vmatpush1.msra.mxu0 %v586
        %638 = vmatprep.subr.mxu0 0.0
        %639 = vmatpush1.msra.mxu0 %v585
        %640 = vmatprep.subr.mxu0 0.0
        %641 = vmatpush2.msra.mxu0 0.0
        %642 = vmatprep.subr.mxu0 0.0
        %643 = vmatpush2.msra.mxu0 0.0
        %644 = vmatprep.subr.mxu0 0.0
        %645 = vmatpush2.msra.mxu0 0.0
        %646 = vmatprep.subr.mxu0 0.0
        %647 = vmatpush2.msra.mxu0 0.0
        %648 = vmatprep.subr.mxu0 0.0
        %649 = vmatpush2.msra.mxu0 0.0
        %650 = vmatprep.subr.mxu0 0.0
        %651 = vmatpush2.msra.mxu0 0.0
        %652 = vmatprep.subr.mxu0 0.0
        %653 = vmatpush2.msra.mxu0 0.0
        %654 = vmatprep.subr.mxu0 0.0
        %655 = vmatpush2.msra.mxu0 0.0
        %656 = vmatprep.subr.mxu0 0.0
        %657 = vmatpush2.msra.mxu0 0.0
        %658 = vmatprep.subr.mxu0 0.0
        %659 = vmatpush2.msra.mxu0 0.0
        %660 = vmatprep.subr.mxu0 0.0
        %661 = vmatpush2.msra.mxu0 0.0
        %662 = vmatprep.subr.mxu0 0.0
        %663 = vmatpush2.msra.mxu0 0.0
        %664 = vmatprep.subr.mxu0 0.0
        %665 = vmatpush2.msra.mxu0 0.0
        %666 = vmatprep.subr.mxu0 0.0
        %667 = vmatpush2.msra.mxu0 0.0
        %668 = vmatprep.subr.mxu0 0.0
        %669 = vmatpush2.msra.mxu0 0.0
        %670 = vmatprep.subr.mxu0 0.0
        %671 = vmatpush2.msra.mxu0 0.0
        %672 = vmatprep.mubr.f32.mxu0 0.0
        %673 = vmatmul.mubr.f32.gmra.mxu0 %v584
        %v674 = vpop.f32.mrf.mxu0
        %v675 = vadd.f32 %v606, %v674
        %v676 = vpop.f32.mrf.mxu0
        %677 = vdwg.mxu0
        %678 = vst [vmem:[#allocation2 + $0x10] sm:$0xff] %v675
        %vm679 = vcmask 1047808
        %680 = vst.msk [vmem:[#allocation3] sm:$0xff] %vm679, 0.0
        %v681 = vld [vmem:[#allocation2 + $0x8] sm:$0xff]
        %v682 = vld [vmem:[#allocation2 + $0x10] sm:$0xff]
        %v683 = vld [vmem:[#allocation2] sm:$0xff]
        %vm684 = vcmask 64512
        %v686 = vsel %vm684, %v683, 0
        %v689 = vsel %vm684, %v681, 0
        %691 = vmatprep.subr.mxu0 0.0
        %692 = vmatpush1.xpose.msra.mxu0 0.0
        %693 = vmatprep.subr.mxu0 0.0
        %694 = vmatpush1.xpose.msra.mxu0 0.0
        %695 = vmatprep.subr.mxu0 0.0
        %696 = vmatpush1.xpose.msra.mxu0 0.0
        %697 = vmatprep.subr.mxu0 0.0
        %698 = vmatpush1.xpose.msra.mxu0 0.0
        %699 = vmatprep.subr.mxu0 0.0
        %700 = vmatpush1.xpose.msra.mxu0 0.0
        %701 = vmatprep.subr.mxu0 0.0
        %702 = vmatpush1.xpose.msra.mxu0 0.0
        %703 = vmatprep.subr.mxu0 0.0
        %704 = vmatpush1.xpose.msra.mxu0 0.0
        %705 = vmatprep.subr.mxu0 0.0
        %706 = vmatpush1.xpose.msra.mxu0 0.0
        %707 = vmatprep.subr.mxu0 0.0
        %708 = vmatpush1.xpose.msra.mxu0 0.0
        %709 = vmatprep.subr.mxu0 0.0
        %710 = vmatpush1.xpose.msra.mxu0 0.0
        %711 = vmatprep.subr.mxu0 0.0
        %712 = vmatpush1.xpose.msra.mxu0 0.0
        %713 = vmatprep.subr.mxu0 0.0
        %714 = vmatpush1.xpose.msra.mxu0 0.0
        %715 = vmatprep.subr.mxu0 0.0
        %716 = vmatpush1.xpose.msra.mxu0 0.0
        %717 = vmatprep.subr.mxu0 0.0
        %718 = vmatpush1.xpose.msra.mxu0 0.0
        %719 = vmatprep.subr.mxu0 0.0
        %720 = vmatpush1.xpose.msra.mxu0 0.0
        %721 = vmatprep.subr.mxu0 0.0
        %722 = vmatpush1.xpose.msra.mxu0 %v689
        %723 = vmatprep.subr.mxu0 0.0
        %724 = vmatpush2.xpose.msra.mxu0 0.0
        %725 = vmatprep.subr.mxu0 0.0
        %726 = vmatpush2.xpose.msra.mxu0 0.0
        %727 = vmatprep.subr.mxu0 0.0
        %728 = vmatpush2.xpose.msra.mxu0 0.0
        %729 = vmatprep.subr.mxu0 0.0
        %730 = vmatpush2.xpose.msra.mxu0 0.0
        %731 = vmatprep.subr.mxu0 0.0
        %732 = vmatpush2.xpose.msra.mxu0 0.0
        %733 = vmatprep.subr.mxu0 0.0
        %734 = vmatpush2.xpose.msra.mxu0 0.0
        %735 = vmatprep.subr.mxu0 0.0
        %736 = vmatpush2.xpose.msra.mxu0 0.0
        %737 = vmatprep.subr.mxu0 0.0
        %738 = vmatpush2.xpose.msra.mxu0 0.0
        %739 = vmatprep.subr.mxu0 0.0
        %740 = vmatpush2.xpose.msra.mxu0 0.0
        %741 = vmatprep.subr.mxu0 0.0
        %742 = vmatpush2.xpose.msra.mxu0 0.0
        %743 = vmatprep.subr.mxu0 0.0
        %744 = vmatpush2.xpose.msra.mxu0 0.0
        %745 = vmatprep.subr.mxu0 0.0
        %746 = vmatpush2.xpose.msra.mxu0 0.0
        %747 = vmatprep.subr.mxu0 0.0
        %748 = vmatpush2.xpose.msra.mxu0 0.0
        %749 = vmatprep.subr.mxu0 0.0
        %750 = vmatpush2.xpose.msra.mxu0 0.0
        %751 = vmatprep.subr.mxu0 0.0
        %752 = vmatpush2.xpose.msra.mxu0 0.0
        %753 = vmatprep.subr.mxu0 0.0
        %754 = vmatpush2.xpose.msra.mxu0 0.0
        %755 = vmatprep.mubr.f32.mxu0 0.0
        %756 = vmatmul.mubr.f32.gmra.mxu0 %v686
        %v757 = vpop.f32.mrf.mxu0
        %v758 = vadd.f32 0.0, %v757
        %v759 = vpop.f32.mrf.mxu0
        %760 = vdwg.mxu0
        %v761 = vsel %vm684, %v758, -inf
        %762 = vmax.xlane.f32.xlu0 %v761
        %v763 = vpop.xlane.xlu0 %762
        %v764 = vsub.f32 %v758, %v763
        %v765 = vmul.f32 %v764, 1.442695
        %v766 = vpow.pop %v765
        %v767 = vsel %vm684, %v766, 0.0
        %768 = vadd.xlane.f32.xlu0 %v767
        %v769 = vpop.xlane.xlu0 %768
        %v771 = vsel %vm684, %v766, 0
        %773 = vmatprep.subr.mxu0 0.0
        %774 = vmatpush1.msra.mxu0 0.0
        %775 = vmatprep.subr.mxu0 0.0
        %776 = vmatpush1.msra.mxu0 0.0
        %777 = vmatprep.subr.mxu0 0.0
        %778 = vmatpush1.msra.mxu0 0.0
        %779 = vmatprep.subr.mxu0 0.0
        %780 = vmatpush1.msra.mxu0 0.0
        %781 = vmatprep.subr.mxu0 0.0
        %782 = vmatpush1.msra.mxu0 0.0
        %783 = vmatprep.subr.mxu0 0.0
        %784 = vmatpush1.msra.mxu0 0.0
        %785 = vmatprep.subr.mxu0 0.0
        %786 = vmatpush1.msra.mxu0 0.0
        %787 = vmatprep.subr.mxu0 0.0
        %788 = vmatpush1.msra.mxu0 0.0
        %789 = vmatprep.subr.mxu0 0.0
        %790 = vmatpush1.msra.mxu0 0.0
        %791 = vmatprep.subr.mxu0 0.0
        %792 = vmatpush1.msra.mxu0 0.0
        %793 = vmatprep.subr.mxu0 0.0
        %794 = vmatpush1.msra.mxu0 0.0
        %795 = vmatprep.subr.mxu0 0.0
        %796 = vmatpush1.msra.mxu0 0.0
        %797 = vmatprep.subr.mxu0 0.0
        %798 = vmatpush1.msra.mxu0 0.0
        %799 = vmatprep.subr.mxu0 0.0
        %800 = vmatpush1.msra.mxu0 0.0
        %801 = vmatprep.subr.mxu0 0.0
        %802 = vmatpush1.msra.mxu0 0.0
        %803 = vmatprep.subr.mxu0 0.0
        %804 = vmatpush1.msra.mxu0 %v682
        %805 = vmatprep.subr.mxu0 0.0
        %806 = vmatpush2.msra.mxu0 0.0
        %807 = vmatprep.subr.mxu0 0.0
        %808 = vmatpush2.msra.mxu0 0.0
        %809 = vmatprep.subr.mxu0 0.0
        %810 = vmatpush2.msra.mxu0 0.0
        %811 = vmatprep.subr.mxu0 0.0
        %812 = vmatpush2.msra.mxu0 0.0
        %813 = vmatprep.subr.mxu0 0.0
        %814 = vmatpush2.msra.mxu0 0.0
        %815 = vmatprep.subr.mxu0 0.0
        %816 = vmatpush2.msra.mxu0 0.0
        %817 = vmatprep.subr.mxu0 0.0
        %818 = vmatpush2.msra.mxu0 0.0
        %819 = vmatprep.subr.mxu0 0.0
        %820 = vmatpush2.msra.mxu0 0.0
        %821 = vmatprep.subr.mxu0 0.0
        %822 = vmatpush2.msra.mxu0 0.0
        %823 = vmatprep.subr.mxu0 0.0
        %824 = vmatpush2.msra.mxu0 0.0
        %825 = vmatprep.subr.mxu0 0.0
        %826 = vmatpush2.msra.mxu0 0.0
        %827 = vmatprep.subr.mxu0 0.0
        %828 = vmatpush2.msra.mxu0 0.0
        %829 = vmatprep.subr.mxu0 0.0
        %830 = vmatpush2.msra.mxu0 0.0
        %831 = vmatprep.subr.mxu0 0.0
        %832 = vmatpush2.msra.mxu0 0.0
        %833 = vmatprep.subr.mxu0 0.0
        %834 = vmatpush2.msra.mxu0 0.0
        %835 = vmatprep.subr.mxu0 0.0
        %836 = vmatpush2.msra.mxu0 0.0
        %837 = vmatprep.mubr.f32.mxu0 0.0
        %838 = vmatmul.mubr.f32.gmra.mxu0 %v771
        %v839 = vpop.f32.mrf.mxu0
        %v840 = vadd.f32 0.0, %v839
        %v841 = vpop.f32.mrf.mxu0
        %842 = vdwg.mxu0
        %v843 = vrcp.pop %v769
        %v844 = vmul.f32 %v840, %v843
        %845 = vrot.lane.b32.xlu0 %v683, 120
        %v846 = vpop.permute.xlu0 %845
        %847 = vrot.lane.b32.xlu0 %v681, 120
        %v848 = vpop.permute.xlu0 %847
        %v849 = vsel %vm684, %v846, 0
        %v851 = vsel %vm684, %v848, 0
        %853 = vmatprep.subr.mxu0 0.0
        %854 = vmatpush1.xpose.msra.mxu0 0.0
        %855 = vmatprep.subr.mxu0 0.0
        %856 = vmatpush1.xpose.msra.mxu0 0.0
        %857 = vmatprep.subr.mxu0 0.0
        %858 = vmatpush1.xpose.msra.mxu0 0.0
        %859 = vmatprep.subr.mxu0 0.0
        %860 = vmatpush1.xpose.msra.mxu0 0.0
        %861 = vmatprep.subr.mxu0 0.0
        %862 = vmatpush1.xpose.msra.mxu0 0.0
        %863 = vmatprep.subr.mxu0 0.0
        %864 = vmatpush1.xpose.msra.mxu0 0.0
        %865 = vmatprep.subr.mxu0 0.0
        %866 = vmatpush1.xpose.msra.mxu0 0.0
        %867 = vmatprep.subr.mxu0 0.0
        %868 = vmatpush1.xpose.msra.mxu0 0.0
        %869 = vmatprep.subr.mxu0 0.0
        %870 = vmatpush1.xpose.msra.mxu0 0.0
        %871 = vmatprep.subr.mxu0 0.0
        %872 = vmatpush1.xpose.msra.mxu0 0.0
        %873 = vmatprep.subr.mxu0 0.0
        %874 = vmatpush1.xpose.msra.mxu0 0.0
        %875 = vmatprep.subr.mxu0 0.0
        %876 = vmatpush1.xpose.msra.mxu0 0.0
        %877 = vmatprep.subr.mxu0 0.0
        %878 = vmatpush1.xpose.msra.mxu0 0.0
        %879 = vmatprep.subr.mxu0 0.0
        %880 = vmatpush1.xpose.msra.mxu0 0.0
        %881 = vmatprep.subr.mxu0 0.0
        %882 = vmatpush1.xpose.msra.mxu0 0.0
        %883 = vmatprep.subr.mxu0 0.0
        %884 = vmatpush1.xpose.msra.mxu0 %v851
        %885 = vmatprep.subr.mxu0 0.0
        %886 = vmatpush2.xpose.msra.mxu0 0.0
        %887 = vmatprep.subr.mxu0 0.0
        %888 = vmatpush2.xpose.msra.mxu0 0.0
        %889 = vmatprep.subr.mxu0 0.0
        %890 = vmatpush2.xpose.msra.mxu0 0.0
        %891 = vmatprep.subr.mxu0 0.0
        %892 = vmatpush2.xpose.msra.mxu0 0.0
        %893 = vmatprep.subr.mxu0 0.0
        %894 = vmatpush2.xpose.msra.mxu0 0.0
        %895 = vmatprep.subr.mxu0 0.0
        %896 = vmatpush2.xpose.msra.mxu0 0.0
        %897 = vmatprep.subr.mxu0 0.0
        %898 = vmatpush2.xpose.msra.mxu0 0.0
        %899 = vmatprep.subr.mxu0 0.0
        %900 = vmatpush2.xpose.msra.mxu0 0.0
        %901 = vmatprep.subr.mxu0 0.0
        %902 = vmatpush2.xpose.msra.mxu0 0.0
        %903 = vmatprep.subr.mxu0 0.0
        %904 = vmatpush2.xpose.msra.mxu0 0.0
        %905 = vmatprep.subr.mxu0 0.0
        %906 = vmatpush2.xpose.msra.mxu0 0.0
        %907 = vmatprep.subr.mxu0 0.0
        %908 = vmatpush2.xpose.msra.mxu0 0.0
        %909 = vmatprep.subr.mxu0 0.0
        %910 = vmatpush2.xpose.msra.mxu0 0.0
        %911 = vmatprep.subr.mxu0 0.0
        %912 = vmatpush2.xpose.msra.mxu0 0.0
        %913 = vmatprep.subr.mxu0 0.0
        %914 = vmatpush2.xpose.msra.mxu0 0.0
        %915 = vmatprep.subr.mxu0 0.0
        %916 = vmatpush2.xpose.msra.mxu0 0.0
        %917 = vmatprep.mubr.f32.mxu0 0.0
        %918 = vmatmul.mubr.f32.gmra.mxu0 %v849
        %v919 = vpop.f32.mrf.mxu0
        %v920 = vadd.f32 0.0, %v919
        %v921 = vpop.f32.mrf.mxu0
        %922 = vdwg.mxu0
        %v923 = vsel %vm684, %v920, -inf
        %924 = vmax.xlane.f32.xlu0 %v923
        %v925 = vpop.xlane.xlu0 %924
        %v926 = vsub.f32 %v920, %v925
        %v927 = vmul.f32 %v926, 1.442695
        %v928 = vpow.pop %v927
        %v929 = vsel %vm684, %v928, 0.0
        %930 = vadd.xlane.f32.xlu0 %v929
        %v931 = vpop.xlane.xlu0 %930
        %933 = vrot.lane.b32.xlu0 %v682, 120
        %v934 = vpop.permute.xlu0 %933
        %v937 = vsel %vm684, %v928, 0
        %939 = vmatprep.subr.mxu0 0.0
        %940 = vmatpush1.msra.mxu0 0.0
        %941 = vmatprep.subr.mxu0 0.0
        %942 = vmatpush1.msra.mxu0 0.0
        %943 = vmatprep.subr.mxu0 0.0
        %944 = vmatpush1.msra.mxu0 0.0
        %945 = vmatprep.subr.mxu0 0.0
        %946 = vmatpush1.msra.mxu0 0.0
        %947 = vmatprep.subr.mxu0 0.0
        %948 = vmatpush1.msra.mxu0 0.0
        %949 = vmatprep.subr.mxu0 0.0
        %950 = vmatpush1.msra.mxu0 0.0
        %951 = vmatprep.subr.mxu0 0.0
        %952 = vmatpush1.msra.mxu0 0.0
        %953 = vmatprep.subr.mxu0 0.0
        %954 = vmatpush1.msra.mxu0 0.0
        %955 = vmatprep.subr.mxu0 0.0
        %956 = vmatpush1.msra.mxu0 0.0
        %957 = vmatprep.subr.mxu0 0.0
        %958 = vmatpush1.msra.mxu0 0.0
        %959 = vmatprep.subr.mxu0 0.0
        %960 = vmatpush1.msra.mxu0 0.0
        %961 = vmatprep.subr.mxu0 0.0
        %962 = vmatpush1.msra.mxu0 0.0
        %963 = vmatprep.subr.mxu0 0.0
        %964 = vmatpush1.msra.mxu0 0.0
        %965 = vmatprep.subr.mxu0 0.0
        %966 = vmatpush1.msra.mxu0 0.0
        %967 = vmatprep.subr.mxu0 0.0
        %968 = vmatpush1.msra.mxu0 0.0
        %969 = vmatprep.subr.mxu0 0.0
        %970 = vmatpush1.msra.mxu0 %v934
        %971 = vmatprep.subr.mxu0 0.0
        %972 = vmatpush2.msra.mxu0 0.0
        %973 = vmatprep.subr.mxu0 0.0
        %974 = vmatpush2.msra.mxu0 0.0
        %975 = vmatprep.subr.mxu0 0.0
        %976 = vmatpush2.msra.mxu0 0.0
        %977 = vmatprep.subr.mxu0 0.0
        %978 = vmatpush2.msra.mxu0 0.0
        %979 = vmatprep.subr.mxu0 0.0
        %980 = vmatpush2.msra.mxu0 0.0
        %981 = vmatprep.subr.mxu0 0.0
        %982 = vmatpush2.msra.mxu0 0.0
        %983 = vmatprep.subr.mxu0 0.0
        %984 = vmatpush2.msra.mxu0 0.0
        %985 = vmatprep.subr.mxu0 0.0
        %986 = vmatpush2.msra.mxu0 0.0
        %987 = vmatprep.subr.mxu0 0.0
        %988 = vmatpush2.msra.mxu0 0.0
        %989 = vmatprep.subr.mxu0 0.0
        %990 = vmatpush2.msra.mxu0 0.0
        %991 = vmatprep.subr.mxu0 0.0
        %992 = vmatpush2.msra.mxu0 0.0
        %993 = vmatprep.subr.mxu0 0.0
        %994 = vmatpush2.msra.mxu0 0.0
        %995 = vmatprep.subr.mxu0 0.0
        %996 = vmatpush2.msra.mxu0 0.0
        %997 = vmatprep.subr.mxu0 0.0
        %998 = vmatpush2.msra.mxu0 0.0
        %999 = vmatprep.subr.mxu0 0.0
        %1000 = vmatpush2.msra.mxu0 0.0
        %1001 = vmatprep.subr.mxu0 0.0
        %1002 = vmatpush2.msra.mxu0 0.0
        %1003 = vmatprep.mubr.f32.mxu0 0.0
        %1004 = vmatmul.mubr.f32.gmra.mxu0 %v937
        %v1005 = vpop.f32.mrf.mxu0
        %v1006 = vadd.f32 0.0, %v1005
        %v1007 = vpop.f32.mrf.mxu0
        %1008 = vdwg.mxu0
        %v1009 = vrcp.pop %v931
        %v1010 = vmul.f32 %v1006, %v1009
        %1011 = vrot.lane.b32.xlu0 %v683, 112
        %v1012 = vpop.permute.xlu0 %1011
        %1013 = vrot.lane.b32.xlu0 %v681, 112
        %v1014 = vpop.permute.xlu0 %1013
        %v1015 = vsel %vm684, %v1012, 0
        %v1017 = vsel %vm684, %v1014, 0
        %1019 = vmatprep.subr.mxu0 0.0
        %1020 = vmatpush1.xpose.msra.mxu0 0.0
        %1021 = vmatprep.subr.mxu0 0.0
        %1022 = vmatpush1.xpose.msra.mxu0 0.0
        %1023 = vmatprep.subr.mxu0 0.0
        %1024 = vmatpush1.xpose.msra.mxu0 0.0
        %1025 = vmatprep.subr.mxu0 0.0
        %1026 = vmatpush1.xpose.msra.mxu0 0.0
        %1027 = vmatprep.subr.mxu0 0.0
        %1028 = vmatpush1.xpose.msra.mxu0 0.0
        %1029 = vmatprep.subr.mxu0 0.0
        %1030 = vmatpush1.xpose.msra.mxu0 0.0
        %1031 = vmatprep.subr.mxu0 0.0
        %1032 = vmatpush1.xpose.msra.mxu0 0.0
        %1033 = vmatprep.subr.mxu0 0.0
        %1034 = vmatpush1.xpose.msra.mxu0 0.0
        %1035 = vmatprep.subr.mxu0 0.0
        %1036 = vmatpush1.xpose.msra.mxu0 0.0
        %1037 = vmatprep.subr.mxu0 0.0
        %1038 = vmatpush1.xpose.msra.mxu0 0.0
        %1039 = vmatprep.subr.mxu0 0.0
        %1040 = vmatpush1.xpose.msra.mxu0 0.0
        %1041 = vmatprep.subr.mxu0 0.0
        %1042 = vmatpush1.xpose.msra.mxu0 0.0
        %1043 = vmatprep.subr.mxu0 0.0
        %1044 = vmatpush1.xpose.msra.mxu0 0.0
        %1045 = vmatprep.subr.mxu0 0.0
        %1046 = vmatpush1.xpose.msra.mxu0 0.0
        %1047 = vmatprep.subr.mxu0 0.0
        %1048 = vmatpush1.xpose.msra.mxu0 0.0
        %1049 = vmatprep.subr.mxu0 0.0
        %1050 = vmatpush1.xpose.msra.mxu0 %v1017
        %1051 = vmatprep.subr.mxu0 0.0
        %1052 = vmatpush2.xpose.msra.mxu0 0.0
        %1053 = vmatprep.subr.mxu0 0.0
        %1054 = vmatpush2.xpose.msra.mxu0 0.0
        %1055 = vmatprep.subr.mxu0 0.0
        %1056 = vmatpush2.xpose.msra.mxu0 0.0
        %1057 = vmatprep.subr.mxu0 0.0
        %1058 = vmatpush2.xpose.msra.mxu0 0.0
        %1059 = vmatprep.subr.mxu0 0.0
        %1060 = vmatpush2.xpose.msra.mxu0 0.0
        %1061 = vmatprep.subr.mxu0 0.0
        %1062 = vmatpush2.xpose.msra.mxu0 0.0
        %1063 = vmatprep.subr.mxu0 0.0
        %1064 = vmatpush2.xpose.msra.mxu0 0.0
        %1065 = vmatprep.subr.mxu0 0.0
        %1066 = vmatpush2.xpose.msra.mxu0 0.0
        %1067 = vmatprep.subr.mxu0 0.0
        %1068 = vmatpush2.xpose.msra.mxu0 0.0
        %1069 = vmatprep.subr.mxu0 0.0
        %1070 = vmatpush2.xpose.msra.mxu0 0.0
        %1071 = vmatprep.subr.mxu0 0.0
        %1072 = vmatpush2.xpose.msra.mxu0 0.0
        %1073 = vmatprep.subr.mxu0 0.0
        %1074 = vmatpush2.xpose.msra.mxu0 0.0
        %1075 = vmatprep.subr.mxu0 0.0
        %1076 = vmatpush2.xpose.msra.mxu0 0.0
        %1077 = vmatprep.subr.mxu0 0.0
        %1078 = vmatpush2.xpose.msra.mxu0 0.0
        %1079 = vmatprep.subr.mxu0 0.0
        %1080 = vmatpush2.xpose.msra.mxu0 0.0
        %1081 = vmatprep.subr.mxu0 0.0
        %1082 = vmatpush2.xpose.msra.mxu0 0.0
        %1083 = vmatprep.mubr.f32.mxu0 0.0
        %1084 = vmatmul.mubr.f32.gmra.mxu0 %v1015
        %v1085 = vpop.f32.mrf.mxu0
        %v1086 = vadd.f32 0.0, %v1085
        %v1087 = vpop.f32.mrf.mxu0
        %1088 = vdwg.mxu0
        %v1089 = vsel %vm684, %v1086, -inf
        %1090 = vmax.xlane.f32.xlu0 %v1089
        %v1091 = vpop.xlane.xlu0 %1090
        %v1092 = vsub.f32 %v1086, %v1091
        %v1093 = vmul.f32 %v1092, 1.442695
        %v1094 = vpow.pop %v1093
        %v1095 = vsel %vm684, %v1094, 0.0
        %1096 = vadd.xlane.f32.xlu0 %v1095
        %v1097 = vpop.xlane.xlu0 %1096
        %1098 = vrot.lane.b32.xlu0 %v682, 112
        %v1099 = vpop.permute.xlu0 %1098
        %v1102 = vsel %vm684, %v1094, 0
        %1104 = vmatprep.subr.mxu0 0.0
        %1105 = vmatpush1.msra.mxu0 0.0
        %1106 = vmatprep.subr.mxu0 0.0
        %1107 = vmatpush1.msra.mxu0 0.0
        %1108 = vmatprep.subr.mxu0 0.0
        %1109 = vmatpush1.msra.mxu0 0.0
        %1110 = vmatprep.subr.mxu0 0.0
        %1111 = vmatpush1.msra.mxu0 0.0
        %1112 = vmatprep.subr.mxu0 0.0
        %1113 = vmatpush1.msra.mxu0 0.0
        %1114 = vmatprep.subr.mxu0 0.0
        %1115 = vmatpush1.msra.mxu0 0.0
        %1116 = vmatprep.subr.mxu0 0.0
        %1117 = vmatpush1.msra.mxu0 0.0
        %1118 = vmatprep.subr.mxu0 0.0
        %1119 = vmatpush1.msra.mxu0 0.0
        %1120 = vmatprep.subr.mxu0 0.0
        %1121 = vmatpush1.msra.mxu0 0.0
        %1122 = vmatprep.subr.mxu0 0.0
        %1123 = vmatpush1.msra.mxu0 0.0
        %1124 = vmatprep.subr.mxu0 0.0
        %1125 = vmatpush1.msra.mxu0 0.0
        %1126 = vmatprep.subr.mxu0 0.0
        %1127 = vmatpush1.msra.mxu0 0.0
        %1128 = vmatprep.subr.mxu0 0.0
        %1129 = vmatpush1.msra.mxu0 0.0
        %1130 = vmatprep.subr.mxu0 0.0
        %1131 = vmatpush1.msra.mxu0 0.0
        %1132 = vmatprep.subr.mxu0 0.0
        %1133 = vmatpush1.msra.mxu0 0.0
        %1134 = vmatprep.subr.mxu0 0.0
        %1135 = vmatpush1.msra.mxu0 %v1099
        %1136 = vmatprep.subr.mxu0 0.0
        %1137 = vmatpush2.msra.mxu0 0.0
        %1138 = vmatprep.subr.mxu0 0.0
        %1139 = vmatpush2.msra.mxu0 0.0
        %1140 = vmatprep.subr.mxu0 0.0
        %1141 = vmatpush2.msra.mxu0 0.0
        %1142 = vmatprep.subr.mxu0 0.0
        %1143 = vmatpush2.msra.mxu0 0.0
        %1144 = vmatprep.subr.mxu0 0.0
        %1145 = vmatpush2.msra.mxu0 0.0
        %1146 = vmatprep.subr.mxu0 0.0
        %1147 = vmatpush2.msra.mxu0 0.0
        %1148 = vmatprep.subr.mxu0 0.0
        %1149 = vmatpush2.msra.mxu0 0.0
        %1150 = vmatprep.subr.mxu0 0.0
        %1151 = vmatpush2.msra.mxu0 0.0
        %1152 = vmatprep.subr.mxu0 0.0
        %1153 = vmatpush2.msra.mxu0 0.0
        %1154 = vmatprep.subr.mxu0 0.0
        %1155 = vmatpush2.msra.mxu0 0.0
        %1156 = vmatprep.subr.mxu0 0.0
        %1157 = vmatpush2.msra.mxu0 0.0
        %1158 = vmatprep.subr.mxu0 0.0
        %1159 = vmatpush2.msra.mxu0 0.0
        %1160 = vmatprep.subr.mxu0 0.0
        %1161 = vmatpush2.msra.mxu0 0.0
        %1162 = vmatprep.subr.mxu0 0.0
        %1163 = vmatpush2.msra.mxu0 0.0
        %1164 = vmatprep.subr.mxu0 0.0
        %1165 = vmatpush2.msra.mxu0 0.0
        %1166 = vmatprep.subr.mxu0 0.0
        %1167 = vmatpush2.msra.mxu0 0.0
        %1168 = vmatprep.mubr.f32.mxu0 0.0
        %1169 = vmatmul.mubr.f32.gmra.mxu0 %v1102
        %v1170 = vpop.f32.mrf.mxu0
        %v1171 = vadd.f32 0.0, %v1170
        %v1172 = vpop.f32.mrf.mxu0
        %1173 = vdwg.mxu0
        %v1174 = vrcp.pop %v1097
        %v1175 = vmul.f32 %v1171, %v1174
        %1176 = vrot.lane.b32.xlu0 %v683, 104
        %v1177 = vpop.permute.xlu0 %1176
        %1178 = vrot.lane.b32.xlu0 %v681, 104
        %v1179 = vpop.permute.xlu0 %1178
        %v1180 = vsel %vm684, %v1177, 0
        %v1182 = vsel %vm684, %v1179, 0
        %1184 = vmatprep.subr.mxu0 0.0
        %1185 = vmatpush1.xpose.msra.mxu0 0.0
        %1186 = vmatprep.subr.mxu0 0.0
        %1187 = vmatpush1.xpose.msra.mxu0 0.0
        %1188 = vmatprep.subr.mxu0 0.0
        %1189 = vmatpush1.xpose.msra.mxu0 0.0
        %1190 = vmatprep.subr.mxu0 0.0
        %1191 = vmatpush1.xpose.msra.mxu0 0.0
        %1192 = vmatprep.subr.mxu0 0.0
        %1193 = vmatpush1.xpose.msra.mxu0 0.0
        %1194 = vmatprep.subr.mxu0 0.0
        %1195 = vmatpush1.xpose.msra.mxu0 0.0
        %1196 = vmatprep.subr.mxu0 0.0
        %1197 = vmatpush1.xpose.msra.mxu0 0.0
        %1198 = vmatprep.subr.mxu0 0.0
        %1199 = vmatpush1.xpose.msra.mxu0 0.0
        %1200 = vmatprep.subr.mxu0 0.0
        %1201 = vmatpush1.xpose.msra.mxu0 0.0
        %1202 = vmatprep.subr.mxu0 0.0
        %1203 = vmatpush1.xpose.msra.mxu0 0.0
        %1204 = vmatprep.subr.mxu0 0.0
        %1205 = vmatpush1.xpose.msra.mxu0 0.0
        %1206 = vmatprep.subr.mxu0 0.0
        %1207 = vmatpush1.xpose.msra.mxu0 0.0
        %1208 = vmatprep.subr.mxu0 0.0
        %1209 = vmatpush1.xpose.msra.mxu0 0.0
        %1210 = vmatprep.subr.mxu0 0.0
        %1211 = vmatpush1.xpose.msra.mxu0 0.0
        %1212 = vmatprep.subr.mxu0 0.0
        %1213 = vmatpush1.xpose.msra.mxu0 0.0
        %1214 = vmatprep.subr.mxu0 0.0
        %1215 = vmatpush1.xpose.msra.mxu0 %v1182
        %1216 = vmatprep.subr.mxu0 0.0
        %1217 = vmatpush2.xpose.msra.mxu0 0.0
        %1218 = vmatprep.subr.mxu0 0.0
        %1219 = vmatpush2.xpose.msra.mxu0 0.0
        %1220 = vmatprep.subr.mxu0 0.0
        %1221 = vmatpush2.xpose.msra.mxu0 0.0
        %1222 = vmatprep.subr.mxu0 0.0
        %1223 = vmatpush2.xpose.msra.mxu0 0.0
        %1224 = vmatprep.subr.mxu0 0.0
        %1225 = vmatpush2.xpose.msra.mxu0 0.0
        %1226 = vmatprep.subr.mxu0 0.0
        %1227 = vmatpush2.xpose.msra.mxu0 0.0
        %1228 = vmatprep.subr.mxu0 0.0
        %1229 = vmatpush2.xpose.msra.mxu0 0.0
        %1230 = vmatprep.subr.mxu0 0.0
        %1231 = vmatpush2.xpose.msra.mxu0 0.0
        %1232 = vmatprep.subr.mxu0 0.0
        %1233 = vmatpush2.xpose.msra.mxu0 0.0
        %1234 = vmatprep.subr.mxu0 0.0
        %1235 = vmatpush2.xpose.msra.mxu0 0.0
        %1236 = vmatprep.subr.mxu0 0.0
        %1237 = vmatpush2.xpose.msra.mxu0 0.0
        %1238 = vmatprep.subr.mxu0 0.0
        %1239 = vmatpush2.xpose.msra.mxu0 0.0
        %1240 = vmatprep.subr.mxu0 0.0
        %1241 = vmatpush2.xpose.msra.mxu0 0.0
        %1242 = vmatprep.subr.mxu0 0.0
        %1243 = vmatpush2.xpose.msra.mxu0 0.0
        %1244 = vmatprep.subr.mxu0 0.0
        %1245 = vmatpush2.xpose.msra.mxu0 0.0
        %1246 = vmatprep.subr.mxu0 0.0
        %1247 = vmatpush2.xpose.msra.mxu0 0.0
        %1248 = vmatprep.mubr.f32.mxu0 0.0
        %1249 = vmatmul.mubr.f32.gmra.mxu0 %v1180
        %v1250 = vpop.f32.mrf.mxu0
        %v1251 = vadd.f32 0.0, %v1250
        %v1252 = vpop.f32.mrf.mxu0
        %1253 = vdwg.mxu0
        %v1254 = vsel %vm684, %v1251, -inf
        %1255 = vmax.xlane.f32.xlu0 %v1254
        %v1256 = vpop.xlane.xlu0 %1255
        %v1257 = vsub.f32 %v1251, %v1256
        %v1258 = vmul.f32 %v1257, 1.442695
        %v1259 = vpow.pop %v1258
        %v1260 = vsel %vm684, %v1259, 0.0
        %1261 = vadd.xlane.f32.xlu0 %v1260
        %v1262 = vpop.xlane.xlu0 %1261
        %1263 = vrot.lane.b32.xlu0 %v682, 104
        %v1264 = vpop.permute.xlu0 %1263
        %v1267 = vsel %vm684, %v1259, 0
        %1269 = vmatprep.subr.mxu0 0.0
        %1270 = vmatpush1.msra.mxu0 0.0
        %1271 = vmatprep.subr.mxu0 0.0
        %1272 = vmatpush1.msra.mxu0 0.0
        %1273 = vmatprep.subr.mxu0 0.0
        %1274 = vmatpush1.msra.mxu0 0.0
        %1275 = vmatprep.subr.mxu0 0.0
        %1276 = vmatpush1.msra.mxu0 0.0
        %1277 = vmatprep.subr.mxu0 0.0
        %1278 = vmatpush1.msra.mxu0 0.0
        %1279 = vmatprep.subr.mxu0 0.0
        %1280 = vmatpush1.msra.mxu0 0.0
        %1281 = vmatprep.subr.mxu0 0.0
        %1282 = vmatpush1.msra.mxu0 0.0
        %1283 = vmatprep.subr.mxu0 0.0
        %1284 = vmatpush1.msra.mxu0 0.0
        %1285 = vmatprep.subr.mxu0 0.0
        %1286 = vmatpush1.msra.mxu0 0.0
        %1287 = vmatprep.subr.mxu0 0.0
        %1288 = vmatpush1.msra.mxu0 0.0
        %1289 = vmatprep.subr.mxu0 0.0
        %1290 = vmatpush1.msra.mxu0 0.0
        %1291 = vmatprep.subr.mxu0 0.0
        %1292 = vmatpush1.msra.mxu0 0.0
        %1293 = vmatprep.subr.mxu0 0.0
        %1294 = vmatpush1.msra.mxu0 0.0
        %1295 = vmatprep.subr.mxu0 0.0
        %1296 = vmatpush1.msra.mxu0 0.0
        %1297 = vmatprep.subr.mxu0 0.0
        %1298 = vmatpush1.msra.mxu0 0.0
        %1299 = vmatprep.subr.mxu0 0.0
        %1300 = vmatpush1.msra.mxu0 %v1264
        %1301 = vmatprep.subr.mxu0 0.0
        %1302 = vmatpush2.msra.mxu0 0.0
        %1303 = vmatprep.subr.mxu0 0.0
        %1304 = vmatpush2.msra.mxu0 0.0
        %1305 = vmatprep.subr.mxu0 0.0
        %1306 = vmatpush2.msra.mxu0 0.0
        %1307 = vmatprep.subr.mxu0 0.0
        %1308 = vmatpush2.msra.mxu0 0.0
        %1309 = vmatprep.subr.mxu0 0.0
        %1310 = vmatpush2.msra.mxu0 0.0
        %1311 = vmatprep.subr.mxu0 0.0
        %1312 = vmatpush2.msra.mxu0 0.0
        %1313 = vmatprep.subr.mxu0 0.0
        %1314 = vmatpush2.msra.mxu0 0.0
        %1315 = vmatprep.subr.mxu0 0.0
        %1316 = vmatpush2.msra.mxu0 0.0
        %1317 = vmatprep.subr.mxu0 0.0
        %1318 = vmatpush2.msra.mxu0 0.0
        %1319 = vmatprep.subr.mxu0 0.0
        %1320 = vmatpush2.msra.mxu0 0.0
        %1321 = vmatprep.subr.mxu0 0.0
        %1322 = vmatpush2.msra.mxu0 0.0
        %1323 = vmatprep.subr.mxu0 0.0
        %1324 = vmatpush2.msra.mxu0 0.0
        %1325 = vmatprep.subr.mxu0 0.0
        %1326 = vmatpush2.msra.mxu0 0.0
        %1327 = vmatprep.subr.mxu0 0.0
        %1328 = vmatpush2.msra.mxu0 0.0
        %1329 = vmatprep.subr.mxu0 0.0
        %1330 = vmatpush2.msra.mxu0 0.0
        %1331 = vmatprep.subr.mxu0 0.0
        %1332 = vmatpush2.msra.mxu0 0.0
        %1333 = vmatprep.mubr.f32.mxu0 0.0
        %1334 = vmatmul.mubr.f32.gmra.mxu0 %v1267
        %v1335 = vpop.f32.mrf.mxu0
        %v1336 = vadd.f32 0.0, %v1335
        %v1337 = vpop.f32.mrf.mxu0
        %1338 = vdwg.mxu0
        %v1339 = vrcp.pop %v1262
        %v1340 = vmul.f32 %v1336, %v1339
        %1342 = vrot.lane.b32.xlu0 %v1010, 8
        %v1343 = vpop.permute.xlu0 %1342
        %1346 = vrot.lane.b32.xlu0 %v1175, 16
        %v1347 = vpop.permute.xlu0 %1346
        %1350 = vrot.lane.b32.xlu0 %v1340, 24
        %v1351 = vpop.permute.xlu0 %1350
        %v1353 = vsel %vm684, %v844, %v1343
        %vm1354 = vcmask 130048
        %v1355 = vsel %vm1354, %v1353, %v1347
        %vm1356 = vcmask 195584
        %v1357 = vsel %vm1356, %v1355, %v1351
        %vm1358 = vcmask 261120
        %1359 = vst.msk [vmem:[#allocation3] sm:$0xff] %vm1358, %v1357
        %v1360 = vld [vmem:[#allocation3] sm:$0xff]
        %v1361 = vld [vmem:[#allocation12] sm:$0xff]
        %v1362 = vld [vmem:[#allocation12 + $0x8] sm:$0xff]
        %v1363 = vld [vmem:[#allocation12 + $0x10] sm:$0xff]
        %v1364 = vld [vmem:[#allocation12 + $0x18] sm:$0xff]
        %v1365 = vld [vmem:[#allocation12 + $0x20] sm:$0xff]
        %v1366 = vld [vmem:[#allocation12 + $0x28] sm:$0xff]
        %v1367 = vld [vmem:[#allocation12 + $0x30] sm:$0xff]
        %v1368 = vld [vmem:[#allocation12 + $0x38] sm:$0xff]
        %v1369 = vld [vmem:[#allocation12 + $0x40] sm:$0xff]
        %v1370 = vld [vmem:[#allocation12 + $0x48] sm:$0xff]
        %v1371 = vld [vmem:[#allocation12 + $0x50] sm:$0xff]
        %v1372 = vld [vmem:[#allocation12 + $0x58] sm:$0xff]
        %v1373 = vld [vmem:[#allocation12 + $0x60] sm:$0xff]
        %v1374 = vld [vmem:[#allocation12 + $0x68] sm:$0xff]
        %v1375 = vld [vmem:[#allocation12 + $0x70] sm:$0xff]
        %v1376 = vld [vmem:[#allocation12 + $0x78] sm:$0xff]
        %v1377 = vld [vmem:[%s6] sm:$0x1]
        %v1379 = vlaneseq
        %v1380 = vshrl.u32 %v1379, 7
        %v1381 = vsub.s32 0, %v1380
        %v1382 = vrot.slane %v1377, %v1381
        %1384 = vmatprep.subr.mxu0 0.0
        %1385 = vmatpush1.msra.mxu0 %v1376
        %1386 = vmatprep.subr.mxu0 0.0
        %1387 = vmatpush1.msra.mxu0 %v1375
        %1388 = vmatprep.subr.mxu0 0.0
        %1389 = vmatpush1.msra.mxu0 %v1374
        %1390 = vmatprep.subr.mxu0 0.0
        %1391 = vmatpush1.msra.mxu0 %v1373
        %1392 = vmatprep.subr.mxu0 0.0
        %1393 = vmatpush1.msra.mxu0 %v1372
        %1394 = vmatprep.subr.mxu0 0.0
        %1395 = vmatpush1.msra.mxu0 %v1371
        %1396 = vmatprep.subr.mxu0 0.0
        %1397 = vmatpush1.msra.mxu0 %v1370
        %1398 = vmatprep.subr.mxu0 0.0
        %1399 = vmatpush1.msra.mxu0 %v1369
        %1400 = vmatprep.subr.mxu0 0.0
        %1401 = vmatpush1.msra.mxu0 %v1368
        %1402 = vmatprep.subr.mxu0 0.0
        %1403 = vmatpush1.msra.mxu0 %v1367
        %1404 = vmatprep.subr.mxu0 0.0
        %1405 = vmatpush1.msra.mxu0 %v1366
        %1406 = vmatprep.subr.mxu0 0.0
        %1407 = vmatpush1.msra.mxu0 %v1365
        %1408 = vmatprep.subr.mxu0 0.0
        %1409 = vmatpush1.msra.mxu0 %v1364
        %1410 = vmatprep.subr.mxu0 0.0
        %1411 = vmatpush1.msra.mxu0 %v1363
        %1412 = vmatprep.subr.mxu0 0.0
        %1413 = vmatpush1.msra.mxu0 %v1362
        %1414 = vmatprep.subr.mxu0 0.0
        %1415 = vmatpush1.msra.mxu0 %v1361
        %1416 = vmatprep.subr.mxu0 0.0
        %1417 = vmatpush2.msra.mxu0 0.0
        %1418 = vmatprep.subr.mxu0 0.0
        %1419 = vmatpush2.msra.mxu0 0.0
        %1420 = vmatprep.subr.mxu0 0.0
        %1421 = vmatpush2.msra.mxu0 0.0
        %1422 = vmatprep.subr.mxu0 0.0
        %1423 = vmatpush2.msra.mxu0 0.0
        %1424 = vmatprep.subr.mxu0 0.0
        %1425 = vmatpush2.msra.mxu0 0.0
        %1426 = vmatprep.subr.mxu0 0.0
        %1427 = vmatpush2.msra.mxu0 0.0
        %1428 = vmatprep.subr.mxu0 0.0
        %1429 = vmatpush2.msra.mxu0 0.0
        %1430 = vmatprep.subr.mxu0 0.0
        %1431 = vmatpush2.msra.mxu0 0.0
        %1432 = vmatprep.subr.mxu0 0.0
        %1433 = vmatpush2.msra.mxu0 0.0
        %1434 = vmatprep.subr.mxu0 0.0
        %1435 = vmatpush2.msra.mxu0 0.0
        %1436 = vmatprep.subr.mxu0 0.0
        %1437 = vmatpush2.msra.mxu0 0.0
        %1438 = vmatprep.subr.mxu0 0.0
        %1439 = vmatpush2.msra.mxu0 0.0
        %1440 = vmatprep.subr.mxu0 0.0
        %1441 = vmatpush2.msra.mxu0 0.0
        %1442 = vmatprep.subr.mxu0 0.0
        %1443 = vmatpush2.msra.mxu0 0.0
        %1444 = vmatprep.subr.mxu0 0.0
        %1445 = vmatpush2.msra.mxu0 0.0
        %1446 = vmatprep.subr.mxu0 0.0
        %1447 = vmatpush2.msra.mxu0 0.0
        %1448 = vmatprep.mubr.f32.mxu0 0.0
        %1449 = vmatmul.mubr.f32.gmra.mxu0 %v1360
        %v1450 = vpop.f32.mrf.mxu0
        %v1451 = vadd.f32 %v1382, %v1450
        %v1452 = vpop.f32.mrf.mxu0
        %1453 = vdwg.mxu0
        %1454 = vst [vmem:[%s393] sm:$0xff] %v1451
        %s1455 = sand.u32 %s198, 1
        %s1456 = scalar_lea.sflag [#allocation6], %s1455
        %s1457 = sand.u32 %s198, 1
        %s1458 = smul.addr %s1457, 8
        %s1459 = scalar_lea.vmem [#allocation13], %s1458
        // Predicated region
        $region69: #{tpu_custom_call.1} parent=47 // pred_check
          %p1460 = pneg %p208
        $region70: #{tpu_custom_call.1} parent=47 // pred_check_branch
          %1462 = sbr.rel (%p1460) target = $region72
        $region71: #{tpu_custom_call.1} parent=47 // pred_region
          %s1464 = ssub.s32 128, 128
          %1465 = vsyncadd %s1456, %s1464
          %s1466 = smul.addr %s28, 128
          %s1467 = scalar_lea.hbm %s7, %s1466
          %s1469 = sshll.u32 %s1459, 4
          %s1470 = int_to_ptr.vmem [resolvable:$true] %s1469
          %1472 = dma.vmem_to_hbm [thread:$0]  %s1470, 128, %s1467, %s1456
        $region72: #{tpu_custom_call.1} parent=47 // pred_fallthru
          _
      $region48: #{tpu_custom_call.1} parent=5 // pred_fallthru
        _
      %p1473 = scmp.le.s32.totalorder 2, %s23
      // Predicated region
      $region73: #{tpu_custom_call.1} parent=5 // pred_check
        %p1474 = pneg %p1473
      $region74: #{tpu_custom_call.1} parent=5 // pred_check_branch
        %1476 = sbr.rel (%p1474) target = $region76
      $region75: #{tpu_custom_call.1} parent=5 // pred_region
        %s1477 = ssub.s32 %s23, 2
        // Predicated region
        $region77: #{tpu_custom_call.1} parent=75 // pred_check
          %p1478 = pneg %p214
        $region78: #{tpu_custom_call.1} parent=75 // pred_check_branch
          %1480 = sbr.rel (%p1478) target = $region80
        $region79: #{tpu_custom_call.1} parent=75 // pred_region
          %s1481 = sand.u32 %s199, 1
          %s1482 = scalar_lea.sflag [#allocation6], %s1481
          %s1483 = sand.u32 %s199, 1
          %s1484 = smul.addr %s1483, 8
          %s1485 = scalar_lea.vmem [#allocation13], %s1484
          %1486 = dma.done %s1482, 128
        $region80: #{tpu_custom_call.1} parent=75 // pred_fallthru
          _
      $region76: #{tpu_custom_call.1} parent=5 // pred_fallthru
        _
    $region6: #{tpu_custom_call.1} parent=1 // loop_footer
      %s27 = sadd.s32 1, %s23
    $region7: #{tpu_custom_call.1} parent=1 // loop_footer_branch
      %22 = sbr.rel target = $region3
    $region8: #{tpu_custom_call.1} parent=1 // loop_exit
      _
    %1487 = vsyncpa [#allocation5], 1
    %s1488 = scalar_lea.sflag [#allocation5], 1
    %1489 = vsyncpa %s1488, 1
    %1490 = vsyncpa [#allocation8], 1
    %s1491 = scalar_lea.sflag [#allocation8], 1
    %1492 = vsyncpa %s1491, 1
    %1493 = vsyncpa [#allocation11], 1
    %1494 = vsyncpa [#allocation6], 1
    %s1495 = scalar_lea.sflag [#allocation6], 1
    %1496 = vsyncpa %s1495, 1

// kernel: tpu_custom_call.1
$region0: #{tpu_custom_call.1}
  #allocation0 [shape = 'u32[]', space=smem, size = 0x4, offset = 0x4, fixed_abs, tag = 'smem constant byte address 0x4 - core index']
  #allocation1 [shape = 'u32[144,128]{1,0:T(1,128)}', space=vmem, size = 0x12000, scoped, tag = 'internal scratch']
  #allocation2 [shape = 'f32[8,384]{1,0:T(8,128)}', space=vmem, size = 0x3000, scoped, tag = 'scratch operand']
  #allocation3 [shape = 'f32[8,128]{1,0:T(8,128)}', space=vmem, size = 0x1000, scoped, tag = 'scratch operand']
  %s0 = inlined_call_operand.hbm [shape: f32[16,128], index: 0, kind: input, shape index: {}]
  %s1 = inlined_call_operand.hbm [shape: f32[16,128], index: 1, kind: input, shape index: {}]
  %s2 = inlined_call_operand.hbm [shape: f32[16,128], index: 2, kind: input, shape index: {}]
  %s3 = inlined_call_operand.hbm [shape: f32[128,384], index: 3, kind: input, shape index: {}]
  %s4 = inlined_call_operand.vmem [shape: f32[1,384], index: 4, kind: input, shape index: {}]
  %s5 = inlined_call_operand.hbm [shape: f32[128,128], index: 5, kind: input, shape index: {}]
  %s6 = inlined_call_operand.vmem [shape: f32[1,128], index: 6, kind: input, shape index: {}]
  %s7 = inlined_call_operand.hbm [shape: f32[16,128], index: 7, kind: output, shape index: {}]
  %s8 = sld [smem:[#allocation0]]
  $region81: #{tpu_custom_call.1} parent=0
    _
  %s10 = ssub.s32 1, %s8
  %s11 = scalar_select 0, %s10, %s8
  $region1: #{tpu_custom_call.1} parent=0
    #allocation4 [shape = 'u8[8192]{0}', space=vmem, size = 0x2000, scoped, tag = 'input window, operand 0']
    #allocation5 [shape = 's32[2]{0}', space=sflag, size = 0x8, scoped, tag = 'scoped memory for tpu_custom_call.1']
    #allocation6 [shape = 's32[2]{0}', space=sflag, size = 0x8, scoped, tag = 'scoped memory for tpu_custom_call.1']
    #allocation7 [shape = 'u8[8192]{0}', space=vmem, size = 0x2000, scoped, tag = 'input window, operand 1']
    #allocation8 [shape = 's32[2]{0}', space=sflag, size = 0x8, scoped, tag = 'scoped memory for tpu_custom_call.1']
    #allocation9 [shape = 'u8[8192]{0}', space=vmem, size = 0x2000, scoped, tag = 'input window, operand 2']
    #allocation10 [shape = 'u8[196608]{0}', space=vmem, size = 0x30000, scoped, tag = 'input window, operand 3, single buffered']
    #allocation11 [shape = 's32[1]{0}', space=sflag, size = 0x4, scoped, tag = 'scoped memory for tpu_custom_call.1']
    #allocation12 [shape = 'u8[65536]{0}', space=vmem, size = 0x10000, scoped, tag = 'input window, operand 5, single buffered']
    #allocation13 [shape = 'u8[8192]{0}', space=vmem, size = 0x2000, scoped, tag = 'output window, operand 0']
    %12 = vsyncpa [#allocation5], 0
    %s13 = scalar_lea.sflag [#allocation5], 1
    %14 = vsyncpa %s13, 0
    %15 = vsyncpa [#allocation8], 0
    %s16 = scalar_lea.sflag [#allocation8], 1
    %17 = vsyncpa %s16, 0
    %18 = vsyncpa [#allocation11], 0
    %19 = vsyncpa [#allocation6], 0
    %s20 = scalar_lea.sflag [#allocation6], 1
    %21 = vsyncpa %s20, 0
    loop: start=0, step=1, limit=4
    $region2: #{tpu_custom_call.1} parent=1 // loop_pre_header
      _
    $region3: #{tpu_custom_call.1} parent=1 // loop_header
      %s23 = sphi 0, %s27
      %p24 = scmp.ge.s32.totalorder %s23, 4
      %s33 = sphi 0, %s35
      %s36 = sphi 0, %s33
      %s37 = sphi 0, %s36
      %s53 = sphi 0, %s37
      %s59 = sphi 0, %s61
      %s62 = sphi 0, %s59
      %s63 = sphi 0, %s62
      %s79 = sphi 0, %s63
      %s85 = sphi 0, %s87
      %s88 = sphi 0, %s85
      %s89 = sphi 0, %s88
      %s105 = sphi 0, %s89
      %s109 = sphi 0, %s109
      %s111 = sphi 0, %s109
      %s112 = sphi 0, %s111
      %s126 = sphi 0, %s112
      %s130 = sphi 0, %s130
      %s132 = sphi 0, %s130
      %s133 = sphi 0, %s132
      %s147 = sphi 0, %s133
      %s151 = sphi 0, %s151
      %s153 = sphi 0, %s151
      %s154 = sphi 0, %s153
      %s168 = sphi 0, %s154
      %s172 = sphi 0, %s172
      %s174 = sphi 0, %s172
      %s175 = sphi 0, %s174
      %s189 = sphi 0, %s175
      %s195 = sphi 0, %s197
      %s198 = sphi 0, %s195
      %s199 = sphi 0, %s198
      %s215 = sphi 0, %s199
    $region4: #{tpu_custom_call.1} parent=1 // loop_header_branch
      %26 = sbr.rel (%p24) target = $region8
    $region5: #{tpu_custom_call.1} parent=1 // loop_body
      %s28 = ssub.s32 %s23, 1
      %s29 = ssub.s32 %s23, 2
      %s30 = sadd.s32 %s23, 1
      %s31 = ssub.s32 %s23, %s30
      %p32 = scmp.eq.s32.totalorder %s31, 0
      %s34 = sadd.s32 %s33, 1
      %s35 = scalar_select %p32, %s33, %s34
      %p38 = pneg %p32
      %p39 = scmp.eq.s32.totalorder %s23, 1
      %p40 = por %p38, %p39
      %p41 = scmp.ne.s32.totalorder %s33, %s36
      %p42 = scmp.eq.s32.totalorder %s23, 0
      %p43 = por %p41, %p42
      %p44 = scmp.ne.s32.totalorder %s33, %s36
      %p45 = scmp.eq.s32.totalorder %s28, 1
      %p46 = por %p44, %p45
      %p47 = scmp.ne.s32.totalorder %s36, %s37
      %p48 = scmp.eq.s32.totalorder %s28, 0
      %p49 = por %p47, %p48
      %p50 = scmp.ne.s32.totalorder %s36, %s37
      %p51 = scmp.eq.s32.totalorder %s29, 1
      %p52 = por %p50, %p51
      %p54 = scmp.ne.s32.totalorder %s37, %s53
      %p55 = scmp.eq.s32.totalorder %s29, 0
      %p56 = por %p54, %p55
      %s57 = ssub.s32 %s23, %s30
      %p58 = scmp.eq.s32.totalorder %s57, 0
      %s60 = sadd.s32 %s59, 1
      %s61 = scalar_select %p58, %s59, %s60
      %p64 = pneg %p58
      %p65 = scmp.eq.s32.totalorder %s23, 1
      %p66 = por %p64, %p65
      %p67 = scmp.ne.s32.totalorder %s59, %s62
      %p68 = scmp.eq.s32.totalorder %s23, 0
      %p69 = por %p67, %p68
      %p70 = scmp.ne.s32.totalorder %s59, %s62
      %p71 = scmp.eq.s32.totalorder %s28, 1
      %p72 = por %p70, %p71
      %p73 = scmp.ne.s32.totalorder %s62, %s63
      %p74 = scmp.eq.s32.totalorder %s28, 0
      %p75 = por %p73, %p74
      %p76 = scmp.ne.s32.totalorder %s62, %s63
      %p77 = scmp.eq.s32.totalorder %s29, 1
      %p78 = por %p76, %p77
      %p80 = scmp.ne.s32.totalorder %s63, %s79
      %p81 = scmp.eq.s32.totalorder %s29, 0
      %p82 = por %p80, %p81
      %s83 = ssub.s32 %s23, %s30
      %p84 = scmp.eq.s32.totalorder %s83, 0
      %s86 = sadd.s32 %s85, 1
      %s87 = scalar_select %p84, %s85, %s86
      %p90 = pneg %p84
      %p91 = scmp.eq.s32.totalorder %s23, 1
      %p92 = por %p90, %p91
      %p93 = scmp.ne.s32.totalorder %s85, %s88
      %p94 = scmp.eq.s32.totalorder %s23, 0
      %p95 = por %p93, %p94
      %p96 = scmp.ne.s32.totalorder %s85, %s88
      %p97 = scmp.eq.s32.totalorder %s28, 1
      %p98 = por %p96, %p97
      %p99 = scmp.ne.s32.totalorder %s88, %s89
      %p100 = scmp.eq.s32.totalorder %s28, 0
      %p101 = por %p99, %p100
      %p102 = scmp.ne.s32.totalorder %s88, %s89
      %p103 = scmp.eq.s32.totalorder %s29, 1
      %p104 = por %p102, %p103
      %p106 = scmp.ne.s32.totalorder %s89, %s105
      %p107 = scmp.eq.s32.totalorder %s29, 0
      %p108 = por %p106, %p107
      %s110 = sadd.s32 %s109, 1
      %p113 = scmp.eq.s32.totalorder %s23, 1
      %p114 = scmp.ne.s32.totalorder %s109, %s111
      %p115 = scmp.eq.s32.totalorder %s23, 0
      %p116 = por %p114, %p115
      %p117 = scmp.ne.s32.totalorder %s109, %s111
      %p118 = scmp.eq.s32.totalorder %s28, 1
      %p119 = por %p117, %p118
      %p120 = scmp.ne.s32.totalorder %s111, %s112
      %p121 = scmp.eq.s32.totalorder %s28, 0
      %p122 = por %p120, %p121
      %p123 = scmp.ne.s32.totalorder %s111, %s112
      %p124 = scmp.eq.s32.totalorder %s29, 1
      %p125 = por %p123, %p124
      %p127 = scmp.ne.s32.totalorder %s112, %s126
      %p128 = scmp.eq.s32.totalorder %s29, 0
      %p129 = por %p127, %p128
      %s131 = sadd.s32 %s130, 1
      %p134 = scmp.eq.s32.totalorder %s23, 1
      %p135 = scmp.ne.s32.totalorder %s130, %s132
      %p136 = scmp.eq.s32.totalorder %s23, 0
      %p137 = por %p135, %p136
      %p138 = scmp.ne.s32.totalorder %s130, %s132
      %p139 = scmp.eq.s32.totalorder %s28, 1
      %p140 = por %p138, %p139
      %p141 = scmp.ne.s32.totalorder %s132, %s133
      %p142 = scmp.eq.s32.totalorder %s28, 0
      %p143 = por %p141, %p142
      %p144 = scmp.ne.s32.totalorder %s132, %s133
      %p145 = scmp.eq.s32.totalorder %s29, 1
      %p146 = por %p144, %p145
      %p148 = scmp.ne.s32.totalorder %s133, %s147
      %p149 = scmp.eq.s32.totalorder %s29, 0
      %p150 = por %p148, %p149
      %s152 = sadd.s32 %s151, 1
      %p155 = scmp.eq.s32.totalorder %s23, 1
      %p156 = scmp.ne.s32.totalorder %s151, %s153
      %p157 = scmp.eq.s32.totalorder %s23, 0
      %p158 = por %p156, %p157
      %p159 = scmp.ne.s32.totalorder %s151, %s153
      %p160 = scmp.eq.s32.totalorder %s28, 1
      %p161 = por %p159, %p160
      %p162 = scmp.ne.s32.totalorder %s153, %s154
      %p163 = scmp.eq.s32.totalorder %s28, 0
      %p164 = por %p162, %p163
      %p165 = scmp.ne.s32.totalorder %s153, %s154
      %p166 = scmp.eq.s32.totalorder %s29, 1
      %p167 = por %p165, %p166
      %p169 = scmp.ne.s32.totalorder %s154, %s168
      %p170 = scmp.eq.s32.totalorder %s29, 0
      %p171 = por %p169, %p170
      %s173 = sadd.s32 %s172, 1
      %p176 = scmp.eq.s32.totalorder %s23, 1
      %p177 = scmp.ne.s32.totalorder %s172, %s174
      %p178 = scmp.eq.s32.totalorder %s23, 0
      %p179 = por %p177, %p178
      %p180 = scmp.ne.s32.totalorder %s172, %s174
      %p181 = scmp.eq.s32.totalorder %s28, 1
      %p182 = por %p180, %p181
      %p183 = scmp.ne.s32.totalorder %s174, %s175
      %p184 = scmp.eq.s32.totalorder %s28, 0
      %p185 = por %p183, %p184
      %p186 = scmp.ne.s32.totalorder %s174, %s175
      %p187 = scmp.eq.s32.totalorder %s29, 1
      %p188 = por %p186, %p187
      %p190 = scmp.ne.s32.totalorder %s175, %s189
      %p191 = scmp.eq.s32.totalorder %s29, 0
      %p192 = por %p190, %p191
      %s193 = ssub.s32 %s23, %s30
      %p194 = scmp.eq.s32.totalorder %s193, 0
      %s196 = sadd.s32 %s195, 1
      %s197 = scalar_select %p194, %s195, %s196
      %p200 = pneg %p194
      %p201 = scmp.eq.s32.totalorder %s23, 1
      %p202 = por %p200, %p201
      %p203 = scmp.ne.s32.totalorder %s195, %s198
      %p204 = scmp.eq.s32.totalorder %s23, 0
      %p205 = por %p203, %p204
      %p206 = scmp.ne.s32.totalorder %s195, %s198
      %p207 = scmp.eq.s32.totalorder %s28, 1
      %p208 = por %p206, %p207
      %p209 = scmp.ne.s32.totalorder %s198, %s199
      %p210 = scmp.eq.s32.totalorder %s28, 0
      %p211 = por %p209, %p210
      %p212 = scmp.ne.s32.totalorder %s198, %s199
      %p213 = scmp.eq.s32.totalorder %s29, 1
      %p214 = por %p212, %p213
      %p216 = scmp.ne.s32.totalorder %s199, %s215
      %p217 = scmp.eq.s32.totalorder %s29, 0
      %p218 = por %p216, %p217
      %p219 = scmp.le.s32.totalorder 1, %s23
      %p220 = scmp.lt.s32.totalorder %s23, 3
      %p221 = pnand %p219, %p220
      %p222 = pneg %p221
      // Predicated region
      $region9: #{tpu_custom_call.1} parent=5 // pred_check
        _
      $region10: #{tpu_custom_call.1} parent=5 // pred_check_branch
        %224 = sbr.rel (%p221) target = $region12
      $region11: #{tpu_custom_call.1} parent=5 // pred_region
        %s225 = ssub.s32 %s23, 1
        // Predicated region
        $region13: #{tpu_custom_call.1} parent=11 // pred_check
          %p226 = pneg %p122
        $region14: #{tpu_custom_call.1} parent=11 // pred_check_branch
          %228 = sbr.rel (%p226) target = $region16
        $region15: #{tpu_custom_call.1} parent=11 // pred_region
          %s230 = ssub.s32 6144, 6144
          %231 = vsyncadd [#allocation11], %s230
          %s232 = sshll.u32 [#allocation10], 4
          %s233 = int_to_ptr.vmem [resolvable:$true] %s232
          %238 = dma.hbm_to_vmem [thread:$0]  %s3, 6144, %s233, [#allocation11], 384, 384, 24
        $region16: #{tpu_custom_call.1} parent=11 // pred_fallthru
          _
        // Predicated region
        $region17: #{tpu_custom_call.1} parent=11 // pred_check
          %p239 = pneg %p143
        $region18: #{tpu_custom_call.1} parent=11 // pred_check_branch
          %241 = sbr.rel (%p239) target = $region20
        $region19: #{tpu_custom_call.1} parent=11 // pred_region
          _
        $region20: #{tpu_custom_call.1} parent=11 // pred_fallthru
          _
        // Predicated region
        $region21: #{tpu_custom_call.1} parent=11 // pred_check
          %p242 = pneg %p164
        $region22: #{tpu_custom_call.1} parent=11 // pred_check_branch
          %244 = sbr.rel (%p242) target = $region24
        $region23: #{tpu_custom_call.1} parent=11 // pred_region
          %s246 = ssub.s32 2048, 2048
          %247 = vsyncadd [#allocation11], %s246
          %s248 = sshll.u32 [#allocation12], 4
          %s249 = int_to_ptr.vmem [resolvable:$true] %s248
          %254 = dma.hbm_to_vmem [thread:$0]  %s5, 2048, %s249, [#allocation11], 128, 128, 8
        $region24: #{tpu_custom_call.1} parent=11 // pred_fallthru
          _
        // Predicated region
        $region25: #{tpu_custom_call.1} parent=11 // pred_check
          %p255 = pneg %p185
        $region26: #{tpu_custom_call.1} parent=11 // pred_check_branch
          %257 = sbr.rel (%p255) target = $region28
        $region27: #{tpu_custom_call.1} parent=11 // pred_region
          _
        $region28: #{tpu_custom_call.1} parent=11 // pred_fallthru
          _
      $region12: #{tpu_custom_call.1} parent=5 // pred_fallthru
        _
      %p258 = scmp.lt.s32.totalorder %s23, 2
      // Predicated region
      $region29: #{tpu_custom_call.1} parent=5 // pred_check
        %p259 = pneg %p258
      $region30: #{tpu_custom_call.1} parent=5 // pred_check_branch
        %261 = sbr.rel (%p259) target = $region32
      $region31: #{tpu_custom_call.1} parent=5 // pred_region
        // Predicated region
        $region33: #{tpu_custom_call.1} parent=31 // pred_check
          %p262 = pneg %p43
        $region34: #{tpu_custom_call.1} parent=31 // pred_check_branch
          %264 = sbr.rel (%p262) target = $region36
        $region35: #{tpu_custom_call.1} parent=31 // pred_region
          %s265 = sand.u32 %s33, 1
          %s266 = scalar_lea.sflag [#allocation5], %s265
          %s267 = sand.u32 %s33, 1
          %s268 = smul.addr %s267, 8
          %s269 = scalar_lea.vmem [#allocation4], %s268
          %s271 = ssub.s32 128, 128
          %272 = vsyncadd %s266, %s271
          %s273 = smul.addr %s23, 128
          %s274 = scalar_lea.hbm %s0, %s273
          %s276 = sshll.u32 %s269, 4
          %s277 = int_to_ptr.vmem [resolvable:$true] %s276
          %279 = dma.hbm_to_vmem [thread:$0]  %s274, 128, %s277, %s266
        $region36: #{tpu_custom_call.1} parent=31 // pred_fallthru
          _
        // Predicated region
        $region37: #{tpu_custom_call.1} parent=31 // pred_check
          %p280 = pneg %p69
        $region38: #{tpu_custom_call.1} parent=31 // pred_check_branch
          %282 = sbr.rel (%p280) target = $region40
        $region39: #{tpu_custom_call.1} parent=31 // pred_region
          %s283 = sand.u32 %s23, 1
          %s284 = scalar_lea.sflag [#allocation8], %s283
          %s285 = sand.u32 %s59, 1
          %s286 = smul.addr %s285, 8
          %s287 = scalar_lea.vmem [#allocation7], %s286
          %s289 = ssub.s32 128, 128
          %290 = vsyncadd %s284, %s289
          %s291 = smul.addr %s23, 128
          %s292 = scalar_lea.hbm %s1, %s291
          %s294 = sshll.u32 %s287, 4
          %s295 = int_to_ptr.vmem [resolvable:$true] %s294
          %297 = dma.hbm_to_vmem [thread:$0]  %s292, 128, %s295, %s284
        $region40: #{tpu_custom_call.1} parent=31 // pred_fallthru
          _
        // Predicated region
        $region41: #{tpu_custom_call.1} parent=31 // pred_check
          %p298 = pneg %p95
        $region42: #{tpu_custom_call.1} parent=31 // pred_check_branch
          %300 = sbr.rel (%p298) target = $region44
        $region43: #{tpu_custom_call.1} parent=31 // pred_region
          %s301 = sand.u32 %s23, 1
          %s302 = scalar_lea.sflag [#allocation8], %s301
          %s303 = sand.u32 %s85, 1
          %s304 = smul.addr %s303, 8
          %s305 = scalar_lea.vmem [#allocation9], %s304
          %s307 = ssub.s32 128, 128
          %308 = vsyncadd %s302, %s307
          %s309 = smul.addr %s23, 128
          %s310 = scalar_lea.hbm %s2, %s309
          %s312 = sshll.u32 %s305, 4
          %s313 = int_to_ptr.vmem [resolvable:$true] %s312
          %315 = dma.hbm_to_vmem [thread:$0]  %s310, 128, %s313, %s302
        $region44: #{tpu_custom_call.1} parent=31 // pred_fallthru
          _
      $region32: #{tpu_custom_call.1} parent=5 // pred_fallthru
        _
      %p316 = scmp.le.s32.totalorder 1, %s23
      %p317 = scmp.lt.s32.totalorder %s23, 3
      %p318 = pnand %p316, %p317
      %p319 = pneg %p318
      // Predicated region
      $region45: #{tpu_custom_call.1} parent=5 // pred_check
        _
      $region46: #{tpu_custom_call.1} parent=5 // pred_check_branch
        %321 = sbr.rel (%p318) target = $region48
      $region47: #{tpu_custom_call.1} parent=5 // pred_region
        %s322 = ssub.s32 %s23, 1
        %s323 = sand.u32 %s36, 1
        %s324 = scalar_lea.sflag [#allocation5], %s323
        %s325 = sand.u32 %s36, 1
        %s326 = smul.addr %s325, 8
        %s327 = scalar_lea.vmem [#allocation4], %s326
        // Predicated region
        $region49: #{tpu_custom_call.1} parent=47 // pred_check
          %p328 = pneg %p49
        $region50: #{tpu_custom_call.1} parent=47 // pred_check_branch
          %330 = sbr.rel (%p328) target = $region52
        $region51: #{tpu_custom_call.1} parent=47 // pred_region
          %331 = dma.done %s324, 128
        $region52: #{tpu_custom_call.1} parent=47 // pred_fallthru
          _
        %s332 = sand.u32 %s28, 1
        %s333 = scalar_lea.sflag [#allocation8], %s332
        %s334 = sand.u32 %s62, 1
        %s335 = smul.addr %s334, 8
        %s336 = scalar_lea.vmem [#allocation7], %s335
        // Predicated region
        $region53: #{tpu_custom_call.1} parent=47 // pred_check
          %p337 = pneg %p75
        $region54: #{tpu_custom_call.1} parent=47 // pred_check_branch
          %339 = sbr.rel (%p337) target = $region56
        $region55: #{tpu_custom_call.1} parent=47 // pred_region
          %340 = dma.done %s333, 128
        $region56: #{tpu_custom_call.1} parent=47 // pred_fallthru
          _
        %s341 = sand.u32 %s28, 1
        %s342 = scalar_lea.sflag [#allocation8], %s341
        %s343 = sand.u32 %s88, 1
        %s344 = smul.addr %s343, 8
        %s345 = scalar_lea.vmem [#allocation9], %s344
        // Predicated region
        $region57: #{tpu_custom_call.1} parent=47 // pred_check
          %p346 = pneg %p101
        $region58: #{tpu_custom_call.1} parent=47 // pred_check_branch
          %348 = sbr.rel (%p346) target = $region60
        $region59: #{tpu_custom_call.1} parent=47 // pred_region
          %349 = dma.done %s342, 128
        $region60: #{tpu_custom_call.1} parent=47 // pred_fallthru
          _
        // Predicated region
        $region61: #{tpu_custom_call.1} parent=47 // pred_check
          %p350 = pneg %p122
        $region62: #{tpu_custom_call.1} parent=47 // pred_check_branch
          %352 = sbr.rel (%p350) target = $region64
        $region63: #{tpu_custom_call.1} parent=47 // pred_region
          %353 = dma.done [#allocation11], 6144
        $region64: #{tpu_custom_call.1} parent=47 // pred_fallthru
          _
        // Predicated region
        $region65: #{tpu_custom_call.1} parent=47 // pred_check
          %p354 = pneg %p164
        $region66: #{tpu_custom_call.1} parent=47 // pred_check_branch
          %356 = sbr.rel (%p354) target = $region68
        $region67: #{tpu_custom_call.1} parent=47 // pred_region
          %357 = dma.done [#allocation11], 2048
        $region68: #{tpu_custom_call.1} parent=47 // pred_fallthru
          _
        %s358 = sand.u32 %s36, 1
        %s359 = scalar_lea.sflag [#allocation5], %s358
        %s360 = sand.u32 %s36, 1
        %s361 = smul.addr %s360, 8
        %s362 = scalar_lea.vmem [#allocation4], %s361
        %p363 = pneg %p49
        %p364 = pneg %p46
        %s365 = sand.u32 %s28, 1
        %s366 = scalar_lea.sflag [#allocation8], %s365
        %s367 = sand.u32 %s62, 1
        %s368 = smul.addr %s367, 8
        %s369 = scalar_lea.vmem [#allocation7], %s368
        %p370 = pneg %p75
        %p371 = pneg %p72
        %s372 = sand.u32 %s28, 1
        %s373 = scalar_lea.sflag [#allocation8], %s372
        %s374 = sand.u32 %s88, 1
        %s375 = smul.addr %s374, 8
        %s376 = scalar_lea.vmem [#allocation9], %s375
        %p377 = pneg %p101
        %p378 = pneg %p98
        %p379 = pneg %p122
        %p380 = pneg %p119
        %p381 = pneg %p143
        %p382 = pneg %p140
        %p383 = pneg %p164
        %p384 = pneg %p161
        %p385 = pneg %p185
        %p386 = pneg %p182
        %p387 = pneg %p211
        %p388 = pneg %p208
        %s389 = sand.u32 %s198, 1
        %s390 = scalar_lea.sflag [#allocation6], %s389
        %s391 = sand.u32 %s198, 1
        %s392 = smul.addr %s391, 8
        %s393 = scalar_lea.vmem [#allocation13], %s392
        %v394 = vld [vmem:[%s345] sm:$0xff]
        %v395 = vld [vmem:[#allocation10] sm:$0xff]
        %v396 = vld [vmem:[#allocation10 + $0x18] sm:$0xff]
        %v397 = vld [vmem:[#allocation10 + $0x30] sm:$0xff]
        %v398 = vld [vmem:[#allocation10 + $0x48] sm:$0xff]
        %v399 = vld [vmem:[#allocation10 + $0x60] sm:$0xff]
        %v400 = vld [vmem:[#allocation10 + $0x78] sm:$0xff]
        %v401 = vld [vmem:[#allocation10 + $0x90] sm:$0xff]
        %v402 = vld [vmem:[#allocation10 + $0xa8] sm:$0xff]
        %v403 = vld [vmem:[#allocation10 + $0xc0] sm:$0xff]
        %v404 = vld [vmem:[#allocation10 + $0xd8] sm:$0xff]
        %v405 = vld [vmem:[#allocation10 + $0xf0] sm:$0xff]
        %v406 = vld [vmem:[#allocation10 + $0x108] sm:$0xff]
        %v407 = vld [vmem:[#allocation10 + $0x120] sm:$0xff]
        %v408 = vld [vmem:[#allocation10 + $0x138] sm:$0xff]
        %v409 = vld [vmem:[#allocation10 + $0x150] sm:$0xff]
        %v410 = vld [vmem:[#allocation10 + $0x168] sm:$0xff]
        %v411 = vld [vmem:[%s4] sm:$0x1]
        %v413 = vlaneseq
        %v414 = vshrl.u32 %v413, 7
        %v415 = vsub.s32 0, %v414
        %v416 = vrot.slane %v411, %v415
        %418 = vmatprep.subr.mxu0 0.0
        %419 = vmatpush1.msra.mxu0 %v410
        %420 = vmatprep.subr.mxu0 0.0
        %421 = vmatpush1.msra.mxu0 %v409
        %422 = vmatprep.subr.mxu0 0.0
        %423 = vmatpush1.msra.mxu0 %v408
        %424 = vmatprep.subr.mxu0 0.0
        %425 = vmatpush1.msra.mxu0 %v407
        %426 = vmatprep.subr.mxu0 0.0
        %427 = vmatpush1.msra.mxu0 %v406
        %428 = vmatprep.subr.mxu0 0.0
        %429 = vmatpush1.msra.mxu0 %v405
        %430 = vmatprep.subr.mxu0 0.0
        %431 = vmatpush1.msra.mxu0 %v404
        %432 = vmatprep.subr.mxu0 0.0
        %433 = vmatpush1.msra.mxu0 %v403
        %434 = vmatprep.subr.mxu0 0.0
        %435 = vmatpush1.msra.mxu0 %v402
        %436 = vmatprep.subr.mxu0 0.0
        %437 = vmatpush1.msra.mxu0 %v401
        %438 = vmatprep.subr.mxu0 0.0
        %439 = vmatpush1.msra.mxu0 %v400
        %440 = vmatprep.subr.mxu0 0.0
        %441 = vmatpush1.msra.mxu0 %v399
        %442 = vmatprep.subr.mxu0 0.0
        %443 = vmatpush1.msra.mxu0 %v398
        %444 = vmatprep.subr.mxu0 0.0
        %445 = vmatpush1.msra.mxu0 %v397
        %446 = vmatprep.subr.mxu0 0.0
        %447 = vmatpush1.msra.mxu0 %v396
        %448 = vmatprep.subr.mxu0 0.0
        %449 = vmatpush1.msra.mxu0 %v395
        %450 = vmatprep.subr.mxu0 0.0
        %451 = vmatpush2.msra.mxu0 0.0
        %452 = vmatprep.subr.mxu0 0.0
        %453 = vmatpush2.msra.mxu0 0.0
        %454 = vmatprep.subr.mxu0 0.0
        %455 = vmatpush2.msra.mxu0 0.0
        %456 = vmatprep.subr.mxu0 0.0
        %457 = vmatpush2.msra.mxu0 0.0
        %458 = vmatprep.subr.mxu0 0.0
        %459 = vmatpush2.msra.mxu0 0.0
        %460 = vmatprep.subr.mxu0 0.0
        %461 = vmatpush2.msra.mxu0 0.0
        %462 = vmatprep.subr.mxu0 0.0
        %463 = vmatpush2.msra.mxu0 0.0
        %464 = vmatprep.subr.mxu0 0.0
        %465 = vmatpush2.msra.mxu0 0.0
        %466 = vmatprep.subr.mxu0 0.0
        %467 = vmatpush2.msra.mxu0 0.0
        %468 = vmatprep.subr.mxu0 0.0
        %469 = vmatpush2.msra.mxu0 0.0
        %470 = vmatprep.subr.mxu0 0.0
        %471 = vmatpush2.msra.mxu0 0.0
        %472 = vmatprep.subr.mxu0 0.0
        %473 = vmatpush2.msra.mxu0 0.0
        %474 = vmatprep.subr.mxu0 0.0
        %475 = vmatpush2.msra.mxu0 0.0
        %476 = vmatprep.subr.mxu0 0.0
        %477 = vmatpush2.msra.mxu0 0.0
        %478 = vmatprep.subr.mxu0 0.0
        %479 = vmatpush2.msra.mxu0 0.0
        %480 = vmatprep.subr.mxu0 0.0
        %481 = vmatpush2.msra.mxu0 0.0
        %482 = vmatprep.mubr.f32.mxu0 0.0
        %483 = vmatmul.mubr.f32.gmra.mxu0 %v394
        %v484 = vpop.f32.mrf.mxu0
        %v485 = vadd.f32 %v416, %v484
        %v486 = vpop.f32.mrf.mxu0
        %487 = vdwg.mxu0
        %488 = vst [vmem:[#allocation2] sm:$0xff] %v485
        %v489 = vld [vmem:[%s336] sm:$0xff]
        %v490 = vld [vmem:[#allocation10 + $0x8] sm:$0xff]
        %v491 = vld [vmem:[#allocation10 + $0x20] sm:$0xff]
        %v492 = vld [vmem:[#allocation10 + $0x38] sm:$0xff]
        %v493 = vld [vmem:[#allocation10 + $0x50] sm:$0xff]
        %v494 = vld [vmem:[#allocation10 + $0x68] sm:$0xff]
        %v495 = vld [vmem:[#allocation10 + $0x80] sm:$0xff]
        %v496 = vld [vmem:[#allocation10 + $0x98] sm:$0xff]
        %v497 = vld [vmem:[#allocation10 + $0xb0] sm:$0xff]
        %v498 = vld [vmem:[#allocation10 + $0xc8] sm:$0xff]
        %v499 = vld [vmem:[#allocation10 + $0xe0] sm:$0xff]
        %v500 = vld [vmem:[#allocation10 + $0xf8] sm:$0xff]
        %v501 = vld [vmem:[#allocation10 + $0x110] sm:$0xff]
        %v502 = vld [vmem:[#allocation10 + $0x128] sm:$0xff]
        %v503 = vld [vmem:[#allocation10 + $0x140] sm:$0xff]
        %v504 = vld [vmem:[#allocation10 + $0x158] sm:$0xff]
        %v505 = vld [vmem:[#allocation10 + $0x170] sm:$0xff]
        %v506 = vld [vmem:[%s4 + $0x1] sm:$0x1]
        %v508 = vlaneseq
        %v509 = vshrl.u32 %v508, 7
        %v510 = vsub.s32 0, %v509
        %v511 = vrot.slane %v506, %v510
        %513 = vmatprep.subr.mxu0 0.0
        %514 = vmatpush1.msra.mxu0 %v505
        %515 = vmatprep.subr.mxu0 0.0
        %516 = vmatpush1.msra.mxu0 %v504
        %517 = vmatprep.subr.mxu0 0.0
        %518 = vmatpush1.msra.mxu0 %v503
        %519 = vmatprep.subr.mxu0 0.0
        %520 = vmatpush1.msra.mxu0 %v502
        %521 = vmatprep.subr.mxu0 0.0
        %522 = vmatpush1.msra.mxu0 %v501
        %523 = vmatprep.subr.mxu0 0.0
        %524 = vmatpush1.msra.mxu0 %v500
        %525 = vmatprep.subr.mxu0 0.0
        %526 = vmatpush1.msra.mxu0 %v499
        %527 = vmatprep.subr.mxu0 0.0
        %528 = vmatpush1.msra.mxu0 %v498
        %529 = vmatprep.subr.mxu0 0.0
        %530 = vmatpush1.msra.mxu0 %v497
        %531 = vmatprep.subr.mxu0 0.0
        %532 = vmatpush1.msra.mxu0 %v496
        %533 = vmatprep.subr.mxu0 0.0
        %534 = vmatpush1.msra.mxu0 %v495
        %535 = vmatprep.subr.mxu0 0.0
        %536 = vmatpush1.msra.mxu0 %v494
        %537 = vmatprep.subr.mxu0 0.0
        %538 = vmatpush1.msra.mxu0 %v493
        %539 = vmatprep.subr.mxu0 0.0
        %540 = vmatpush1.msra.mxu0 %v492
        %541 = vmatprep.subr.mxu0 0.0
        %542 = vmatpush1.msra.mxu0 %v491
        %543 = vmatprep.subr.mxu0 0.0
        %544 = vmatpush1.msra.mxu0 %v490
        %545 = vmatprep.subr.mxu0 0.0
        %546 = vmatpush2.msra.mxu0 0.0
        %547 = vmatprep.subr.mxu0 0.0
        %548 = vmatpush2.msra.mxu0 0.0
        %549 = vmatprep.subr.mxu0 0.0
        %550 = vmatpush2.msra.mxu0 0.0
        %551 = vmatprep.subr.mxu0 0.0
        %552 = vmatpush2.msra.mxu0 0.0
        %553 = vmatprep.subr.mxu0 0.0
        %554 = vmatpush2.msra.mxu0 0.0
        %555 = vmatprep.subr.mxu0 0.0
        %556 = vmatpush2.msra.mxu0 0.0
        %557 = vmatprep.subr.mxu0 0.0
        %558 = vmatpush2.msra.mxu0 0.0
        %559 = vmatprep.subr.mxu0 0.0
        %560 = vmatpush2.msra.mxu0 0.0
        %561 = vmatprep.subr.mxu0 0.0
        %562 = vmatpush2.msra.mxu0 0.0
        %563 = vmatprep.subr.mxu0 0.0
        %564 = vmatpush2.msra.mxu0 0.0
        %565 = vmatprep.subr.mxu0 0.0
        %566 = vmatpush2.msra.mxu0 0.0
        %567 = vmatprep.subr.mxu0 0.0
        %568 = vmatpush2.msra.mxu0 0.0
        %569 = vmatprep.subr.mxu0 0.0
        %570 = vmatpush2.msra.mxu0 0.0
        %571 = vmatprep.subr.mxu0 0.0
        %572 = vmatpush2.msra.mxu0 0.0
        %573 = vmatprep.subr.mxu0 0.0
        %574 = vmatpush2.msra.mxu0 0.0
        %575 = vmatprep.subr.mxu0 0.0
        %576 = vmatpush2.msra.mxu0 0.0
        %577 = vmatprep.mubr.f32.mxu0 0.0
        %578 = vmatmul.mubr.f32.gmra.mxu0 %v489
        %v579 = vpop.f32.mrf.mxu0
        %v580 = vadd.f32 %v511, %v579
        %v581 = vpop.f32.mrf.mxu0
        %582 = vdwg.mxu0
        %583 = vst [vmem:[#allocation2 + $0x8] sm:$0xff] %v580
        %v584 = vld [vmem:[%s327] sm:$0xff]
        %v585 = vld [vmem:[#allocation10 + $0x10] sm:$0xff]
        %v586 = vld [vmem:[#allocation10 + $0x28] sm:$0xff]
        %v587 = vld [vmem:[#allocation10 + $0x40] sm:$0xff]
        %v588 = vld [vmem:[#allocation10 + $0x58] sm:$0xff]
        %v589 = vld [vmem:[#allocation10 + $0x70] sm:$0xff]
        %v590 = vld [vmem:[#allocation10 + $0x88] sm:$0xff]
        %v591 = vld [vmem:[#allocation10 + $0xa0] sm:$0xff]
        %v592 = vld [vmem:[#allocation10 + $0xb8] sm:$0xff]
        %v593 = vld [vmem:[#allocation10 + $0xd0] sm:$0xff]
        %v594 = vld [vmem:[#allocation10 + $0xe8] sm:$0xff]
        %v595 = vld [vmem:[#allocation10 + $0x100] sm:$0xff]
        %v596 = vld [vmem:[#allocation10 + $0x118] sm:$0xff]
        %v597 = vld [vmem:[#allocation10 + $0x130] sm:$0xff]
        %v598 = vld [vmem:[#allocation10 + $0x148] sm:$0xff]
        %v599 = vld [vmem:[#allocation10 + $0x160] sm:$0xff]
        %v600 = vld [vmem:[#allocation10 + $0x178] sm:$0xff]
        %v601 = vld [vmem:[%s4 + $0x2] sm:$0x1]
        %v603 = vlaneseq
        %v604 = vshrl.u32 %v603, 7
        %v605 = vsub.s32 0, %v604
        %v606 = vrot.slane %v601, %v605
        %608 = vmatprep.subr.mxu0 0.0
        %609 = vmatpush1.msra.mxu0 %v600
        %610 = vmatprep.subr.mxu0 0.0
        %611 = vmatpush1.msra.mxu0 %v599
        %612 = vmatprep.subr.mxu0 0.0
        %613 = vmatpush1.msra.mxu0 %v598
        %614 = vmatprep.subr.mxu0 0.0
        %615 = vmatpush1.msra.mxu0 %v597
        %616 = vmatprep.subr.mxu0 0.0
        %617 = vmatpush1.msra.mxu0 %v596
        %618 = vmatprep.subr.mxu0 0.0
        %619 = vmatpush1.msra.mxu0 %v595
        %620 = vmatprep.subr.mxu0 0.0
        %621 = vmatpush1.msra.mxu0 %v594
        %622 = vmatprep.subr.mxu0 0.0
        %623 = vmatpush1.msra.mxu0 %v593
        %624 = vmatprep.subr.mxu0 0.0
        %625 = vmatpush1.msra.mxu0 %v592
        %626 = vmatprep.subr.mxu0 0.0
        %627 = vmatpush1.msra.mxu0 %v591
        %628 = vmatprep.subr.mxu0 0.0
        %629 = vmatpush1.msra.mxu0 %v590
        %630 = vmatprep.subr.mxu0 0.0
        %631 = vmatpush1.msra.mxu0 %v589
        %632 = vmatprep.subr.mxu0 0.0
        %633 = vmatpush1.msra.mxu0 %v588
        %634 = vmatprep.subr.mxu0 0.0
        %635 = vmatpush1.msra.mxu0 %v587
        %636 = vmatprep.subr.mxu0 0.0
        %637 = vmatpush1.msra.mxu0 %v586
        %638 = vmatprep.subr.mxu0 0.0
        %639 = vmatpush1.msra.mxu0 %v585
        %640 = vmatprep.subr.mxu0 0.0
        %641 = vmatpush2.msra.mxu0 0.0
        %642 = vmatprep.subr.mxu0 0.0
        %643 = vmatpush2.msra.mxu0 0.0
        %644 = vmatprep.subr.mxu0 0.0
        %645 = vmatpush2.msra.mxu0 0.0
        %646 = vmatprep.subr.mxu0 0.0
        %647 = vmatpush2.msra.mxu0 0.0
        %648 = vmatprep.subr.mxu0 0.0
        %649 = vmatpush2.msra.mxu0 0.0
        %650 = vmatprep.subr.mxu0 0.0
        %651 = vmatpush2.msra.mxu0 0.0
        %652 = vmatprep.subr.mxu0 0.0
        %653 = vmatpush2.msra.mxu0 0.0
        %654 = vmatprep.subr.mxu0 0.0
        %655 = vmatpush2.msra.mxu0 0.0
        %656 = vmatprep.subr.mxu0 0.0
        %657 = vmatpush2.msra.mxu0 0.0
        %658 = vmatprep.subr.mxu0 0.0
        %659 = vmatpush2.msra.mxu0 0.0
        %660 = vmatprep.subr.mxu0 0.0
        %661 = vmatpush2.msra.mxu0 0.0
        %662 = vmatprep.subr.mxu0 0.0
        %663 = vmatpush2.msra.mxu0 0.0
        %664 = vmatprep.subr.mxu0 0.0
        %665 = vmatpush2.msra.mxu0 0.0
        %666 = vmatprep.subr.mxu0 0.0
        %667 = vmatpush2.msra.mxu0 0.0
        %668 = vmatprep.subr.mxu0 0.0
        %669 = vmatpush2.msra.mxu0 0.0
        %670 = vmatprep.subr.mxu0 0.0
        %671 = vmatpush2.msra.mxu0 0.0
        %672 = vmatprep.mubr.f32.mxu0 0.0
        %673 = vmatmul.mubr.f32.gmra.mxu0 %v584
        %v674 = vpop.f32.mrf.mxu0
        %v675 = vadd.f32 %v606, %v674
        %v676 = vpop.f32.mrf.mxu0
        %677 = vdwg.mxu0
        %678 = vst [vmem:[#allocation2 + $0x10] sm:$0xff] %v675
        %vm679 = vcmask 1047808
        %680 = vst.msk [vmem:[#allocation3] sm:$0xff] %vm679, 0.0
        %v681 = vld [vmem:[#allocation2 + $0x8] sm:$0xff]
        %v682 = vld [vmem:[#allocation2 + $0x10] sm:$0xff]
        %v683 = vld [vmem:[#allocation2] sm:$0xff]
        %vm684 = vcmask 64512
        %v686 = vsel %vm684, %v683, 0
        %v689 = vsel %vm684, %v681, 0
        %691 = vmatprep.subr.mxu0 0.0
        %692 = vmatpush1.xpose.msra.mxu0 0.0
        %693 = vmatprep.subr.mxu0 0.0
        %694 = vmatpush1.xpose.msra.mxu0 0.0
        %695 = vmatprep.subr.mxu0 0.0
        %696 = vmatpush1.xpose.msra.mxu0 0.0
        %697 = vmatprep.subr.mxu0 0.0
        %698 = vmatpush1.xpose.msra.mxu0 0.0
        %699 = vmatprep.subr.mxu0 0.0
        %700 = vmatpush1.xpose.msra.mxu0 0.0
        %701 = vmatprep.subr.mxu0 0.0
        %702 = vmatpush1.xpose.msra.mxu0 0.0
        %703 = vmatprep.subr.mxu0 0.0
        %704 = vmatpush1.xpose.msra.mxu0 0.0
        %705 = vmatprep.subr.mxu0 0.0
        %706 = vmatpush1.xpose.msra.mxu0 0.0
        %707 = vmatprep.subr.mxu0 0.0
        %708 = vmatpush1.xpose.msra.mxu0 0.0
        %709 = vmatprep.subr.mxu0 0.0
        %710 = vmatpush1.xpose.msra.mxu0 0.0
        %711 = vmatprep.subr.mxu0 0.0
        %712 = vmatpush1.xpose.msra.mxu0 0.0
        %713 = vmatprep.subr.mxu0 0.0
        %714 = vmatpush1.xpose.msra.mxu0 0.0
        %715 = vmatprep.subr.mxu0 0.0
        %716 = vmatpush1.xpose.msra.mxu0 0.0
        %717 = vmatprep.subr.mxu0 0.0
        %718 = vmatpush1.xpose.msra.mxu0 0.0
        %719 = vmatprep.subr.mxu0 0.0
        %720 = vmatpush1.xpose.msra.mxu0 0.0
        %721 = vmatprep.subr.mxu0 0.0
        %722 = vmatpush1.xpose.msra.mxu0 %v689
        %723 = vmatprep.subr.mxu0 0.0
        %724 = vmatpush2.xpose.msra.mxu0 0.0
        %725 = vmatprep.subr.mxu0 0.0
        %726 = vmatpush2.xpose.msra.mxu0 0.0
        %727 = vmatprep.subr.mxu0 0.0
        %728 = vmatpush2.xpose.msra.mxu0 0.0
        %729 = vmatprep.subr.mxu0 0.0
        %730 = vmatpush2.xpose.msra.mxu0 0.0
        %731 = vmatprep.subr.mxu0 0.0
        %732 = vmatpush2.xpose.msra.mxu0 0.0
        %733 = vmatprep.subr.mxu0 0.0
        %734 = vmatpush2.xpose.msra.mxu0 0.0
        %735 = vmatprep.subr.mxu0 0.0
        %736 = vmatpush2.xpose.msra.mxu0 0.0
        %737 = vmatprep.subr.mxu0 0.0
        %738 = vmatpush2.xpose.msra.mxu0 0.0
        %739 = vmatprep.subr.mxu0 0.0
        %740 = vmatpush2.xpose.msra.mxu0 0.0
        %741 = vmatprep.subr.mxu0 0.0
        %742 = vmatpush2.xpose.msra.mxu0 0.0
        %743 = vmatprep.subr.mxu0 0.0
        %744 = vmatpush2.xpose.msra.mxu0 0.0
        %745 = vmatprep.subr.mxu0 0.0
        %746 = vmatpush2.xpose.msra.mxu0 0.0
        %747 = vmatprep.subr.mxu0 0.0
        %748 = vmatpush2.xpose.msra.mxu0 0.0
        %749 = vmatprep.subr.mxu0 0.0
        %750 = vmatpush2.xpose.msra.mxu0 0.0
        %751 = vmatprep.subr.mxu0 0.0
        %752 = vmatpush2.xpose.msra.mxu0 0.0
        %753 = vmatprep.subr.mxu0 0.0
        %754 = vmatpush2.xpose.msra.mxu0 0.0
        %755 = vmatprep.mubr.f32.mxu0 0.0
        %756 = vmatmul.mubr.f32.gmra.mxu0 %v686
        %v757 = vpop.f32.mrf.mxu0
        %v758 = vadd.f32 0.0, %v757
        %v759 = vpop.f32.mrf.mxu0
        %760 = vdwg.mxu0
        %v761 = vsel %vm684, %v758, -inf
        %762 = vmax.xlane.f32.xlu0 %v761
        %v763 = vpop.xlane.xlu0 %762
        %v764 = vsub.f32 %v758, %v763
        %v765 = vmul.f32 %v764, 1.442695
        %v766 = vpow.pop %v765
        %v767 = vsel %vm684, %v766, 0.0
        %768 = vadd.xlane.f32.xlu0 %v767
        %v769 = vpop.xlane.xlu0 %768
        %v771 = vsel %vm684, %v766, 0
        %773 = vmatprep.subr.mxu0 0.0
        %774 = vmatpush1.msra.mxu0 0.0
        %775 = vmatprep.subr.mxu0 0.0
        %776 = vmatpush1.msra.mxu0 0.0
        %777 = vmatprep.subr.mxu0 0.0
        %778 = vmatpush1.msra.mxu0 0.0
        %779 = vmatprep.subr.mxu0 0.0
        %780 = vmatpush1.msra.mxu0 0.0
        %781 = vmatprep.subr.mxu0 0.0
        %782 = vmatpush1.msra.mxu0 0.0
        %783 = vmatprep.subr.mxu0 0.0
        %784 = vmatpush1.msra.mxu0 0.0
        %785 = vmatprep.subr.mxu0 0.0
        %786 = vmatpush1.msra.mxu0 0.0
        %787 = vmatprep.subr.mxu0 0.0
        %788 = vmatpush1.msra.mxu0 0.0
        %789 = vmatprep.subr.mxu0 0.0
        %790 = vmatpush1.msra.mxu0 0.0
        %791 = vmatprep.subr.mxu0 0.0
        %792 = vmatpush1.msra.mxu0 0.0
        %793 = vmatprep.subr.mxu0 0.0
        %794 = vmatpush1.msra.mxu0 0.0
        %795 = vmatprep.subr.mxu0 0.0
        %796 = vmatpush1.msra.mxu0 0.0
        %797 = vmatprep.subr.mxu0 0.0
        %798 = vmatpush1.msra.mxu0 0.0
        %799 = vmatprep.subr.mxu0 0.0
        %800 = vmatpush1.msra.mxu0 0.0
        %801 = vmatprep.subr.mxu0 0.0
        %802 = vmatpush1.msra.mxu0 0.0
        %803 = vmatprep.subr.mxu0 0.0
        %804 = vmatpush1.msra.mxu0 %v682
        %805 = vmatprep.subr.mxu0 0.0
        %806 = vmatpush2.msra.mxu0 0.0
        %807 = vmatprep.subr.mxu0 0.0
        %808 = vmatpush2.msra.mxu0 0.0
        %809 = vmatprep.subr.mxu0 0.0
        %810 = vmatpush2.msra.mxu0 0.0
        %811 = vmatprep.subr.mxu0 0.0
        %812 = vmatpush2.msra.mxu0 0.0
        %813 = vmatprep.subr.mxu0 0.0
        %814 = vmatpush2.msra.mxu0 0.0
        %815 = vmatprep.subr.mxu0 0.0
        %816 = vmatpush2.msra.mxu0 0.0
        %817 = vmatprep.subr.mxu0 0.0
        %818 = vmatpush2.msra.mxu0 0.0
        %819 = vmatprep.subr.mxu0 0.0
        %820 = vmatpush2.msra.mxu0 0.0
        %821 = vmatprep.subr.mxu0 0.0
        %822 = vmatpush2.msra.mxu0 0.0
        %823 = vmatprep.subr.mxu0 0.0
        %824 = vmatpush2.msra.mxu0 0.0
        %825 = vmatprep.subr.mxu0 0.0
        %826 = vmatpush2.msra.mxu0 0.0
        %827 = vmatprep.subr.mxu0 0.0
        %828 = vmatpush2.msra.mxu0 0.0
        %829 = vmatprep.subr.mxu0 0.0
        %830 = vmatpush2.msra.mxu0 0.0
        %831 = vmatprep.subr.mxu0 0.0
        %832 = vmatpush2.msra.mxu0 0.0
        %833 = vmatprep.subr.mxu0 0.0
        %834 = vmatpush2.msra.mxu0 0.0
        %835 = vmatprep.subr.mxu0 0.0
        %836 = vmatpush2.msra.mxu0 0.0
        %837 = vmatprep.mubr.f32.mxu0 0.0
        %838 = vmatmul.mubr.f32.gmra.mxu0 %v771
        %v839 = vpop.f32.mrf.mxu0
        %v840 = vadd.f32 0.0, %v839
        %v841 = vpop.f32.mrf.mxu0
        %842 = vdwg.mxu0
        %v843 = vrcp.pop %v769
        %v844 = vmul.f32 %v840, %v843
        %845 = vrot.lane.b32.xlu0 %v683, 120
        %v846 = vpop.permute.xlu0 %845
        %847 = vrot.lane.b32.xlu0 %v681, 120
        %v848 = vpop.permute.xlu0 %847
        %v849 = vsel %vm684, %v846, 0
        %v851 = vsel %vm684, %v848, 0
        %853 = vmatprep.subr.mxu0 0.0
        %854 = vmatpush1.xpose.msra.mxu0 0.0
        %855 = vmatprep.subr.mxu0 0.0
        %856 = vmatpush1.xpose.msra.mxu0 0.0
        %857 = vmatprep.subr.mxu0 0.0
        %858 = vmatpush1.xpose.msra.mxu0 0.0
        %859 = vmatprep.subr.mxu0 0.0
        %860 = vmatpush1.xpose.msra.mxu0 0.0
        %861 = vmatprep.subr.mxu0 0.0
        %862 = vmatpush1.xpose.msra.mxu0 0.0
        %863 = vmatprep.subr.mxu0 0.0
        %864 = vmatpush1.xpose.msra.mxu0 0.0
        %865 = vmatprep.subr.mxu0 0.0
        %866 = vmatpush1.xpose.msra.mxu0 0.0
        %867 = vmatprep.subr.mxu0 0.0
        %868 = vmatpush1.xpose.msra.mxu0 0.0
        %869 = vmatprep.subr.mxu0 0.0
        %870 = vmatpush1.xpose.msra.mxu0 0.0
        %871 = vmatprep.subr.mxu0 0.0
        %872 = vmatpush1.xpose.msra.mxu0 0.0
        %873 = vmatprep.subr.mxu0 0.0
        %874 = vmatpush1.xpose.msra.mxu0 0.0
        %875 = vmatprep.subr.mxu0 0.0
        %876 = vmatpush1.xpose.msra.mxu0 0.0
        %877 = vmatprep.subr.mxu0 0.0
        %878 = vmatpush1.xpose.msra.mxu0 0.0
        %879 = vmatprep.subr.mxu0 0.0
        %880 = vmatpush1.xpose.msra.mxu0 0.0
        %881 = vmatprep.subr.mxu0 0.0
        %882 = vmatpush1.xpose.msra.mxu0 0.0
        %883 = vmatprep.subr.mxu0 0.0
        %884 = vmatpush1.xpose.msra.mxu0 %v851
        %885 = vmatprep.subr.mxu0 0.0
        %886 = vmatpush2.xpose.msra.mxu0 0.0
        %887 = vmatprep.subr.mxu0 0.0
        %888 = vmatpush2.xpose.msra.mxu0 0.0
        %889 = vmatprep.subr.mxu0 0.0
        %890 = vmatpush2.xpose.msra.mxu0 0.0
        %891 = vmatprep.subr.mxu0 0.0
        %892 = vmatpush2.xpose.msra.mxu0 0.0
        %893 = vmatprep.subr.mxu0 0.0
        %894 = vmatpush2.xpose.msra.mxu0 0.0
        %895 = vmatprep.subr.mxu0 0.0
        %896 = vmatpush2.xpose.msra.mxu0 0.0
        %897 = vmatprep.subr.mxu0 0.0
        %898 = vmatpush2.xpose.msra.mxu0 0.0
        %899 = vmatprep.subr.mxu0 0.0
        %900 = vmatpush2.xpose.msra.mxu0 0.0
        %901 = vmatprep.subr.mxu0 0.0
        %902 = vmatpush2.xpose.msra.mxu0 0.0
        %903 = vmatprep.subr.mxu0 0.0
        %904 = vmatpush2.xpose.msra.mxu0 0.0
        %905 = vmatprep.subr.mxu0 0.0
        %906 = vmatpush2.xpose.msra.mxu0 0.0
        %907 = vmatprep.subr.mxu0 0.0
        %908 = vmatpush2.xpose.msra.mxu0 0.0
        %909 = vmatprep.subr.mxu0 0.0
        %910 = vmatpush2.xpose.msra.mxu0 0.0
        %911 = vmatprep.subr.mxu0 0.0
        %912 = vmatpush2.xpose.msra.mxu0 0.0
        %913 = vmatprep.subr.mxu0 0.0
        %914 = vmatpush2.xpose.msra.mxu0 0.0
        %915 = vmatprep.subr.mxu0 0.0
        %916 = vmatpush2.xpose.msra.mxu0 0.0
        %917 = vmatprep.mubr.f32.mxu0 0.0
        %918 = vmatmul.mubr.f32.gmra.mxu0 %v849
        %v919 = vpop.f32.mrf.mxu0
        %v920 = vadd.f32 0.0, %v919
        %v921 = vpop.f32.mrf.mxu0
        %922 = vdwg.mxu0
        %v923 = vsel %vm684, %v920, -inf
        %924 = vmax.xlane.f32.xlu0 %v923
        %v925 = vpop.xlane.xlu0 %924
        %v926 = vsub.f32 %v920, %v925
        %v927 = vmul.f32 %v926, 1.442695
        %v928 = vpow.pop %v927
        %v929 = vsel %vm684, %v928, 0.0
        %930 = vadd.xlane.f32.xlu0 %v929
        %v931 = vpop.xlane.xlu0 %930
        %933 = vrot.lane.b32.xlu0 %v682, 120
        %v934 = vpop.permute.xlu0 %933
        %v937 = vsel %vm684, %v928, 0
        %939 = vmatprep.subr.mxu0 0.0
        %940 = vmatpush1.msra.mxu0 0.0
        %941 = vmatprep.subr.mxu0 0.0
        %942 = vmatpush1.msra.mxu0 0.0
        %943 = vmatprep.subr.mxu0 0.0
        %944 = vmatpush1.msra.mxu0 0.0
        %945 = vmatprep.subr.mxu0 0.0
        %946 = vmatpush1.msra.mxu0 0.0
        %947 = vmatprep.subr.mxu0 0.0
        %948 = vmatpush1.msra.mxu0 0.0
        %949 = vmatprep.subr.mxu0 0.0
        %950 = vmatpush1.msra.mxu0 0.0
        %951 = vmatprep.subr.mxu0 0.0
        %952 = vmatpush1.msra.mxu0 0.0
        %953 = vmatprep.subr.mxu0 0.0
        %954 = vmatpush1.msra.mxu0 0.0
        %955 = vmatprep.subr.mxu0 0.0
        %956 = vmatpush1.msra.mxu0 0.0
        %957 = vmatprep.subr.mxu0 0.0
        %958 = vmatpush1.msra.mxu0 0.0
        %959 = vmatprep.subr.mxu0 0.0
        %960 = vmatpush1.msra.mxu0 0.0
        %961 = vmatprep.subr.mxu0 0.0
        %962 = vmatpush1.msra.mxu0 0.0
        %963 = vmatprep.subr.mxu0 0.0
        %964 = vmatpush1.msra.mxu0 0.0
        %965 = vmatprep.subr.mxu0 0.0
        %966 = vmatpush1.msra.mxu0 0.0
        %967 = vmatprep.subr.mxu0 0.0
        %968 = vmatpush1.msra.mxu0 0.0
        %969 = vmatprep.subr.mxu0 0.0
        %970 = vmatpush1.msra.mxu0 %v934
        %971 = vmatprep.subr.mxu0 0.0
        %972 = vmatpush2.msra.mxu0 0.0
        %973 = vmatprep.subr.mxu0 0.0
        %974 = vmatpush2.msra.mxu0 0.0
        %975 = vmatprep.subr.mxu0 0.0
        %976 = vmatpush2.msra.mxu0 0.0
        %977 = vmatprep.subr.mxu0 0.0
        %978 = vmatpush2.msra.mxu0 0.0
        %979 = vmatprep.subr.mxu0 0.0
        %980 = vmatpush2.msra.mxu0 0.0
        %981 = vmatprep.subr.mxu0 0.0
        %982 = vmatpush2.msra.mxu0 0.0
        %983 = vmatprep.subr.mxu0 0.0
        %984 = vmatpush2.msra.mxu0 0.0
        %985 = vmatprep.subr.mxu0 0.0
        %986 = vmatpush2.msra.mxu0 0.0
        %987 = vmatprep.subr.mxu0 0.0
        %988 = vmatpush2.msra.mxu0 0.0
        %989 = vmatprep.subr.mxu0 0.0
        %990 = vmatpush2.msra.mxu0 0.0
        %991 = vmatprep.subr.mxu0 0.0
        %992 = vmatpush2.msra.mxu0 0.0
        %993 = vmatprep.subr.mxu0 0.0
        %994 = vmatpush2.msra.mxu0 0.0
        %995 = vmatprep.subr.mxu0 0.0
        %996 = vmatpush2.msra.mxu0 0.0
        %997 = vmatprep.subr.mxu0 0.0
        %998 = vmatpush2.msra.mxu0 0.0
        %999 = vmatprep.subr.mxu0 0.0
        %1000 = vmatpush2.msra.mxu0 0.0
        %1001 = vmatprep.subr.mxu0 0.0
        %1002 = vmatpush2.msra.mxu0 0.0
        %1003 = vmatprep.mubr.f32.mxu0 0.0
        %1004 = vmatmul.mubr.f32.gmra.mxu0 %v937
        %v1005 = vpop.f32.mrf.mxu0
        %v1006 = vadd.f32 0.0, %v1005
        %v1007 = vpop.f32.mrf.mxu0
        %1008 = vdwg.mxu0
        %v1009 = vrcp.pop %v931
        %v1010 = vmul.f32 %v1006, %v1009
        %1011 = vrot.lane.b32.xlu0 %v683, 112
        %v1012 = vpop.permute.xlu0 %1011
        %1013 = vrot.lane.b32.xlu0 %v681, 112
        %v1014 = vpop.permute.xlu0 %1013
        %v1015 = vsel %vm684, %v1012, 0
        %v1017 = vsel %vm684, %v1014, 0
        %1019 = vmatprep.subr.mxu0 0.0
        %1020 = vmatpush1.xpose.msra.mxu0 0.0
        %1021 = vmatprep.subr.mxu0 0.0
        %1022 = vmatpush1.xpose.msra.mxu0 0.0
        %1023 = vmatprep.subr.mxu0 0.0
        %1024 = vmatpush1.xpose.msra.mxu0 0.0
        %1025 = vmatprep.subr.mxu0 0.0
        %1026 = vmatpush1.xpose.msra.mxu0 0.0
        %1027 = vmatprep.subr.mxu0 0.0
        %1028 = vmatpush1.xpose.msra.mxu0 0.0
        %1029 = vmatprep.subr.mxu0 0.0
        %1030 = vmatpush1.xpose.msra.mxu0 0.0
        %1031 = vmatprep.subr.mxu0 0.0
        %1032 = vmatpush1.xpose.msra.mxu0 0.0
        %1033 = vmatprep.subr.mxu0 0.0
        %1034 = vmatpush1.xpose.msra.mxu0 0.0
        %1035 = vmatprep.subr.mxu0 0.0
        %1036 = vmatpush1.xpose.msra.mxu0 0.0
        %1037 = vmatprep.subr.mxu0 0.0
        %1038 = vmatpush1.xpose.msra.mxu0 0.0
        %1039 = vmatprep.subr.mxu0 0.0
        %1040 = vmatpush1.xpose.msra.mxu0 0.0
        %1041 = vmatprep.subr.mxu0 0.0
        %1042 = vmatpush1.xpose.msra.mxu0 0.0
        %1043 = vmatprep.subr.mxu0 0.0
        %1044 = vmatpush1.xpose.msra.mxu0 0.0
        %1045 = vmatprep.subr.mxu0 0.0
        %1046 = vmatpush1.xpose.msra.mxu0 0.0
        %1047 = vmatprep.subr.mxu0 0.0
        %1048 = vmatpush1.xpose.msra.mxu0 0.0
        %1049 = vmatprep.subr.mxu0 0.0
        %1050 = vmatpush1.xpose.msra.mxu0 %v1017
        %1051 = vmatprep.subr.mxu0 0.0
        %1052 = vmatpush2.xpose.msra.mxu0 0.0
        %1053 = vmatprep.subr.mxu0 0.0
        %1054 = vmatpush2.xpose.msra.mxu0 0.0
        %1055 = vmatprep.subr.mxu0 0.0
        %1056 = vmatpush2.xpose.msra.mxu0 0.0
        %1057 = vmatprep.subr.mxu0 0.0
        %1058 = vmatpush2.xpose.msra.mxu0 0.0
        %1059 = vmatprep.subr.mxu0 0.0
        %1060 = vmatpush2.xpose.msra.mxu0 0.0
        %1061 = vmatprep.subr.mxu0 0.0
        %1062 = vmatpush2.xpose.msra.mxu0 0.0
        %1063 = vmatprep.subr.mxu0 0.0
        %1064 = vmatpush2.xpose.msra.mxu0 0.0
        %1065 = vmatprep.subr.mxu0 0.0
        %1066 = vmatpush2.xpose.msra.mxu0 0.0
        %1067 = vmatprep.subr.mxu0 0.0
        %1068 = vmatpush2.xpose.msra.mxu0 0.0
        %1069 = vmatprep.subr.mxu0 0.0
        %1070 = vmatpush2.xpose.msra.mxu0 0.0
        %1071 = vmatprep.subr.mxu0 0.0
        %1072 = vmatpush2.xpose.msra.mxu0 0.0
        %1073 = vmatprep.subr.mxu0 0.0
        %1074 = vmatpush2.xpose.msra.mxu0 0.0
        %1075 = vmatprep.subr.mxu0 0.0
        %1076 = vmatpush2.xpose.msra.mxu0 0.0
        %1077 = vmatprep.subr.mxu0 0.0
        %1078 = vmatpush2.xpose.msra.mxu0 0.0
        %1079 = vmatprep.subr.mxu0 0.0
        %1080 = vmatpush2.xpose.msra.mxu0 0.0
        %1081 = vmatprep.subr.mxu0 0.0
        %1082 = vmatpush2.xpose.msra.mxu0 0.0
        %1083 = vmatprep.mubr.f32.mxu0 0.0
        %1084 = vmatmul.mubr.f32.gmra.mxu0 %v1015
        %v1085 = vpop.f32.mrf.mxu0
        %v1086 = vadd.f32 0.0, %v1085
        %v1087 = vpop.f32.mrf.mxu0
        %1088 = vdwg.mxu0
        %v1089 = vsel %vm684, %v1086, -inf
        %1090 = vmax.xlane.f32.xlu0 %v1089
        %v1091 = vpop.xlane.xlu0 %1090
        %v1092 = vsub.f32 %v1086, %v1091
        %v1093 = vmul.f32 %v1092, 1.442695
        %v1094 = vpow.pop %v1093
        %v1095 = vsel %vm684, %v1094, 0.0
        %1096 = vadd.xlane.f32.xlu0 %v1095
        %v1097 = vpop.xlane.xlu0 %1096
        %1098 = vrot.lane.b32.xlu0 %v682, 112
        %v1099 = vpop.permute.xlu0 %1098
        %v1102 = vsel %vm684, %v1094, 0
        %1104 = vmatprep.subr.mxu0 0.0
        %1105 = vmatpush1.msra.mxu0 0.0
        %1106 = vmatprep.subr.mxu0 0.0
        %1107 = vmatpush1.msra.mxu0 0.0
        %1108 = vmatprep.subr.mxu0 0.0
        %1109 = vmatpush1.msra.mxu0 0.0
        %1110 = vmatprep.subr.mxu0 0.0
        %1111 = vmatpush1.msra.mxu0 0.0
        %1112 = vmatprep.subr.mxu0 0.0
        %1113 = vmatpush1.msra.mxu0 0.0
        %1114 = vmatprep.subr.mxu0 0.0
        %1115 = vmatpush1.msra.mxu0 0.0
        %1116 = vmatprep.subr.mxu0 0.0
        %1117 = vmatpush1.msra.mxu0 0.0
        %1118 = vmatprep.subr.mxu0 0.0
        %1119 = vmatpush1.msra.mxu0 0.0
        %1120 = vmatprep.subr.mxu0 0.0
        %1121 = vmatpush1.msra.mxu0 0.0
        %1122 = vmatprep.subr.mxu0 0.0
        %1123 = vmatpush1.msra.mxu0 0.0
        %1124 = vmatprep.subr.mxu0 0.0
        %1125 = vmatpush1.msra.mxu0 0.0
        %1126 = vmatprep.subr.mxu0 0.0
        %1127 = vmatpush1.msra.mxu0 0.0
        %1128 = vmatprep.subr.mxu0 0.0
        %1129 = vmatpush1.msra.mxu0 0.0
        %1130 = vmatprep.subr.mxu0 0.0
        %1131 = vmatpush1.msra.mxu0 0.0
        %1132 = vmatprep.subr.mxu0 0.0
        %1133 = vmatpush1.msra.mxu0 0.0
        %1134 = vmatprep.subr.mxu0 0.0
        %1135 = vmatpush1.msra.mxu0 %v1099
        %1136 = vmatprep.subr.mxu0 0.0
        %1137 = vmatpush2.msra.mxu0 0.0
        %1138 = vmatprep.subr.mxu0 0.0
        %1139 = vmatpush2.msra.mxu0 0.0
        %1140 = vmatprep.subr.mxu0 0.0
        %1141 = vmatpush2.msra.mxu0 0.0
        %1142 = vmatprep.subr.mxu0 0.0
        %1143 = vmatpush2.msra.mxu0 0.0
        %1144 = vmatprep.subr.mxu0 0.0
        %1145 = vmatpush2.msra.mxu0 0.0
        %1146 = vmatprep.subr.mxu0 0.0
        %1147 = vmatpush2.msra.mxu0 0.0
        %1148 = vmatprep.subr.mxu0 0.0
        %1149 = vmatpush2.msra.mxu0 0.0
        %1150 = vmatprep.subr.mxu0 0.0
        %1151 = vmatpush2.msra.mxu0 0.0
        %1152 = vmatprep.subr.mxu0 0.0
        %1153 = vmatpush2.msra.mxu0 0.0
        %1154 = vmatprep.subr.mxu0 0.0
        %1155 = vmatpush2.msra.mxu0 0.0
        %1156 = vmatprep.subr.mxu0 0.0
        %1157 = vmatpush2.msra.mxu0 0.0
        %1158 = vmatprep.subr.mxu0 0.0
        %1159 = vmatpush2.msra.mxu0 0.0
        %1160 = vmatprep.subr.mxu0 0.0
        %1161 = vmatpush2.msra.mxu0 0.0
        %1162 = vmatprep.subr.mxu0 0.0
        %1163 = vmatpush2.msra.mxu0 0.0
        %1164 = vmatprep.subr.mxu0 0.0
        %1165 = vmatpush2.msra.mxu0 0.0
        %1166 = vmatprep.subr.mxu0 0.0
        %1167 = vmatpush2.msra.mxu0 0.0
        %1168 = vmatprep.mubr.f32.mxu0 0.0
        %1169 = vmatmul.mubr.f32.gmra.mxu0 %v1102
        %v1170 = vpop.f32.mrf.mxu0
        %v1171 = vadd.f32 0.0, %v1170
        %v1172 = vpop.f32.mrf.mxu0
        %1173 = vdwg.mxu0
        %v1174 = vrcp.pop %v1097
        %v1175 = vmul.f32 %v1171, %v1174
        %1176 = vrot.lane.b32.xlu0 %v683, 104
        %v1177 = vpop.permute.xlu0 %1176
        %1178 = vrot.lane.b32.xlu0 %v681, 104
        %v1179 = vpop.permute.xlu0 %1178
        %v1180 = vsel %vm684, %v1177, 0
        %v1182 = vsel %vm684, %v1179, 0
        %1184 = vmatprep.subr.mxu0 0.0
        %1185 = vmatpush1.xpose.msra.mxu0 0.0
        %1186 = vmatprep.subr.mxu0 0.0
        %1187 = vmatpush1.xpose.msra.mxu0 0.0
        %1188 = vmatprep.subr.mxu0 0.0
        %1189 = vmatpush1.xpose.msra.mxu0 0.0
        %1190 = vmatprep.subr.mxu0 0.0
        %1191 = vmatpush1.xpose.msra.mxu0 0.0
        %1192 = vmatprep.subr.mxu0 0.0
        %1193 = vmatpush1.xpose.msra.mxu0 0.0
        %1194 = vmatprep.subr.mxu0 0.0
        %1195 = vmatpush1.xpose.msra.mxu0 0.0
        %1196 = vmatprep.subr.mxu0 0.0
        %1197 = vmatpush1.xpose.msra.mxu0 0.0
        %1198 = vmatprep.subr.mxu0 0.0
        %1199 = vmatpush1.xpose.msra.mxu0 0.0
        %1200 = vmatprep.subr.mxu0 0.0
        %1201 = vmatpush1.xpose.msra.mxu0 0.0
        %1202 = vmatprep.subr.mxu0 0.0
        %1203 = vmatpush1.xpose.msra.mxu0 0.0
        %1204 = vmatprep.subr.mxu0 0.0
        %1205 = vmatpush1.xpose.msra.mxu0 0.0
        %1206 = vmatprep.subr.mxu0 0.0
        %1207 = vmatpush1.xpose.msra.mxu0 0.0
        %1208 = vmatprep.subr.mxu0 0.0
        %1209 = vmatpush1.xpose.msra.mxu0 0.0
        %1210 = vmatprep.subr.mxu0 0.0
        %1211 = vmatpush1.xpose.msra.mxu0 0.0
        %1212 = vmatprep.subr.mxu0 0.0
        %1213 = vmatpush1.xpose.msra.mxu0 0.0
        %1214 = vmatprep.subr.mxu0 0.0
        %1215 = vmatpush1.xpose.msra.mxu0 %v1182
        %1216 = vmatprep.subr.mxu0 0.0
        %1217 = vmatpush2.xpose.msra.mxu0 0.0
        %1218 = vmatprep.subr.mxu0 0.0
        %1219 = vmatpush2.xpose.msra.mxu0 0.0
        %1220 = vmatprep.subr.mxu0 0.0
        %1221 = vmatpush2.xpose.msra.mxu0 0.0
        %1222 = vmatprep.subr.mxu0 0.0
        %1223 = vmatpush2.xpose.msra.mxu0 0.0
        %1224 = vmatprep.subr.mxu0 0.0
        %1225 = vmatpush2.xpose.msra.mxu0 0.0
        %1226 = vmatprep.subr.mxu0 0.0
        %1227 = vmatpush2.xpose.msra.mxu0 0.0
        %1228 = vmatprep.subr.mxu0 0.0
        %1229 = vmatpush2.xpose.msra.mxu0 0.0
        %1230 = vmatprep.subr.mxu0 0.0
        %1231 = vmatpush2.xpose.msra.mxu0 0.0
        %1232 = vmatprep.subr.mxu0 0.0
        %1233 = vmatpush2.xpose.msra.mxu0 0.0
        %1234 = vmatprep.subr.mxu0 0.0
        %1235 = vmatpush2.xpose.msra.mxu0 0.0
        %1236 = vmatprep.subr.mxu0 0.0
        %1237 = vmatpush2.xpose.msra.mxu0 0.0
        %1238 = vmatprep.subr.mxu0 0.0
        %1239 = vmatpush2.xpose.msra.mxu0 0.0
        %1240 = vmatprep.subr.mxu0 0.0
        %1241 = vmatpush2.xpose.msra.mxu0 0.0
        %1242 = vmatprep.subr.mxu0 0.0
        %1243 = vmatpush2.xpose.msra.mxu0 0.0
        %1244 = vmatprep.subr.mxu0 0.0
        %1245 = vmatpush2.xpose.msra.mxu0 0.0
        %1246 = vmatprep.subr.mxu0 0.0
        %1247 = vmatpush2.xpose.msra.mxu0 0.0
        %1248 = vmatprep.mubr.f32.mxu0 0.0
        %1249 = vmatmul.mubr.f32.gmra.mxu0 %v1180
        %v1250 = vpop.f32.mrf.mxu0
        %v1251 = vadd.f32 0.0, %v1250
        %v1252 = vpop.f32.mrf.mxu0
        %1253 = vdwg.mxu0
        %v1254 = vsel %vm684, %v1251, -inf
        %1255 = vmax.xlane.f32.xlu0 %v1254
        %v1256 = vpop.xlane.xlu0 %1255
        %v1257 = vsub.f32 %v1251, %v1256
        %v1258 = vmul.f32 %v1257, 1.442695
        %v1259 = vpow.pop %v1258
        %v1260 = vsel %vm684, %v1259, 0.0
        %1261 = vadd.xlane.f32.xlu0 %v1260
        %v1262 = vpop.xlane.xlu0 %1261
        %1263 = vrot.lane.b32.xlu0 %v682, 104
        %v1264 = vpop.permute.xlu0 %1263
        %v1267 = vsel %vm684, %v1259, 0
        %1269 = vmatprep.subr.mxu0 0.0
        %1270 = vmatpush1.msra.mxu0 0.0
        %1271 = vmatprep.subr.mxu0 0.0
        %1272 = vmatpush1.msra.mxu0 0.0
        %1273 = vmatprep.subr.mxu0 0.0
        %1274 = vmatpush1.msra.mxu0 0.0
        %1275 = vmatprep.subr.mxu0 0.0
        %1276 = vmatpush1.msra.mxu0 0.0
        %1277 = vmatprep.subr.mxu0 0.0
        %1278 = vmatpush1.msra.mxu0 0.0
        %1279 = vmatprep.subr.mxu0 0.0
        %1280 = vmatpush1.msra.mxu0 0.0
        %1281 = vmatprep.subr.mxu0 0.0
        %1282 = vmatpush1.msra.mxu0 0.0
        %1283 = vmatprep.subr.mxu0 0.0
        %1284 = vmatpush1.msra.mxu0 0.0
        %1285 = vmatprep.subr.mxu0 0.0
        %1286 = vmatpush1.msra.mxu0 0.0
        %1287 = vmatprep.subr.mxu0 0.0
        %1288 = vmatpush1.msra.mxu0 0.0
        %1289 = vmatprep.subr.mxu0 0.0
        %1290 = vmatpush1.msra.mxu0 0.0
        %1291 = vmatprep.subr.mxu0 0.0
        %1292 = vmatpush1.msra.mxu0 0.0
        %1293 = vmatprep.subr.mxu0 0.0
        %1294 = vmatpush1.msra.mxu0 0.0
        %1295 = vmatprep.subr.mxu0 0.0
        %1296 = vmatpush1.msra.mxu0 0.0
        %1297 = vmatprep.subr.mxu0 0.0
        %1298 = vmatpush1.msra.mxu0 0.0
        %1299 = vmatprep.subr.mxu0 0.0
        %1300 = vmatpush1.msra.mxu0 %v1264
        %1301 = vmatprep.subr.mxu0 0.0
        %1302 = vmatpush2.msra.mxu0 0.0
        %1303 = vmatprep.subr.mxu0 0.0
        %1304 = vmatpush2.msra.mxu0 0.0
        %1305 = vmatprep.subr.mxu0 0.0
        %1306 = vmatpush2.msra.mxu0 0.0
        %1307 = vmatprep.subr.mxu0 0.0
        %1308 = vmatpush2.msra.mxu0 0.0
        %1309 = vmatprep.subr.mxu0 0.0
        %1310 = vmatpush2.msra.mxu0 0.0
        %1311 = vmatprep.subr.mxu0 0.0
        %1312 = vmatpush2.msra.mxu0 0.0
        %1313 = vmatprep.subr.mxu0 0.0
        %1314 = vmatpush2.msra.mxu0 0.0
        %1315 = vmatprep.subr.mxu0 0.0
        %1316 = vmatpush2.msra.mxu0 0.0
        %1317 = vmatprep.subr.mxu0 0.0
        %1318 = vmatpush2.msra.mxu0 0.0
        %1319 = vmatprep.subr.mxu0 0.0
        %1320 = vmatpush2.msra.mxu0 0.0
        %1321 = vmatprep.subr.mxu0 0.0
        %1322 = vmatpush2.msra.mxu0 0.0
        %1323 = vmatprep.subr.mxu0 0.0
        %1324 = vmatpush2.msra.mxu0 0.0
        %1325 = vmatprep.subr.mxu0 0.0
        %1326 = vmatpush2.msra.mxu0 0.0
        %1327 = vmatprep.subr.mxu0 0.0
        %1328 = vmatpush2.msra.mxu0 0.0
        %1329 = vmatprep.subr.mxu0 0.0
        %1330 = vmatpush2.msra.mxu0 0.0
        %1331 = vmatprep.subr.mxu0 0.0
        %1332 = vmatpush2.msra.mxu0 0.0
        %1333 = vmatprep.mubr.f32.mxu0 0.0
        %1334 = vmatmul.mubr.f32.gmra.mxu0 %v1267
        %v1335 = vpop.f32.mrf.mxu0
        %v1336 = vadd.f32 0.0, %v1335
        %v1337 = vpop.f32.mrf.mxu0
        %1338 = vdwg.mxu0
        %v1339 = vrcp.pop %v1262
        %v1340 = vmul.f32 %v1336, %v1339
        %1342 = vrot.lane.b32.xlu0 %v1010, 8
        %v1343 = vpop.permute.xlu0 %1342
        %1346 = vrot.lane.b32.xlu0 %v1175, 16
        %v1347 = vpop.permute.xlu0 %1346
        %1350 = vrot.lane.b32.xlu0 %v1340, 24
        %v1351 = vpop.permute.xlu0 %1350
        %v1353 = vsel %vm684, %v844, %v1343
        %vm1354 = vcmask 130048
        %v1355 = vsel %vm1354, %v1353, %v1347
        %vm1356 = vcmask 195584
        %v1357 = vsel %vm1356, %v1355, %v1351
        %vm1358 = vcmask 261120
        %1359 = vst.msk [vmem:[#allocation3] sm:$0xff] %vm1358, %v1357
        %v1360 = vld [vmem:[#allocation3] sm:$0xff]
        %v1361 = vld [vmem:[#allocation12] sm:$0xff]
        %v1362 = vld [vmem:[#allocation12 + $0x8] sm:$0xff]
        %v1363 = vld [vmem:[#allocation12 + $0x10] sm:$0xff]
        %v1364 = vld [vmem:[#allocation12 + $0x18] sm:$0xff]
        %v1365 = vld [vmem:[#allocation12 + $0x20] sm:$0xff]
        %v1366 = vld [vmem:[#allocation12 + $0x28] sm:$0xff]
        %v1367 = vld [vmem:[#allocation12 + $0x30] sm:$0xff]
        %v1368 = vld [vmem:[#allocation12 + $0x38] sm:$0xff]
        %v1369 = vld [vmem:[#allocation12 + $0x40] sm:$0xff]
        %v1370 = vld [vmem:[#allocation12 + $0x48] sm:$0xff]
        %v1371 = vld [vmem:[#allocation12 + $0x50] sm:$0xff]
        %v1372 = vld [vmem:[#allocation12 + $0x58] sm:$0xff]
        %v1373 = vld [vmem:[#allocation12 + $0x60] sm:$0xff]
        %v1374 = vld [vmem:[#allocation12 + $0x68] sm:$0xff]
        %v1375 = vld [vmem:[#allocation12 + $0x70] sm:$0xff]
        %v1376 = vld [vmem:[#allocation12 + $0x78] sm:$0xff]
        %v1377 = vld [vmem:[%s6] sm:$0x1]
        %v1379 = vlaneseq
        %v1380 = vshrl.u32 %v1379, 7
        %v1381 = vsub.s32 0, %v1380
        %v1382 = vrot.slane %v1377, %v1381
        %1384 = vmatprep.subr.mxu0 0.0
        %1385 = vmatpush1.msra.mxu0 %v1376
        %1386 = vmatprep.subr.mxu0 0.0
        %1387 = vmatpush1.msra.mxu0 %v1375
        %1388 = vmatprep.subr.mxu0 0.0
        %1389 = vmatpush1.msra.mxu0 %v1374
        %1390 = vmatprep.subr.mxu0 0.0
        %1391 = vmatpush1.msra.mxu0 %v1373
        %1392 = vmatprep.subr.mxu0 0.0
        %1393 = vmatpush1.msra.mxu0 %v1372
        %1394 = vmatprep.subr.mxu0 0.0
        %1395 = vmatpush1.msra.mxu0 %v1371
        %1396 = vmatprep.subr.mxu0 0.0
        %1397 = vmatpush1.msra.mxu0 %v1370
        %1398 = vmatprep.subr.mxu0 0.0
        %1399 = vmatpush1.msra.mxu0 %v1369
        %1400 = vmatprep.subr.mxu0 0.0
        %1401 = vmatpush1.msra.mxu0 %v1368
        %1402 = vmatprep.subr.mxu0 0.0
        %1403 = vmatpush1.msra.mxu0 %v1367
        %1404 = vmatprep.subr.mxu0 0.0
        %1405 = vmatpush1.msra.mxu0 %v1366
        %1406 = vmatprep.subr.mxu0 0.0
        %1407 = vmatpush1.msra.mxu0 %v1365
        %1408 = vmatprep.subr.mxu0 0.0
        %1409 = vmatpush1.msra.mxu0 %v1364
        %1410 = vmatprep.subr.mxu0 0.0
        %1411 = vmatpush1.msra.mxu0 %v1363
        %1412 = vmatprep.subr.mxu0 0.0
        %1413 = vmatpush1.msra.mxu0 %v1362
        %1414 = vmatprep.subr.mxu0 0.0
        %1415 = vmatpush1.msra.mxu0 %v1361
        %1416 = vmatprep.subr.mxu0 0.0
        %1417 = vmatpush2.msra.mxu0 0.0
        %1418 = vmatprep.subr.mxu0 0.0
        %1419 = vmatpush2.msra.mxu0 0.0
        %1420 = vmatprep.subr.mxu0 0.0
        %1421 = vmatpush2.msra.mxu0 0.0
        %1422 = vmatprep.subr.mxu0 0.0
        %1423 = vmatpush2.msra.mxu0 0.0
        %1424 = vmatprep.subr.mxu0 0.0
        %1425 = vmatpush2.msra.mxu0 0.0
        %1426 = vmatprep.subr.mxu0 0.0
        %1427 = vmatpush2.msra.mxu0 0.0
        %1428 = vmatprep.subr.mxu0 0.0
        %1429 = vmatpush2.msra.mxu0 0.0
        %1430 = vmatprep.subr.mxu0 0.0
        %1431 = vmatpush2.msra.mxu0 0.0
        %1432 = vmatprep.subr.mxu0 0.0
        %1433 = vmatpush2.msra.mxu0 0.0
        %1434 = vmatprep.subr.mxu0 0.0
        %1435 = vmatpush2.msra.mxu0 0.0
        %1436 = vmatprep.subr.mxu0 0.0
        %1437 = vmatpush2.msra.mxu0 0.0
        %1438 = vmatprep.subr.mxu0 0.0
        %1439 = vmatpush2.msra.mxu0 0.0
        %1440 = vmatprep.subr.mxu0 0.0
        %1441 = vmatpush2.msra.mxu0 0.0
        %1442 = vmatprep.subr.mxu0 0.0
        %1443 = vmatpush2.msra.mxu0 0.0
        %1444 = vmatprep.subr.mxu0 0.0
        %1445 = vmatpush2.msra.mxu0 0.0
        %1446 = vmatprep.subr.mxu0 0.0
        %1447 = vmatpush2.msra.mxu0 0.0
        %1448 = vmatprep.mubr.f32.mxu0 0.0
        %1449 = vmatmul.mubr.f32.gmra.mxu0 %v1360
        %v1450 = vpop.f32.mrf.mxu0
        %v1451 = vadd.f32 %v1382, %v1450
        %v1452 = vpop.f32.mrf.mxu0
        %1453 = vdwg.mxu0
        %1454 = vst [vmem:[%s393] sm:$0xff] %v1451
        %s1455 = sand.u32 %s198, 1
        %s1456 = scalar_lea.sflag [#allocation6], %s1455
        %s1457 = sand.u32 %s198, 1
        %s1458 = smul.addr %s1457, 8
        %s1459 = scalar_lea.vmem [#allocation13], %s1458
        // Predicated region
        $region69: #{tpu_custom_call.1} parent=47 // pred_check
          %p1460 = pneg %p208
        $region70: #{tpu_custom_call.1} parent=47 // pred_check_branch
          %1462 = sbr.rel (%p1460) target = $region72
        $region71: #{tpu_custom_call.1} parent=47 // pred_region
          %s1464 = ssub.s32 128, 128
          %1465 = vsyncadd %s1456, %s1464
          %s1466 = smul.addr %s28, 128
          %s1467 = scalar_lea.hbm %s7, %s1466
          %s1469 = sshll.u32 %s1459, 4
          %s1470 = int_to_ptr.vmem [resolvable:$true] %s1469
          %1472 = dma.vmem_to_hbm [thread:$0]  %s1470, 128, %s1467, %s1456
        $region72: #{tpu_custom_call.1} parent=47 // pred_fallthru
          _
      $region48: #{tpu_custom_call.1} parent=5 // pred_fallthru
        _
      %p1473 = scmp.le.s32.totalorder 2, %s23
      // Predicated region
      $region73: #{tpu_custom_call.1} parent=5 // pred_check
        %p1474 = pneg %p1473
      $region74: #{tpu_custom_call.1} parent=5 // pred_check_branch
        %1476 = sbr.rel (%p1474) target = $region76
      $region75: #{tpu_custom_call.1} parent=5 // pred_region
        %s1477 = ssub.s32 %s23, 2
        // Predicated region
        $region77: #{tpu_custom_call.1} parent=75 // pred_check
          %p1478 = pneg %p214
        $region78: #{tpu_custom_call.1} parent=75 // pred_check_branch
          %1480 = sbr.rel (%p1478) target = $region80
        $region79: #{tpu_custom_call.1} parent=75 // pred_region
          %s1481 = sand.u32 %s199, 1
          %s1482 = scalar_lea.sflag [#allocation6], %s1481
          %s1483 = sand.u32 %s199, 1
          %s1484 = smul.addr %s1483, 8
          %s1485 = scalar_lea.vmem [#allocation13], %s1484
          %1486 = dma.done %s1482, 128
        $region80: #{tpu_custom_call.1} parent=75 // pred_fallthru
          _
      $region76: #{tpu_custom_call.1} parent=5 // pred_fallthru
        _
    $region6: #{tpu_custom_call.1} parent=1 // loop_footer
      %s27 = sadd.s32 1, %s23
    $region7: #{tpu_custom_call.1} parent=1 // loop_footer_branch
      %22 = sbr.rel target = $region3
    $region8: #{tpu_custom_call.1} parent=1 // loop_exit
      _
    %1487 = vsyncpa [#allocation5], 1
    %s1488 = scalar_lea.sflag [#allocation5], 1
    %1489 = vsyncpa %s1488, 1
    %1490 = vsyncpa [#allocation8], 1
    %s1491 = scalar_lea.sflag [#allocation8], 1
    %1492 = vsyncpa %s1491, 1
    %1493 = vsyncpa [#allocation11], 1
    %1494 = vsyncpa [#allocation6], 1
    %s1495 = scalar_lea.sflag [#allocation6], 1
    %1496 = vsyncpa %s1495, 1

</llo_original>
